<compile_context>
chip_gen: v7x
topology: tpu7x:2x2x1
jax: 0.10.0
libtpu: 0.0.40
codegen_flags: <defaults>
</compile_context>

<pallas_src>
import jax
import jax.numpy as jnp
from jax.experimental import pallas as pl
from jax.experimental.pallas import tpu as pltpu

LANE = 128
SUBLANE = 8


def _round_up(x, m):
    return (x + m - 1) // m * m


def _vmem_limit_bytes():
    """Explicit scoped-VMEM limit (defaults are only 16/32 MiB)."""
    try:
        cap = pltpu.get_tpu_info().vmem_capacity_bytes
    except Exception:
        cap = 64 * 1024 * 1024          # conservative fallback (v7x-sized)
    return int(min(cap * 7 // 8, 100 * 1024 * 1024))


# ----------------------------------------------------------------------------
# Fused kernel: grid=(L,) over layers; recurrence + fc stay in VMEM.
# ----------------------------------------------------------------------------
def fused_char_lstm_kernel(x_ref, wih_ref, whh_ref, b_ref, h0_ref, c0_ref,
                           wfc_ref, bfc_ref,
                           logits_ref, hN_ref, cN_ref,
                           seq_sc, gx_sc, h_sc, c_sc):
    TB, D = seq_sc.shape            # TB = T * B_pad, D = padded feature dim
    B = h_sc.shape[0]               # padded batch (multiple of 8)
    T = TB // B
    layer = pl.program_id(0)
    last_layer = pl.num_programs(0) - 1

    # Hoisted input projection for the whole sequence: one big bf16 MXU pass
    # per layer; only h @ W_hh remains on the serial critical path.
    # Layer 0 reads the embedded input directly (no extra staging copy);
    # later layers read the previous layer's hidden states from scratch.
    # TODO(synk): chunk gx over time blocks (double-buffered) for very long T
    # so the (TB, 4D) scratch stays bounded on v7x's 64 MiB VMEM.
    @pl.when(layer == 0)
    def _():
        gx_sc[...] = (jnp.dot(x_ref[...], wih_ref[0],
                              preferred_element_type=jnp.float32)
                      + b_ref[0])

    @pl.when(layer > 0)
    def _():
        gx_sc[...] = (jnp.dot(seq_sc[...].astype(jnp.bfloat16), wih_ref[0],
                              preferred_element_type=jnp.float32)
                      + b_ref[0])

    h_sc[...] = h0_ref[0]
    c_sc[...] = c0_ref[0]

    def step(t, carry):
        row = pl.multiple_of(t * B, SUBLANE)
        gates = (gx_sc[pl.ds(row, B), :]
                 + jnp.dot(h_sc[...].astype(jnp.bfloat16), whh_ref[0],
                           preferred_element_type=jnp.float32))
        # Gate blocks are lane-aligned (each exactly D = 128 lanes wide).
        i_g = jax.nn.sigmoid(gates[:, 0 * D:1 * D])
        f_g = jax.nn.sigmoid(gates[:, 1 * D:2 * D])
        g_g = jnp.tanh(gates[:, 2 * D:3 * D])
        o_g = jax.nn.sigmoid(gates[:, 3 * D:4 * D])
        c_new = f_g * c_sc[...] + i_g * g_g
        h_new = o_g * jnp.tanh(c_new)
        c_sc[...] = c_new
        h_sc[...] = h_new
        seq_sc[pl.ds(row, B), :] = h_new
        return carry

    # Bounded unroll: enough for the LLO scheduler to overlap gx loads /
    # seq stores across the h-dependency without a code-size blowup.
    jax.lax.fori_loop(0, T, step, 0, unroll=min(T, 8))

    hN_ref[0] = h_sc[...]
    cN_ref[0] = c_sc[...]

    # Fused final linear layer over the last layer's hidden states.
    # TODO(synk): for large vocabularies, tile this fc over TB / Vp (or hoist
    # it out of the kernel) instead of keeping the full (TB, Vp) block
    # resident.
    @pl.when(layer == last_layer)
    def _():
        logits_ref[...] = (jnp.dot(seq_sc[...].astype(jnp.bfloat16),
                                   wfc_ref[...],
                                   preferred_element_type=jnp.float32)
                           + bfc_ref[...])


def fused_char_lstm(x_flat, wih, whh, bias, h0, c0, wfc, bfc):
    """x_flat: (T*Bp, D) bf16; returns (logits (T*Bp, Vp), hN (L,Bp,D), cN)."""
    TB, D = x_flat.shape
    L, _, G = wih.shape
    Bp = h0.shape[1]
    Vp = wfc.shape[-1]

    # TODO(synk): on v7x, add a leading "parallel" batch-half grid axis to use
    # both TensorCores for the latency-bound recurrence.
    return pl.pallas_call(
        fused_char_lstm_kernel,
        out_shape=(jax.ShapeDtypeStruct((TB, Vp), jnp.float32),
                   jax.ShapeDtypeStruct((L, Bp, D), jnp.float32),
                   jax.ShapeDtypeStruct((L, Bp, D), jnp.float32)),
        grid_spec=pltpu.PrefetchScalarGridSpec(
            num_scalar_prefetch=0,
            grid=(L,),
            in_specs=[
                pl.BlockSpec((TB, D), lambda l: (0, 0)),        # embedded seq
                pl.BlockSpec((1, D, G), lambda l: (l, 0, 0)),   # W_ih^T layer l
                pl.BlockSpec((1, D, G), lambda l: (l, 0, 0)),   # W_hh^T layer l
                pl.BlockSpec((1, 1, G), lambda l: (l, 0, 0)),   # b_ih + b_hh
                pl.BlockSpec((1, Bp, D), lambda l: (l, 0, 0)),  # h0 layer l
                pl.BlockSpec((1, Bp, D), lambda l: (l, 0, 0)),  # c0 layer l
                pl.BlockSpec((D, Vp), lambda l: (0, 0)),        # fc weight^T
                pl.BlockSpec((1, Vp), lambda l: (0, 0)),        # fc bias
            ],
            out_specs=[
                pl.BlockSpec((TB, Vp), lambda l: (0, 0)),       # logits
                pl.BlockSpec((1, Bp, D), lambda l: (l, 0, 0)),  # h_T layer l
                pl.BlockSpec((1, Bp, D), lambda l: (l, 0, 0)),  # c_T layer l
            ],
            scratch_shapes=[
                pltpu.VMEM((TB, D), jnp.float32),   # inter-layer sequence
                pltpu.VMEM((TB, G), jnp.float32),   # precomputed x-gates
                pltpu.VMEM((Bp, D), jnp.float32),   # h carry
                pltpu.VMEM((Bp, D), jnp.float32),   # c carry
            ],
        ),
        compiler_params=pltpu.CompilerParams(
            dimension_semantics=("arbitrary",),     # layers are sequential
            vmem_limit_bytes=_vmem_limit_bytes()),
    )(x_flat, wih, whh, bias, h0, c0, wfc, bfc)


# ----------------------------------------------------------------------------
# Parameter prep: logical (PyTorch-shaped) params -> padded bf16 kernel params.
# ----------------------------------------------------------------------------
def prepare_kernel_params(params):
    E = params["embed"].shape[1]
    H = params["lstm"][0]["whh_t"].shape[0]
    V = params["fc_w_t"].shape[1]
    L = len(params["lstm"])

    D = max(_round_up(E, LANE), _round_up(H, LANE))  # common padded feat dim
    G = 4 * D
    Vp = _round_up(V, LANE)

    embed_p = jnp.zeros((params["embed"].shape[0], D), jnp.float32)
    embed_p = embed_p.at[:, :E].set(params["embed"])

    wih_p = jnp.zeros((L, D, G), jnp.float32)
    whh_p = jnp.zeros((L, D, G), jnp.float32)
    b_p = jnp.zeros((L, 1, G), jnp.float32)
    for l, lp in enumerate(params["lstm"]):
        in_size = lp["wih_t"].shape[0]
        for g in range(4):  # scatter each gate block into a lane-aligned slot
            wih_p = wih_p.at[l, :in_size, g * D:g * D + H].set(
                lp["wih_t"][:, g * H:(g + 1) * H])
            whh_p = whh_p.at[l, :H, g * D:g * D + H].set(
                lp["whh_t"][:, g * H:(g + 1) * H])
            b_p = b_p.at[l, :, g * D:g * D + H].set(
                lp["bias"][:, g * H:(g + 1) * H])

    wfc_p = jnp.zeros((D, Vp), jnp.float32).at[:H, :V].set(params["fc_w_t"])
    bfc_p = jnp.zeros((1, Vp), jnp.float32).at[:, :V].set(params["fc_b"])

    return {"embed": embed_p.astype(jnp.bfloat16),
            "wih": wih_p.astype(jnp.bfloat16),
            "whh": whh_p.astype(jnp.bfloat16),
            "b": b_p,                                  # biases stay f32
            "fc_w": wfc_p.astype(jnp.bfloat16),
            "fc_b": bfc_p,
            "dims": {"E": E, "H": H, "V": V, "D": D, "G": G,
                     "Vp": Vp, "L": L}}


# ----------------------------------------------------------------------------
# Full CharLSTM forward (matches PyTorch batch_first=True semantics).
# ----------------------------------------------------------------------------
def char_lstm_forward(kparams, tokens, hidden):
    """tokens: (B, T) int32; hidden: (h0, c0) each (L, B, H).
    Returns (logits (B*T, V), (hN, cN))."""
    dims = kparams["dims"]
    H, V, D, L = dims["H"], dims["V"], dims["D"], dims["L"]
    B, T = tokens.shape
    Bp = _round_up(max(B, SUBLANE), SUBLANE)

    h0, c0 = hidden

    # Embedding gather stays in plain JAX glue; table is padded + bf16 so the
    # gather lands directly in the padded, time-major, half-width layout.
    # TODO(synk): fold the gather into the kernel via scalar-prefetched token
    # ids + in-kernel row gather to drop this HBM round-trip entirely.
    x = jnp.take(kparams["embed"], tokens.T, axis=0)          # (T, B, D) bf16
    x = jnp.pad(x, ((0, 0), (0, Bp - B), (0, 0)))             # (T, Bp, D)
    x_flat = x.reshape(T * Bp, D)

    def pad_state(s):
        return jnp.zeros((L, Bp, D), jnp.float32).at[:, :B, :H].set(s)

    logits_p, hN_p, cN_p = fused_char_lstm(
        x_flat, kparams["wih"], kparams["whh"], kparams["b"],
        pad_state(h0), pad_state(c0), kparams["fc_w"], kparams["fc_b"])

    # PyTorch: output (B, T, H) -> reshape(-1, H) -> Linear  => row = b*T + t.
    logits_tbv = logits_p.reshape(T, Bp, -1)[:, :B, :V]
    logits = jnp.transpose(logits_tbv, (1, 0, 2)).reshape(B * T, V)
    hN = hN_p[:, :B, :H]
    cN = cN_p[:, :B, :H]
    return logits, (hN, cN)


# ----------------------------------------------------------------------------
# Deterministic parameter init (shapes from CharLSTM.__init__)
# ----------------------------------------------------------------------------
def init_params(key, vocab_size, embed_size, hidden_size, num_layers):
    keys = jax.random.split(key, 2 + 4 * num_layers + 2)
    k_iter = iter(keys)
    scale = 1.0 / jnp.sqrt(hidden_size)

    params = {
        "embed": jax.random.normal(next(k_iter),
                                   (vocab_size, embed_size), jnp.float32),
        "lstm": [],
    }
    for layer in range(num_layers):
        in_size = embed_size if layer == 0 else hidden_size
        wih = jax.random.uniform(next(k_iter), (4 * hidden_size, in_size),
                                 jnp.float32, -scale, scale)
        whh = jax.random.uniform(next(k_iter), (4 * hidden_size, hidden_size),
                                 jnp.float32, -scale, scale)
        bih = jax.random.uniform(next(k_iter), (4 * hidden_size,),
                                 jnp.float32, -scale, scale)
        bhh = jax.random.uniform(next(k_iter), (4 * hidden_size,),
                                 jnp.float32, -scale, scale)
        params["lstm"].append({
            "wih_t": wih.T,                          # (in, 4H)
            "whh_t": whh.T,                          # (H, 4H)
            "bias": (bih + bhh).reshape(1, -1),      # (1, 4H)
        })
    fc_w = jax.random.uniform(next(k_iter), (vocab_size, hidden_size),
                              jnp.float32, -scale, scale)
    fc_b = jax.random.uniform(next(k_iter), (vocab_size,),
                              jnp.float32, -scale, scale)
    params["fc_w_t"] = fc_w.T                        # (H, V)
    params["fc_b"] = fc_b.reshape(1, -1)             # (1, V)
    return params


# ----------------------------------------------------------------------------
# Pure-JAX reference with the SAME bf16-operand / f32-accumulate quantization
# as the kernel, so the check isolates kernel bugs rather than bf16 rounding.
# ----------------------------------------------------------------------------
def reference_forward(params, tokens, hidden):
    bf16 = jnp.bfloat16
    h0_all, c0_all = hidden
    H = h0_all.shape[-1]
    emb = jnp.take(params["embed"].astype(bf16), tokens, axis=0)  # (B,T,E)
    x = jnp.transpose(emb, (1, 0, 2)).astype(jnp.float32)         # (T,B,E)
    h_fin, c_fin = [], []
    for layer in range(len(params["lstm"])):
        lp = params["lstm"][layer]
        wih = lp["wih_t"].astype(bf16)
        whh = lp["whh_t"].astype(bf16)
        bias = lp["bias"]

        def step(carry, x_t, wih=wih, whh=whh, bias=bias):
            h, c = carry
            g = (jnp.dot(x_t.astype(bf16), wih,
                         preferred_element_type=jnp.float32)
                 + jnp.dot(h.astype(bf16), whh,
                           preferred_element_type=jnp.float32)
                 + bias)
            i = jax.nn.sigmoid(g[:, :H])
            f = jax.nn.sigmoid(g[:, H:2 * H])
            gg = jnp.tanh(g[:, 2 * H:3 * H])
            o = jax.nn.sigmoid(g[:, 3 * H:])
            c = f * c + i * gg
            h = o * jnp.tanh(c)
            return (h, c), h

        (h_l, c_l), x = jax.lax.scan(step, (h0_all[layer], c0_all[layer]), x)
        h_fin.append(h_l)
        c_fin.append(c_l)
    out = jnp.transpose(x, (1, 0, 2)).reshape(-1, H)
    logits = (jnp.dot(out.astype(bf16), params["fc_w_t"].astype(bf16),
                      preferred_element_type=jnp.float32) + params["fc_b"])
    return logits, (jnp.stack(h_fin, 0), jnp.stack(c_fin, 0))


if __name__ == "__main__":
    VOCAB, EMBED, HIDDEN, LAYERS = 32, 16, 32, 2
    BATCH, SEQ = 2, 8

    key = jax.random.PRNGKey(0)
    k_param, k_tok = jax.random.split(key)
    params = init_params(k_param, VOCAB, EMBED, HIDDEN, LAYERS)
    kparams = prepare_kernel_params(params)
    tokens = jax.random.randint(k_tok, (BATCH, SEQ), 0, VOCAB, jnp.int32)

    # init_hidden(batch_size)
    hidden = (jnp.zeros((LAYERS, BATCH, HIDDEN), jnp.float32),
              jnp.zeros((LAYERS, BATCH, HIDDEN), jnp.float32))

    logits, (hN, cN) = char_lstm_forward(kparams, tokens, hidden)
    jax.block_until_ready((logits, hN, cN))

    assert logits.shape == (BATCH * SEQ, VOCAB)
    assert hN.shape == (LAYERS, BATCH, HIDDEN)
    assert cN.shape == (LAYERS, BATCH, HIDDEN)

    ref_logits, (ref_h, ref_c) = reference_forward(params, tokens, hidden)
    assert jnp.allclose(logits, ref_logits, atol=1e-2, rtol=1e-2), "logit mismatch"
    assert jnp.allclose(hN, ref_h, atol=1e-2, rtol=1e-2), "hN mismatch"
    assert jnp.allclose(cN, ref_c, atol=1e-2, rtol=1e-2), "cN mismatch"

    print("KERNEL_OK")
</pallas_src>

<mosaic_0001>
module attributes {stable_mosaic.version = 11 : i64} {
  func.func @fused_char_lstm_kernel(%arg0: i32, %arg1: memref<64x128xbf16, #tpu.memory_space<vmem>>, %arg2: memref<1x128x512xbf16, #tpu.memory_space<vmem>>, %arg3: memref<1x128x512xbf16, #tpu.memory_space<vmem>>, %arg4: memref<1x1x512xf32, #tpu.memory_space<vmem>>, %arg5: memref<1x8x128xf32, #tpu.memory_space<vmem>>, %arg6: memref<1x8x128xf32, #tpu.memory_space<vmem>>, %arg7: memref<128x128xbf16, #tpu.memory_space<vmem>>, %arg8: memref<1x128xf32, #tpu.memory_space<vmem>>, %arg9: memref<64x128xf32, #tpu.memory_space<vmem>>, %arg10: memref<1x8x128xf32, #tpu.memory_space<vmem>>, %arg11: memref<1x8x128xf32, #tpu.memory_space<vmem>>, %arg12: memref<64x128xf32, #tpu.memory_space<vmem>>, %arg13: memref<64x512xf32, #tpu.memory_space<vmem>>, %arg14: memref<8x128xf32, #tpu.memory_space<vmem>>, %arg15: memref<8x128xf32, #tpu.memory_space<vmem>>) attributes {dimension_semantics = [#tpu.dimension_semantics<arbitrary>], iteration_bounds = array<i64: 2>, scalar_prefetch = 0 : i64, scratch_operands = 4 : i64, tpu.core_type = #tpu.core_type<tc>, window_params = [{pipeline_mode = #tpu.pipeline_mode<synchronous>, transform_indices = @transform_0, window_bounds = array<i64: 64, 128>}, {transform_indices = @transform_1, window_bounds = array<i64: 1, 128, 512>}, {transform_indices = @transform_2, window_bounds = array<i64: 1, 128, 512>}, {transform_indices = @transform_3, window_bounds = array<i64: 1, 1, 512>}, {transform_indices = @transform_4, window_bounds = array<i64: 1, 8, 128>}, {transform_indices = @transform_5, window_bounds = array<i64: 1, 8, 128>}, {pipeline_mode = #tpu.pipeline_mode<synchronous>, transform_indices = @transform_6, window_bounds = array<i64: 128, 128>}, {pipeline_mode = #tpu.pipeline_mode<synchronous>, transform_indices = @transform_7, window_bounds = array<i64: 1, 128>}, {pipeline_mode = #tpu.pipeline_mode<synchronous>, transform_indices = @transform_8, window_bounds = array<i64: 64, 128>}, {transform_indices = @transform_9, window_bounds = array<i64: 1, 8, 128>}, {transform_indices = @transform_10, window_bounds = array<i64: 1, 8, 128>}]} {
    %c0_i32 = arith.constant 0 : i32
    %0 = arith.cmpi eq, %arg0, %c0_i32 : i32
    %1 = arith.extui %0 : i1 to i32
    %c0_i32_0 = arith.constant 0 : i32
    %2 = arith.cmpi ne, %1, %c0_i32_0 : i32
    scf.if %2 {
      %c0_168 = arith.constant 0 : index
      %c0_169 = arith.constant 0 : index
      %343 = vector.load %arg1[%c0_168, %c0_169] : memref<64x128xbf16, #tpu.memory_space<vmem>>, vector<64x128xbf16>
      %c0_170 = arith.constant 0 : index
      %c0_171 = arith.constant 0 : index
      %c0_172 = arith.constant 0 : index
      %344 = vector.load %arg2[%c0_170, %c0_171, %c0_172] : memref<1x128x512xbf16, #tpu.memory_space<vmem>>, vector<1x128x512xbf16>
      %345 = vector.shape_cast %344 : vector<1x128x512xbf16> to vector<128x512xbf16>
      %cst_173 = arith.constant dense<0.000000e+00> : vector<64x512xf32>
      %346 = tpu.matmul %343, %345, %cst_173 {dimension_numbers = #tpu.dot_dimension_numbers<[1], [0], [0], [1], [0, 0, 1, 1], [], []>} : vector<64x128xbf16>, vector<128x512xbf16>, vector<64x512xf32> -> vector<64x512xf32>
      %c0_174 = arith.constant 0 : index
      %c0_175 = arith.constant 0 : index
      %c0_176 = arith.constant 0 : index
      %347 = vector.load %arg4[%c0_174, %c0_175, %c0_176] : memref<1x1x512xf32, #tpu.memory_space<vmem>>, vector<1x1x512xf32>
      %348 = vector.shape_cast %347 : vector<1x1x512xf32> to vector<1x512xf32>
      %349 = vector.broadcast %348 : vector<1x512xf32> to vector<64x512xf32>
      %350 = arith.addf %346, %349 : vector<64x512xf32>
      %c0_177 = arith.constant 0 : index
      %c0_178 = arith.constant 0 : index
      %351 = vector.load %arg13[%c0_177, %c0_178] : memref<64x512xf32, #tpu.memory_space<vmem>>, vector<64x512xf32>
      tpu.vector_store %arg13[%c0_177, %c0_178], %350 {strides = array<i32>} : memref<64x512xf32, #tpu.memory_space<vmem>>, vector<64x512xf32>,
    } else {
    }
    %c0_i32_1 = arith.constant 0 : i32
    %3 = arith.cmpi sgt, %arg0, %c0_i32_1 : i32
    %4 = arith.extui %3 : i1 to i32
    %c0_i32_2 = arith.constant 0 : i32
    %5 = arith.cmpi ne, %4, %c0_i32_2 : i32
    scf.if %5 {
      %c0_168 = arith.constant 0 : index
      %c0_169 = arith.constant 0 : index
      %343 = vector.load %arg12[%c0_168, %c0_169] : memref<64x128xf32, #tpu.memory_space<vmem>>, vector<64x128xf32>
      %344 = arith.truncf %343 : vector<64x128xf32> to vector<64x128xbf16>
      %c0_170 = arith.constant 0 : index
      %c0_171 = arith.constant 0 : index
      %c0_172 = arith.constant 0 : index
      %345 = vector.load %arg2[%c0_170, %c0_171, %c0_172] : memref<1x128x512xbf16, #tpu.memory_space<vmem>>, vector<1x128x512xbf16>
      %346 = vector.shape_cast %345 : vector<1x128x512xbf16> to vector<128x512xbf16>
      %cst_173 = arith.constant dense<0.000000e+00> : vector<64x512xf32>
      %347 = tpu.matmul %344, %346, %cst_173 {dimension_numbers = #tpu.dot_dimension_numbers<[1], [0], [0], [1], [0, 0, 1, 1], [], []>} : vector<64x128xbf16>, vector<128x512xbf16>, vector<64x512xf32> -> vector<64x512xf32>
      %c0_174 = arith.constant 0 : index
      %c0_175 = arith.constant 0 : index
      %c0_176 = arith.constant 0 : index
      %348 = vector.load %arg4[%c0_174, %c0_175, %c0_176] : memref<1x1x512xf32, #tpu.memory_space<vmem>>, vector<1x1x512xf32>
      %349 = vector.shape_cast %348 : vector<1x1x512xf32> to vector<1x512xf32>
      %350 = vector.broadcast %349 : vector<1x512xf32> to vector<64x512xf32>
      %351 = arith.addf %347, %350 : vector<64x512xf32>
      %c0_177 = arith.constant 0 : index
      %c0_178 = arith.constant 0 : index
      %352 = vector.load %arg13[%c0_177, %c0_178] : memref<64x512xf32, #tpu.memory_space<vmem>>, vector<64x512xf32>
      tpu.vector_store %arg13[%c0_177, %c0_178], %351 {strides = array<i32>} : memref<64x512xf32, #tpu.memory_space<vmem>>, vector<64x512xf32>,
    } else {
    }
    %c0 = arith.constant 0 : index
    %c0_3 = arith.constant 0 : index
    %c0_4 = arith.constant 0 : index
    %6 = vector.load %arg5[%c0, %c0_3, %c0_4] : memref<1x8x128xf32, #tpu.memory_space<vmem>>, vector<1x8x128xf32>
    %7 = vector.shape_cast %6 : vector<1x8x128xf32> to vector<8x128xf32>
    %c0_5 = arith.constant 0 : index
    %c0_6 = arith.constant 0 : index
    %8 = vector.load %arg14[%c0_5, %c0_6] : memref<8x128xf32, #tpu.memory_space<vmem>>, vector<8x128xf32>
    tpu.vector_store %arg14[%c0_5, %c0_6], %7 {strides = array<i32>} : memref<8x128xf32, #tpu.memory_space<vmem>>, vector<8x128xf32>,
    %c0_7 = arith.constant 0 : index
    %c0_8 = arith.constant 0 : index
    %c0_9 = arith.constant 0 : index
    %9 = vector.load %arg6[%c0_7, %c0_8, %c0_9] : memref<1x8x128xf32, #tpu.memory_space<vmem>>, vector<1x8x128xf32>
    %10 = vector.shape_cast %9 : vector<1x8x128xf32> to vector<8x128xf32>
    %c0_10 = arith.constant 0 : index
    %c0_11 = arith.constant 0 : index
    %11 = vector.load %arg15[%c0_10, %c0_11] : memref<8x128xf32, #tpu.memory_space<vmem>>, vector<8x128xf32>
    tpu.vector_store %arg15[%c0_10, %c0_11], %10 {strides = array<i32>} : memref<8x128xf32, #tpu.memory_space<vmem>>, vector<8x128xf32>,
    %c0_i32_12 = arith.constant 0 : i32
    %c8_i32 = arith.constant 8 : i32
    %12 = arith.muli %c0_i32_12, %c8_i32 : i32
    %13 = tpu.assume_multiple %12, 8 : i32
    %14 = arith.index_cast %13 : i32 to index
    %c0_13 = arith.constant 0 : index
    %15 = vector.load %arg13[%14, %c0_13] : memref<64x512xf32, #tpu.memory_space<vmem>>, vector<8x512xf32>
    %c0_14 = arith.constant 0 : index
    %c0_15 = arith.constant 0 : index
    %16 = vector.load %arg14[%c0_14, %c0_15] : memref<8x128xf32, #tpu.memory_space<vmem>>, vector<8x128xf32>
    %17 = arith.truncf %16 : vector<8x128xf32> to vector<8x128xbf16>
    %c0_16 = arith.constant 0 : index
    %c0_17 = arith.constant 0 : index
    %c0_18 = arith.constant 0 : index
    %18 = vector.load %arg3[%c0_16, %c0_17, %c0_18] : memref<1x128x512xbf16, #tpu.memory_space<vmem>>, vector<1x128x512xbf16>
    %19 = vector.shape_cast %18 : vector<1x128x512xbf16> to vector<128x512xbf16>
    %cst = arith.constant dense<0.000000e+00> : vector<8x512xf32>
    %20 = tpu.matmul %17, %19, %cst {dimension_numbers = #tpu.dot_dimension_numbers<[1], [0], [0], [1], [0, 0, 1, 1], [], []>} : vector<8x128xbf16>, vector<128x512xbf16>, vector<8x512xf32> -> vector<8x512xf32>
    %21 = arith.addf %15, %20 : vector<8x512xf32>
    %22 = vector.extract_strided_slice %21 {offsets = [0, 0], sizes = [8, 128], strides = [1, 1]} : vector<8x512xf32> to vector<8x128xf32>
    %23 = arith.negf %22 : vector<8x128xf32>
    %24 = math.exp %23 : vector<8x128xf32>
    %cst_19 = arith.constant 1.000000e+00 : f32
    %25 = vector.broadcast %cst_19 : f32 to vector<8x128xf32>
    %26 = arith.addf %25, %24 : vector<8x128xf32>
    %27 = arith.divf %25, %26 : vector<8x128xf32>
    %28 = vector.extract_strided_slice %21 {offsets = [0, 128], sizes = [8, 128], strides = [1, 1]} : vector<8x512xf32> to vector<8x128xf32>
    %29 = arith.negf %28 : vector<8x128xf32>
    %30 = math.exp %29 : vector<8x128xf32>
    %cst_20 = arith.constant 1.000000e+00 : f32
    %31 = vector.broadcast %cst_20 : f32 to vector<8x128xf32>
    %32 = arith.addf %31, %30 : vector<8x128xf32>
    %33 = arith.divf %31, %32 : vector<8x128xf32>
    %34 = vector.extract_strided_slice %21 {offsets = [0, 256], sizes = [8, 128], strides = [1, 1]} : vector<8x512xf32> to vector<8x128xf32>
    %35 = math.tanh %34 : vector<8x128xf32>
    %36 = vector.extract_strided_slice %21 {offsets = [0, 384], sizes = [8, 128], strides = [1, 1]} : vector<8x512xf32> to vector<8x128xf32>
    %37 = arith.negf %36 : vector<8x128xf32>
    %38 = math.exp %37 : vector<8x128xf32>
    %cst_21 = arith.constant 1.000000e+00 : f32
    %39 = vector.broadcast %cst_21 : f32 to vector<8x128xf32>
    %40 = arith.addf %39, %38 : vector<8x128xf32>
    %41 = arith.divf %39, %40 : vector<8x128xf32>
    %c0_22 = arith.constant 0 : index
    %c0_23 = arith.constant 0 : index
    %42 = vector.load %arg15[%c0_22, %c0_23] : memref<8x128xf32, #tpu.memory_space<vmem>>, vector<8x128xf32>
    %43 = arith.mulf %33, %42 : vector<8x128xf32>
    %44 = arith.mulf %27, %35 : vector<8x128xf32>
    %45 = arith.addf %43, %44 : vector<8x128xf32>
    %46 = math.tanh %45 : vector<8x128xf32>
    %47 = arith.mulf %41, %46 : vector<8x128xf32>
    %c0_24 = arith.constant 0 : index
    %c0_25 = arith.constant 0 : index
    %48 = vector.load %arg15[%c0_24, %c0_25] : memref<8x128xf32, #tpu.memory_space<vmem>>, vector<8x128xf32>
    tpu.vector_store %arg15[%c0_24, %c0_25], %45 {strides = array<i32>} : memref<8x128xf32, #tpu.memory_space<vmem>>, vector<8x128xf32>,
    %c0_26 = arith.constant 0 : index
    %c0_27 = arith.constant 0 : index
    %49 = vector.load %arg14[%c0_26, %c0_27] : memref<8x128xf32, #tpu.memory_space<vmem>>, vector<8x128xf32>
    tpu.vector_store %arg14[%c0_26, %c0_27], %47 {strides = array<i32>} : memref<8x128xf32, #tpu.memory_space<vmem>>, vector<8x128xf32>,
    %50 = arith.index_cast %13 : i32 to index
    %c0_28 = arith.constant 0 : index
    %51 = vector.load %arg12[%50, %c0_28] : memref<64x128xf32, #tpu.memory_space<vmem>>, vector<8x128xf32>
    tpu.vector_store %arg12[%50, %c0_28], %47 {strides = array<i32>} : memref<64x128xf32, #tpu.memory_space<vmem>>, vector<8x128xf32>,
    %c1_i32 = arith.constant 1 : i32
    %c8_i32_29 = arith.constant 8 : i32
    %52 = arith.muli %c1_i32, %c8_i32_29 : i32
    %53 = tpu.assume_multiple %52, 8 : i32
    %54 = arith.index_cast %53 : i32 to index
    %c0_30 = arith.constant 0 : index
    %55 = vector.load %arg13[%54, %c0_30] : memref<64x512xf32, #tpu.memory_space<vmem>>, vector<8x512xf32>
    %c0_31 = arith.constant 0 : index
    %c0_32 = arith.constant 0 : index
    %56 = vector.load %arg14[%c0_31, %c0_32] : memref<8x128xf32, #tpu.memory_space<vmem>>, vector<8x128xf32>
    %57 = arith.truncf %56 : vector<8x128xf32> to vector<8x128xbf16>
    %c0_33 = arith.constant 0 : index
    %c0_34 = arith.constant 0 : index
    %c0_35 = arith.constant 0 : index
    %58 = vector.load %arg3[%c0_33, %c0_34, %c0_35] : memref<1x128x512xbf16, #tpu.memory_space<vmem>>, vector<1x128x512xbf16>
    %59 = vector.shape_cast %58 : vector<1x128x512xbf16> to vector<128x512xbf16>
    %cst_36 = arith.constant dense<0.000000e+00> : vector<8x512xf32>
    %60 = tpu.matmul %57, %59, %cst_36 {dimension_numbers = #tpu.dot_dimension_numbers<[1], [0], [0], [1], [0, 0, 1, 1], [], []>} : vector<8x128xbf16>, vector<128x512xbf16>, vector<8x512xf32> -> vector<8x512xf32>
    %61 = arith.addf %55, %60 : vector<8x512xf32>
    %62 = vector.extract_strided_slice %61 {offsets = [0, 0], sizes = [8, 128], strides = [1, 1]} : vector<8x512xf32> to vector<8x128xf32>
    %63 = arith.negf %62 : vector<8x128xf32>
    %64 = math.exp %63 : vector<8x128xf32>
    %cst_37 = arith.constant 1.000000e+00 : f32
    %65 = vector.broadcast %cst_37 : f32 to vector<8x128xf32>
    %66 = arith.addf %65, %64 : vector<8x128xf32>
    %67 = arith.divf %65, %66 : vector<8x128xf32>
    %68 = vector.extract_strided_slice %61 {offsets = [0, 128], sizes = [8, 128], strides = [1, 1]} : vector<8x512xf32> to vector<8x128xf32>
    %69 = arith.negf %68 : vector<8x128xf32>
    %70 = math.exp %69 : vector<8x128xf32>
    %cst_38 = arith.constant 1.000000e+00 : f32
    %71 = vector.broadcast %cst_38 : f32 to vector<8x128xf32>
    %72 = arith.addf %71, %70 : vector<8x128xf32>
    %73 = arith.divf %71, %72 : vector<8x128xf32>
    %74 = vector.extract_strided_slice %61 {offsets = [0, 256], sizes = [8, 128], strides = [1, 1]} : vector<8x512xf32> to vector<8x128xf32>
    %75 = math.tanh %74 : vector<8x128xf32>
    %76 = vector.extract_strided_slice %61 {offsets = [0, 384], sizes = [8, 128], strides = [1, 1]} : vector<8x512xf32> to vector<8x128xf32>
    %77 = arith.negf %76 : vector<8x128xf32>
    %78 = math.exp %77 : vector<8x128xf32>
    %cst_39 = arith.constant 1.000000e+00 : f32
    %79 = vector.broadcast %cst_39 : f32 to vector<8x128xf32>
    %80 = arith.addf %79, %78 : vector<8x128xf32>
    %81 = arith.divf %79, %80 : vector<8x128xf32>
    %c0_40 = arith.constant 0 : index
    %c0_41 = arith.constant 0 : index
    %82 = vector.load %arg15[%c0_40, %c0_41] : memref<8x128xf32, #tpu.memory_space<vmem>>, vector<8x128xf32>
    %83 = arith.mulf %73, %82 : vector<8x128xf32>
    %84 = arith.mulf %67, %75 : vector<8x128xf32>
    %85 = arith.addf %83, %84 : vector<8x128xf32>
    %86 = math.tanh %85 : vector<8x128xf32>
    %87 = arith.mulf %81, %86 : vector<8x128xf32>
    %c0_42 = arith.constant 0 : index
    %c0_43 = arith.constant 0 : index
    %88 = vector.load %arg15[%c0_42, %c0_43] : memref<8x128xf32, #tpu.memory_space<vmem>>, vector<8x128xf32>
    tpu.vector_store %arg15[%c0_42, %c0_43], %85 {strides = array<i32>} : memref<8x128xf32, #tpu.memory_space<vmem>>, vector<8x128xf32>,
    %c0_44 = arith.constant 0 : index
    %c0_45 = arith.constant 0 : index
    %89 = vector.load %arg14[%c0_44, %c0_45] : memref<8x128xf32, #tpu.memory_space<vmem>>, vector<8x128xf32>
    tpu.vector_store %arg14[%c0_44, %c0_45], %87 {strides = array<i32>} : memref<8x128xf32, #tpu.memory_space<vmem>>, vector<8x128xf32>,
    %90 = arith.index_cast %53 : i32 to index
    %c0_46 = arith.constant 0 : index
    %91 = vector.load %arg12[%90, %c0_46] : memref<64x128xf32, #tpu.memory_space<vmem>>, vector<8x128xf32>
    tpu.vector_store %arg12[%90, %c0_46], %87 {strides = array<i32>} : memref<64x128xf32, #tpu.memory_space<vmem>>, vector<8x128xf32>,
    %c2_i32 = arith.constant 2 : i32
    %c8_i32_47 = arith.constant 8 : i32
    %92 = arith.muli %c2_i32, %c8_i32_47 : i32
    %93 = tpu.assume_multiple %92, 8 : i32
    %94 = arith.index_cast %93 : i32 to index
    %c0_48 = arith.constant 0 : index
    %95 = vector.load %arg13[%94, %c0_48] : memref<64x512xf32, #tpu.memory_space<vmem>>, vector<8x512xf32>
    %c0_49 = arith.constant 0 : index
    %c0_50 = arith.constant 0 : index
    %96 = vector.load %arg14[%c0_49, %c0_50] : memref<8x128xf32, #tpu.memory_space<vmem>>, vector<8x128xf32>
    %97 = arith.truncf %96 : vector<8x128xf32> to vector<8x128xbf16>
    %c0_51 = arith.constant 0 : index
    %c0_52 = arith.constant 0 : index
    %c0_53 = arith.constant 0 : index
    %98 = vector.load %arg3[%c0_51, %c0_52, %c0_53] : memref<1x128x512xbf16, #tpu.memory_space<vmem>>, vector<1x128x512xbf16>
    %99 = vector.shape_cast %98 : vector<1x128x512xbf16> to vector<128x512xbf16>
    %cst_54 = arith.constant dense<0.000000e+00> : vector<8x512xf32>
    %100 = tpu.matmul %97, %99, %cst_54 {dimension_numbers = #tpu.dot_dimension_numbers<[1], [0], [0], [1], [0, 0, 1, 1], [], []>} : vector<8x128xbf16>, vector<128x512xbf16>, vector<8x512xf32> -> vector<8x512xf32>
    %101 = arith.addf %95, %100 : vector<8x512xf32>
    %102 = vector.extract_strided_slice %101 {offsets = [0, 0], sizes = [8, 128], strides = [1, 1]} : vector<8x512xf32> to vector<8x128xf32>
    %103 = arith.negf %102 : vector<8x128xf32>
    %104 = math.exp %103 : vector<8x128xf32>
    %cst_55 = arith.constant 1.000000e+00 : f32
    %105 = vector.broadcast %cst_55 : f32 to vector<8x128xf32>
    %106 = arith.addf %105, %104 : vector<8x128xf32>
    %107 = arith.divf %105, %106 : vector<8x128xf32>
    %108 = vector.extract_strided_slice %101 {offsets = [0, 128], sizes = [8, 128], strides = [1, 1]} : vector<8x512xf32> to vector<8x128xf32>
    %109 = arith.negf %108 : vector<8x128xf32>
    %110 = math.exp %109 : vector<8x128xf32>
    %cst_56 = arith.constant 1.000000e+00 : f32
    %111 = vector.broadcast %cst_56 : f32 to vector<8x128xf32>
    %112 = arith.addf %111, %110 : vector<8x128xf32>
    %113 = arith.divf %111, %112 : vector<8x128xf32>
    %114 = vector.extract_strided_slice %101 {offsets = [0, 256], sizes = [8, 128], strides = [1, 1]} : vector<8x512xf32> to vector<8x128xf32>
    %115 = math.tanh %114 : vector<8x128xf32>
    %116 = vector.extract_strided_slice %101 {offsets = [0, 384], sizes = [8, 128], strides = [1, 1]} : vector<8x512xf32> to vector<8x128xf32>
    %117 = arith.negf %116 : vector<8x128xf32>
    %118 = math.exp %117 : vector<8x128xf32>
    %cst_57 = arith.constant 1.000000e+00 : f32
    %119 = vector.broadcast %cst_57 : f32 to vector<8x128xf32>
    %120 = arith.addf %119, %118 : vector<8x128xf32>
    %121 = arith.divf %119, %120 : vector<8x128xf32>
    %c0_58 = arith.constant 0 : index
    %c0_59 = arith.constant 0 : index
    %122 = vector.load %arg15[%c0_58, %c0_59] : memref<8x128xf32, #tpu.memory_space<vmem>>, vector<8x128xf32>
    %123 = arith.mulf %113, %122 : vector<8x128xf32>
    %124 = arith.mulf %107, %115 : vector<8x128xf32>
    %125 = arith.addf %123, %124 : vector<8x128xf32>
    %126 = math.tanh %125 : vector<8x128xf32>
    %127 = arith.mulf %121, %126 : vector<8x128xf32>
    %c0_60 = arith.constant 0 : index
    %c0_61 = arith.constant 0 : index
    %128 = vector.load %arg15[%c0_60, %c0_61] : memref<8x128xf32, #tpu.memory_space<vmem>>, vector<8x128xf32>
    tpu.vector_store %arg15[%c0_60, %c0_61], %125 {strides = array<i32>} : memref<8x128xf32, #tpu.memory_space<vmem>>, vector<8x128xf32>,
    %c0_62 = arith.constant 0 : index
    %c0_63 = arith.constant 0 : index
    %129 = vector.load %arg14[%c0_62, %c0_63] : memref<8x128xf32, #tpu.memory_space<vmem>>, vector<8x128xf32>
    tpu.vector_store %arg14[%c0_62, %c0_63], %127 {strides = array<i32>} : memref<8x128xf32, #tpu.memory_space<vmem>>, vector<8x128xf32>,
    %130 = arith.index_cast %93 : i32 to index
    %c0_64 = arith.constant 0 : index
    %131 = vector.load %arg12[%130, %c0_64] : memref<64x128xf32, #tpu.memory_space<vmem>>, vector<8x128xf32>
    tpu.vector_store %arg12[%130, %c0_64], %127 {strides = array<i32>} : memref<64x128xf32, #tpu.memory_space<vmem>>, vector<8x128xf32>,
    %c3_i32 = arith.constant 3 : i32
    %c8_i32_65 = arith.constant 8 : i32
    %132 = arith.muli %c3_i32, %c8_i32_65 : i32
    %133 = tpu.assume_multiple %132, 8 : i32
    %134 = arith.index_cast %133 : i32 to index
    %c0_66 = arith.constant 0 : index
    %135 = vector.load %arg13[%134, %c0_66] : memref<64x512xf32, #tpu.memory_space<vmem>>, vector<8x512xf32>
    %c0_67 = arith.constant 0 : index
    %c0_68 = arith.constant 0 : index
    %136 = vector.load %arg14[%c0_67, %c0_68] : memref<8x128xf32, #tpu.memory_space<vmem>>, vector<8x128xf32>
    %137 = arith.truncf %136 : vector<8x128xf32> to vector<8x128xbf16>
    %c0_69 = arith.constant 0 : index
    %c0_70 = arith.constant 0 : index
    %c0_71 = arith.constant 0 : index
    %138 = vector.load %arg3[%c0_69, %c0_70, %c0_71] : memref<1x128x512xbf16, #tpu.memory_space<vmem>>, vector<1x128x512xbf16>
    %139 = vector.shape_cast %138 : vector<1x128x512xbf16> to vector<128x512xbf16>
    %cst_72 = arith.constant dense<0.000000e+00> : vector<8x512xf32>
    %140 = tpu.matmul %137, %139, %cst_72 {dimension_numbers = #tpu.dot_dimension_numbers<[1], [0], [0], [1], [0, 0, 1, 1], [], []>} : vector<8x128xbf16>, vector<128x512xbf16>, vector<8x512xf32> -> vector<8x512xf32>
    %141 = arith.addf %135, %140 : vector<8x512xf32>
    %142 = vector.extract_strided_slice %141 {offsets = [0, 0], sizes = [8, 128], strides = [1, 1]} : vector<8x512xf32> to vector<8x128xf32>
    %143 = arith.negf %142 : vector<8x128xf32>
    %144 = math.exp %143 : vector<8x128xf32>
    %cst_73 = arith.constant 1.000000e+00 : f32
    %145 = vector.broadcast %cst_73 : f32 to vector<8x128xf32>
    %146 = arith.addf %145, %144 : vector<8x128xf32>
    %147 = arith.divf %145, %146 : vector<8x128xf32>
    %148 = vector.extract_strided_slice %141 {offsets = [0, 128], sizes = [8, 128], strides = [1, 1]} : vector<8x512xf32> to vector<8x128xf32>
    %149 = arith.negf %148 : vector<8x128xf32>
    %150 = math.exp %149 : vector<8x128xf32>
    %cst_74 = arith.constant 1.000000e+00 : f32
    %151 = vector.broadcast %cst_74 : f32 to vector<8x128xf32>
    %152 = arith.addf %151, %150 : vector<8x128xf32>
    %153 = arith.divf %151, %152 : vector<8x128xf32>
    %154 = vector.extract_strided_slice %141 {offsets = [0, 256], sizes = [8, 128], strides = [1, 1]} : vector<8x512xf32> to vector<8x128xf32>
    %155 = math.tanh %154 : vector<8x128xf32>
    %156 = vector.extract_strided_slice %141 {offsets = [0, 384], sizes = [8, 128], strides = [1, 1]} : vector<8x512xf32> to vector<8x128xf32>
    %157 = arith.negf %156 : vector<8x128xf32>
    %158 = math.exp %157 : vector<8x128xf32>
    %cst_75 = arith.constant 1.000000e+00 : f32
    %159 = vector.broadcast %cst_75 : f32 to vector<8x128xf32>
    %160 = arith.addf %159, %158 : vector<8x128xf32>
    %161 = arith.divf %159, %160 : vector<8x128xf32>
    %c0_76 = arith.constant 0 : index
    %c0_77 = arith.constant 0 : index
    %162 = vector.load %arg15[%c0_76, %c0_77] : memref<8x128xf32, #tpu.memory_space<vmem>>, vector<8x128xf32>
    %163 = arith.mulf %153, %162 : vector<8x128xf32>
    %164 = arith.mulf %147, %155 : vector<8x128xf32>
    %165 = arith.addf %163, %164 : vector<8x128xf32>
    %166 = math.tanh %165 : vector<8x128xf32>
    %167 = arith.mulf %161, %166 : vector<8x128xf32>
    %c0_78 = arith.constant 0 : index
    %c0_79 = arith.constant 0 : index
    %168 = vector.load %arg15[%c0_78, %c0_79] : memref<8x128xf32, #tpu.memory_space<vmem>>, vector<8x128xf32>
    tpu.vector_store %arg15[%c0_78, %c0_79], %165 {strides = array<i32>} : memref<8x128xf32, #tpu.memory_space<vmem>>, vector<8x128xf32>,
    %c0_80 = arith.constant 0 : index
    %c0_81 = arith.constant 0 : index
    %169 = vector.load %arg14[%c0_80, %c0_81] : memref<8x128xf32, #tpu.memory_space<vmem>>, vector<8x128xf32>
    tpu.vector_store %arg14[%c0_80, %c0_81], %167 {strides = array<i32>} : memref<8x128xf32, #tpu.memory_space<vmem>>, vector<8x128xf32>,
    %170 = arith.index_cast %133 : i32 to index
    %c0_82 = arith.constant 0 : index
    %171 = vector.load %arg12[%170, %c0_82] : memref<64x128xf32, #tpu.memory_space<vmem>>, vector<8x128xf32>
    tpu.vector_store %arg12[%170, %c0_82], %167 {strides = array<i32>} : memref<64x128xf32, #tpu.memory_space<vmem>>, vector<8x128xf32>,
    %c4_i32 = arith.constant 4 : i32
    %c8_i32_83 = arith.constant 8 : i32
    %172 = arith.muli %c4_i32, %c8_i32_83 : i32
    %173 = tpu.assume_multiple %172, 8 : i32
    %174 = arith.index_cast %173 : i32 to index
    %c0_84 = arith.constant 0 : index
    %175 = vector.load %arg13[%174, %c0_84] : memref<64x512xf32, #tpu.memory_space<vmem>>, vector<8x512xf32>
    %c0_85 = arith.constant 0 : index
    %c0_86 = arith.constant 0 : index
    %176 = vector.load %arg14[%c0_85, %c0_86] : memref<8x128xf32, #tpu.memory_space<vmem>>, vector<8x128xf32>
    %177 = arith.truncf %176 : vector<8x128xf32> to vector<8x128xbf16>
    %c0_87 = arith.constant 0 : index
    %c0_88 = arith.constant 0 : index
    %c0_89 = arith.constant 0 : index
    %178 = vector.load %arg3[%c0_87, %c0_88, %c0_89] : memref<1x128x512xbf16, #tpu.memory_space<vmem>>, vector<1x128x512xbf16>
    %179 = vector.shape_cast %178 : vector<1x128x512xbf16> to vector<128x512xbf16>
    %cst_90 = arith.constant dense<0.000000e+00> : vector<8x512xf32>
    %180 = tpu.matmul %177, %179, %cst_90 {dimension_numbers = #tpu.dot_dimension_numbers<[1], [0], [0], [1], [0, 0, 1, 1], [], []>} : vector<8x128xbf16>, vector<128x512xbf16>, vector<8x512xf32> -> vector<8x512xf32>
    %181 = arith.addf %175, %180 : vector<8x512xf32>
    %182 = vector.extract_strided_slice %181 {offsets = [0, 0], sizes = [8, 128], strides = [1, 1]} : vector<8x512xf32> to vector<8x128xf32>
    %183 = arith.negf %182 : vector<8x128xf32>
    %184 = math.exp %183 : vector<8x128xf32>
    %cst_91 = arith.constant 1.000000e+00 : f32
    %185 = vector.broadcast %cst_91 : f32 to vector<8x128xf32>
    %186 = arith.addf %185, %184 : vector<8x128xf32>
    %187 = arith.divf %185, %186 : vector<8x128xf32>
    %188 = vector.extract_strided_slice %181 {offsets = [0, 128], sizes = [8, 128], strides = [1, 1]} : vector<8x512xf32> to vector<8x128xf32>
    %189 = arith.negf %188 : vector<8x128xf32>
    %190 = math.exp %189 : vector<8x128xf32>
    %cst_92 = arith.constant 1.000000e+00 : f32
    %191 = vector.broadcast %cst_92 : f32 to vector<8x128xf32>
    %192 = arith.addf %191, %190 : vector<8x128xf32>
    %193 = arith.divf %191, %192 : vector<8x128xf32>
    %194 = vector.extract_strided_slice %181 {offsets = [0, 256], sizes = [8, 128], strides = [1, 1]} : vector<8x512xf32> to vector<8x128xf32>
    %195 = math.tanh %194 : vector<8x128xf32>
    %196 = vector.extract_strided_slice %181 {offsets = [0, 384], sizes = [8, 128], strides = [1, 1]} : vector<8x512xf32> to vector<8x128xf32>
    %197 = arith.negf %196 : vector<8x128xf32>
    %198 = math.exp %197 : vector<8x128xf32>
    %cst_93 = arith.constant 1.000000e+00 : f32
    %199 = vector.broadcast %cst_93 : f32 to vector<8x128xf32>
    %200 = arith.addf %199, %198 : vector<8x128xf32>
    %201 = arith.divf %199, %200 : vector<8x128xf32>
    %c0_94 = arith.constant 0 : index
    %c0_95 = arith.constant 0 : index
    %202 = vector.load %arg15[%c0_94, %c0_95] : memref<8x128xf32, #tpu.memory_space<vmem>>, vector<8x128xf32>
    %203 = arith.mulf %193, %202 : vector<8x128xf32>
    %204 = arith.mulf %187, %195 : vector<8x128xf32>
    %205 = arith.addf %203, %204 : vector<8x128xf32>
    %206 = math.tanh %205 : vector<8x128xf32>
    %207 = arith.mulf %201, %206 : vector<8x128xf32>
    %c0_96 = arith.constant 0 : index
    %c0_97 = arith.constant 0 : index
    %208 = vector.load %arg15[%c0_96, %c0_97] : memref<8x128xf32, #tpu.memory_space<vmem>>, vector<8x128xf32>
    tpu.vector_store %arg15[%c0_96, %c0_97], %205 {strides = array<i32>} : memref<8x128xf32, #tpu.memory_space<vmem>>, vector<8x128xf32>,
    %c0_98 = arith.constant 0 : index
    %c0_99 = arith.constant 0 : index
    %209 = vector.load %arg14[%c0_98, %c0_99] : memref<8x128xf32, #tpu.memory_space<vmem>>, vector<8x128xf32>
    tpu.vector_store %arg14[%c0_98, %c0_99], %207 {strides = array<i32>} : memref<8x128xf32, #tpu.memory_space<vmem>>, vector<8x128xf32>,
    %210 = arith.index_cast %173 : i32 to index
    %c0_100 = arith.constant 0 : index
    %211 = vector.load %arg12[%210, %c0_100] : memref<64x128xf32, #tpu.memory_space<vmem>>, vector<8x128xf32>
    tpu.vector_store %arg12[%210, %c0_100], %207 {strides = array<i32>} : memref<64x128xf32, #tpu.memory_space<vmem>>, vector<8x128xf32>,
    %c5_i32 = arith.constant 5 : i32
    %c8_i32_101 = arith.constant 8 : i32
    %212 = arith.muli %c5_i32, %c8_i32_101 : i32
    %213 = tpu.assume_multiple %212, 8 : i32
    %214 = arith.index_cast %213 : i32 to index
    %c0_102 = arith.constant 0 : index
    %215 = vector.load %arg13[%214, %c0_102] : memref<64x512xf32, #tpu.memory_space<vmem>>, vector<8x512xf32>
    %c0_103 = arith.constant 0 : index
    %c0_104 = arith.constant 0 : index
    %216 = vector.load %arg14[%c0_103, %c0_104] : memref<8x128xf32, #tpu.memory_space<vmem>>, vector<8x128xf32>
    %217 = arith.truncf %216 : vector<8x128xf32> to vector<8x128xbf16>
    %c0_105 = arith.constant 0 : index
    %c0_106 = arith.constant 0 : index
    %c0_107 = arith.constant 0 : index
    %218 = vector.load %arg3[%c0_105, %c0_106, %c0_107] : memref<1x128x512xbf16, #tpu.memory_space<vmem>>, vector<1x128x512xbf16>
    %219 = vector.shape_cast %218 : vector<1x128x512xbf16> to vector<128x512xbf16>
    %cst_108 = arith.constant dense<0.000000e+00> : vector<8x512xf32>
    %220 = tpu.matmul %217, %219, %cst_108 {dimension_numbers = #tpu.dot_dimension_numbers<[1], [0], [0], [1], [0, 0, 1, 1], [], []>} : vector<8x128xbf16>, vector<128x512xbf16>, vector<8x512xf32> -> vector<8x512xf32>
    %221 = arith.addf %215, %220 : vector<8x512xf32>
    %222 = vector.extract_strided_slice %221 {offsets = [0, 0], sizes = [8, 128], strides = [1, 1]} : vector<8x512xf32> to vector<8x128xf32>
    %223 = arith.negf %222 : vector<8x128xf32>
    %224 = math.exp %223 : vector<8x128xf32>
    %cst_109 = arith.constant 1.000000e+00 : f32
    %225 = vector.broadcast %cst_109 : f32 to vector<8x128xf32>
    %226 = arith.addf %225, %224 : vector<8x128xf32>
    %227 = arith.divf %225, %226 : vector<8x128xf32>
    %228 = vector.extract_strided_slice %221 {offsets = [0, 128], sizes = [8, 128], strides = [1, 1]} : vector<8x512xf32> to vector<8x128xf32>
    %229 = arith.negf %228 : vector<8x128xf32>
    %230 = math.exp %229 : vector<8x128xf32>
    %cst_110 = arith.constant 1.000000e+00 : f32
    %231 = vector.broadcast %cst_110 : f32 to vector<8x128xf32>
    %232 = arith.addf %231, %230 : vector<8x128xf32>
    %233 = arith.divf %231, %232 : vector<8x128xf32>
    %234 = vector.extract_strided_slice %221 {offsets = [0, 256], sizes = [8, 128], strides = [1, 1]} : vector<8x512xf32> to vector<8x128xf32>
    %235 = math.tanh %234 : vector<8x128xf32>
    %236 = vector.extract_strided_slice %221 {offsets = [0, 384], sizes = [8, 128], strides = [1, 1]} : vector<8x512xf32> to vector<8x128xf32>
    %237 = arith.negf %236 : vector<8x128xf32>
    %238 = math.exp %237 : vector<8x128xf32>
    %cst_111 = arith.constant 1.000000e+00 : f32
    %239 = vector.broadcast %cst_111 : f32 to vector<8x128xf32>
    %240 = arith.addf %239, %238 : vector<8x128xf32>
    %241 = arith.divf %239, %240 : vector<8x128xf32>
    %c0_112 = arith.constant 0 : index
    %c0_113 = arith.constant 0 : index
    %242 = vector.load %arg15[%c0_112, %c0_113] : memref<8x128xf32, #tpu.memory_space<vmem>>, vector<8x128xf32>
    %243 = arith.mulf %233, %242 : vector<8x128xf32>
    %244 = arith.mulf %227, %235 : vector<8x128xf32>
    %245 = arith.addf %243, %244 : vector<8x128xf32>
    %246 = math.tanh %245 : vector<8x128xf32>
    %247 = arith.mulf %241, %246 : vector<8x128xf32>
    %c0_114 = arith.constant 0 : index
    %c0_115 = arith.constant 0 : index
    %248 = vector.load %arg15[%c0_114, %c0_115] : memref<8x128xf32, #tpu.memory_space<vmem>>, vector<8x128xf32>
    tpu.vector_store %arg15[%c0_114, %c0_115], %245 {strides = array<i32>} : memref<8x128xf32, #tpu.memory_space<vmem>>, vector<8x128xf32>,
    %c0_116 = arith.constant 0 : index
    %c0_117 = arith.constant 0 : index
    %249 = vector.load %arg14[%c0_116, %c0_117] : memref<8x128xf32, #tpu.memory_space<vmem>>, vector<8x128xf32>
    tpu.vector_store %arg14[%c0_116, %c0_117], %247 {strides = array<i32>} : memref<8x128xf32, #tpu.memory_space<vmem>>, vector<8x128xf32>,
    %250 = arith.index_cast %213 : i32 to index
    %c0_118 = arith.constant 0 : index
    %251 = vector.load %arg12[%250, %c0_118] : memref<64x128xf32, #tpu.memory_space<vmem>>, vector<8x128xf32>
    tpu.vector_store %arg12[%250, %c0_118], %247 {strides = array<i32>} : memref<64x128xf32, #tpu.memory_space<vmem>>, vector<8x128xf32>,
    %c6_i32 = arith.constant 6 : i32
    %c8_i32_119 = arith.constant 8 : i32
    %252 = arith.muli %c6_i32, %c8_i32_119 : i32
    %253 = tpu.assume_multiple %252, 8 : i32
    %254 = arith.index_cast %253 : i32 to index
    %c0_120 = arith.constant 0 : index
    %255 = vector.load %arg13[%254, %c0_120] : memref<64x512xf32, #tpu.memory_space<vmem>>, vector<8x512xf32>
    %c0_121 = arith.constant 0 : index
    %c0_122 = arith.constant 0 : index
    %256 = vector.load %arg14[%c0_121, %c0_122] : memref<8x128xf32, #tpu.memory_space<vmem>>, vector<8x128xf32>
    %257 = arith.truncf %256 : vector<8x128xf32> to vector<8x128xbf16>
    %c0_123 = arith.constant 0 : index
    %c0_124 = arith.constant 0 : index
    %c0_125 = arith.constant 0 : index
    %258 = vector.load %arg3[%c0_123, %c0_124, %c0_125] : memref<1x128x512xbf16, #tpu.memory_space<vmem>>, vector<1x128x512xbf16>
    %259 = vector.shape_cast %258 : vector<1x128x512xbf16> to vector<128x512xbf16>
    %cst_126 = arith.constant dense<0.000000e+00> : vector<8x512xf32>
    %260 = tpu.matmul %257, %259, %cst_126 {dimension_numbers = #tpu.dot_dimension_numbers<[1], [0], [0], [1], [0, 0, 1, 1], [], []>} : vector<8x128xbf16>, vector<128x512xbf16>, vector<8x512xf32> -> vector<8x512xf32>
    %261 = arith.addf %255, %260 : vector<8x512xf32>
    %262 = vector.extract_strided_slice %261 {offsets = [0, 0], sizes = [8, 128], strides = [1, 1]} : vector<8x512xf32> to vector<8x128xf32>
    %263 = arith.negf %262 : vector<8x128xf32>
    %264 = math.exp %263 : vector<8x128xf32>
    %cst_127 = arith.constant 1.000000e+00 : f32
    %265 = vector.broadcast %cst_127 : f32 to vector<8x128xf32>
    %266 = arith.addf %265, %264 : vector<8x128xf32>
    %267 = arith.divf %265, %266 : vector<8x128xf32>
    %268 = vector.extract_strided_slice %261 {offsets = [0, 128], sizes = [8, 128], strides = [1, 1]} : vector<8x512xf32> to vector<8x128xf32>
    %269 = arith.negf %268 : vector<8x128xf32>
    %270 = math.exp %269 : vector<8x128xf32>
    %cst_128 = arith.constant 1.000000e+00 : f32
    %271 = vector.broadcast %cst_128 : f32 to vector<8x128xf32>
    %272 = arith.addf %271, %270 : vector<8x128xf32>
    %273 = arith.divf %271, %272 : vector<8x128xf32>
    %274 = vector.extract_strided_slice %261 {offsets = [0, 256], sizes = [8, 128], strides = [1, 1]} : vector<8x512xf32> to vector<8x128xf32>
    %275 = math.tanh %274 : vector<8x128xf32>
    %276 = vector.extract_strided_slice %261 {offsets = [0, 384], sizes = [8, 128], strides = [1, 1]} : vector<8x512xf32> to vector<8x128xf32>
    %277 = arith.negf %276 : vector<8x128xf32>
    %278 = math.exp %277 : vector<8x128xf32>
    %cst_129 = arith.constant 1.000000e+00 : f32
    %279 = vector.broadcast %cst_129 : f32 to vector<8x128xf32>
    %280 = arith.addf %279, %278 : vector<8x128xf32>
    %281 = arith.divf %279, %280 : vector<8x128xf32>
    %c0_130 = arith.constant 0 : index
    %c0_131 = arith.constant 0 : index
    %282 = vector.load %arg15[%c0_130, %c0_131] : memref<8x128xf32, #tpu.memory_space<vmem>>, vector<8x128xf32>
    %283 = arith.mulf %273, %282 : vector<8x128xf32>
    %284 = arith.mulf %267, %275 : vector<8x128xf32>
    %285 = arith.addf %283, %284 : vector<8x128xf32>
    %286 = math.tanh %285 : vector<8x128xf32>
    %287 = arith.mulf %281, %286 : vector<8x128xf32>
    %c0_132 = arith.constant 0 : index
    %c0_133 = arith.constant 0 : index
    %288 = vector.load %arg15[%c0_132, %c0_133] : memref<8x128xf32, #tpu.memory_space<vmem>>, vector<8x128xf32>
    tpu.vector_store %arg15[%c0_132, %c0_133], %285 {strides = array<i32>} : memref<8x128xf32, #tpu.memory_space<vmem>>, vector<8x128xf32>,
    %c0_134 = arith.constant 0 : index
    %c0_135 = arith.constant 0 : index
    %289 = vector.load %arg14[%c0_134, %c0_135] : memref<8x128xf32, #tpu.memory_space<vmem>>, vector<8x128xf32>
    tpu.vector_store %arg14[%c0_134, %c0_135], %287 {strides = array<i32>} : memref<8x128xf32, #tpu.memory_space<vmem>>, vector<8x128xf32>,
    %290 = arith.index_cast %253 : i32 to index
    %c0_136 = arith.constant 0 : index
    %291 = vector.load %arg12[%290, %c0_136] : memref<64x128xf32, #tpu.memory_space<vmem>>, vector<8x128xf32>
    tpu.vector_store %arg12[%290, %c0_136], %287 {strides = array<i32>} : memref<64x128xf32, #tpu.memory_space<vmem>>, vector<8x128xf32>,
    %c7_i32 = arith.constant 7 : i32
    %c8_i32_137 = arith.constant 8 : i32
    %292 = arith.muli %c7_i32, %c8_i32_137 : i32
    %293 = tpu.assume_multiple %292, 8 : i32
    %294 = arith.index_cast %293 : i32 to index
    %c0_138 = arith.constant 0 : index
    %295 = vector.load %arg13[%294, %c0_138] : memref<64x512xf32, #tpu.memory_space<vmem>>, vector<8x512xf32>
    %c0_139 = arith.constant 0 : index
    %c0_140 = arith.constant 0 : index
    %296 = vector.load %arg14[%c0_139, %c0_140] : memref<8x128xf32, #tpu.memory_space<vmem>>, vector<8x128xf32>
    %297 = arith.truncf %296 : vector<8x128xf32> to vector<8x128xbf16>
    %c0_141 = arith.constant 0 : index
    %c0_142 = arith.constant 0 : index
    %c0_143 = arith.constant 0 : index
    %298 = vector.load %arg3[%c0_141, %c0_142, %c0_143] : memref<1x128x512xbf16, #tpu.memory_space<vmem>>, vector<1x128x512xbf16>
    %299 = vector.shape_cast %298 : vector<1x128x512xbf16> to vector<128x512xbf16>
    %cst_144 = arith.constant dense<0.000000e+00> : vector<8x512xf32>
    %300 = tpu.matmul %297, %299, %cst_144 {dimension_numbers = #tpu.dot_dimension_numbers<[1], [0], [0], [1], [0, 0, 1, 1], [], []>} : vector<8x128xbf16>, vector<128x512xbf16>, vector<8x512xf32> -> vector<8x512xf32>
    %301 = arith.addf %295, %300 : vector<8x512xf32>
    %302 = vector.extract_strided_slice %301 {offsets = [0, 0], sizes = [8, 128], strides = [1, 1]} : vector<8x512xf32> to vector<8x128xf32>
    %303 = arith.negf %302 : vector<8x128xf32>
    %304 = math.exp %303 : vector<8x128xf32>
    %cst_145 = arith.constant 1.000000e+00 : f32
    %305 = vector.broadcast %cst_145 : f32 to vector<8x128xf32>
    %306 = arith.addf %305, %304 : vector<8x128xf32>
    %307 = arith.divf %305, %306 : vector<8x128xf32>
    %308 = vector.extract_strided_slice %301 {offsets = [0, 128], sizes = [8, 128], strides = [1, 1]} : vector<8x512xf32> to vector<8x128xf32>
    %309 = arith.negf %308 : vector<8x128xf32>
    %310 = math.exp %309 : vector<8x128xf32>
    %cst_146 = arith.constant 1.000000e+00 : f32
    %311 = vector.broadcast %cst_146 : f32 to vector<8x128xf32>
    %312 = arith.addf %311, %310 : vector<8x128xf32>
    %313 = arith.divf %311, %312 : vector<8x128xf32>
    %314 = vector.extract_strided_slice %301 {offsets = [0, 256], sizes = [8, 128], strides = [1, 1]} : vector<8x512xf32> to vector<8x128xf32>
    %315 = math.tanh %314 : vector<8x128xf32>
    %316 = vector.extract_strided_slice %301 {offsets = [0, 384], sizes = [8, 128], strides = [1, 1]} : vector<8x512xf32> to vector<8x128xf32>
    %317 = arith.negf %316 : vector<8x128xf32>
    %318 = math.exp %317 : vector<8x128xf32>
    %cst_147 = arith.constant 1.000000e+00 : f32
    %319 = vector.broadcast %cst_147 : f32 to vector<8x128xf32>
    %320 = arith.addf %319, %318 : vector<8x128xf32>
    %321 = arith.divf %319, %320 : vector<8x128xf32>
    %c0_148 = arith.constant 0 : index
    %c0_149 = arith.constant 0 : index
    %322 = vector.load %arg15[%c0_148, %c0_149] : memref<8x128xf32, #tpu.memory_space<vmem>>, vector<8x128xf32>
    %323 = arith.mulf %313, %322 : vector<8x128xf32>
    %324 = arith.mulf %307, %315 : vector<8x128xf32>
    %325 = arith.addf %323, %324 : vector<8x128xf32>
    %326 = math.tanh %325 : vector<8x128xf32>
    %327 = arith.mulf %321, %326 : vector<8x128xf32>
    %c0_150 = arith.constant 0 : index
    %c0_151 = arith.constant 0 : index
    %328 = vector.load %arg15[%c0_150, %c0_151] : memref<8x128xf32, #tpu.memory_space<vmem>>, vector<8x128xf32>
    tpu.vector_store %arg15[%c0_150, %c0_151], %325 {strides = array<i32>} : memref<8x128xf32, #tpu.memory_space<vmem>>, vector<8x128xf32>,
    %c0_152 = arith.constant 0 : index
    %c0_153 = arith.constant 0 : index
    %329 = vector.load %arg14[%c0_152, %c0_153] : memref<8x128xf32, #tpu.memory_space<vmem>>, vector<8x128xf32>
    tpu.vector_store %arg14[%c0_152, %c0_153], %327 {strides = array<i32>} : memref<8x128xf32, #tpu.memory_space<vmem>>, vector<8x128xf32>,
    %330 = arith.index_cast %293 : i32 to index
    %c0_154 = arith.constant 0 : index
    %331 = vector.load %arg12[%330, %c0_154] : memref<64x128xf32, #tpu.memory_space<vmem>>, vector<8x128xf32>
    tpu.vector_store %arg12[%330, %c0_154], %327 {strides = array<i32>} : memref<64x128xf32, #tpu.memory_space<vmem>>, vector<8x128xf32>,
    %c8_i32_155 = arith.constant 8 : i32
    %c0_156 = arith.constant 0 : index
    %c0_157 = arith.constant 0 : index
    %332 = vector.load %arg14[%c0_156, %c0_157] : memref<8x128xf32, #tpu.memory_space<vmem>>, vector<8x128xf32>
    %c0_158 = arith.constant 0 : index
    %c0_159 = arith.constant 0 : index
    %c0_160 = arith.constant 0 : index
    %333 = vector.load %arg10[%c0_158, %c0_159, %c0_160] : memref<1x8x128xf32, #tpu.memory_space<vmem>>, vector<1x8x128xf32>
    %334 = vector.shape_cast %333 : vector<1x8x128xf32> to vector<8x128xf32>
    %335 = vector.shape_cast %332 : vector<8x128xf32> to vector<1x8x128xf32>
    tpu.vector_store %arg10[%c0_158, %c0_159, %c0_160], %335 {strides = array<i32>} : memref<1x8x128xf32, #tpu.memory_space<vmem>>, vector<1x8x128xf32>,
    %c0_161 = arith.constant 0 : index
    %c0_162 = arith.constant 0 : index
    %336 = vector.load %arg15[%c0_161, %c0_162] : memref<8x128xf32, #tpu.memory_space<vmem>>, vector<8x128xf32>
    %c0_163 = arith.constant 0 : index
    %c0_164 = arith.constant 0 : index
    %c0_165 = arith.constant 0 : index
    %337 = vector.load %arg11[%c0_163, %c0_164, %c0_165] : memref<1x8x128xf32, #tpu.memory_space<vmem>>, vector<1x8x128xf32>
    %338 = vector.shape_cast %337 : vector<1x8x128xf32> to vector<8x128xf32>
    %339 = vector.shape_cast %336 : vector<8x128xf32> to vector<1x8x128xf32>
    tpu.vector_store %arg11[%c0_163, %c0_164, %c0_165], %339 {strides = array<i32>} : memref<1x8x128xf32, #tpu.memory_space<vmem>>, vector<1x8x128xf32>,
    %c1_i32_166 = arith.constant 1 : i32
    %340 = arith.cmpi eq, %arg0, %c1_i32_166 : i32
    %341 = arith.extui %340 : i1 to i32
    %c0_i32_167 = arith.constant 0 : i32
    %342 = arith.cmpi ne, %341, %c0_i32_167 : i32
    scf.if %342 {
      %c0_168 = arith.constant 0 : index
      %c0_169 = arith.constant 0 : index
      %343 = vector.load %arg12[%c0_168, %c0_169] : memref<64x128xf32, #tpu.memory_space<vmem>>, vector<64x128xf32>
      %344 = arith.truncf %343 : vector<64x128xf32> to vector<64x128xbf16>
      %c0_170 = arith.constant 0 : index
      %c0_171 = arith.constant 0 : index
      %345 = vector.load %arg7[%c0_170, %c0_171] : memref<128x128xbf16, #tpu.memory_space<vmem>>, vector<128x128xbf16>
      %cst_172 = arith.constant dense<0.000000e+00> : vector<64x128xf32>
      %346 = tpu.matmul %344, %345, %cst_172 {dimension_numbers = #tpu.dot_dimension_numbers<[1], [0], [0], [1], [0, 0, 1, 1], [], []>} : vector<64x128xbf16>, vector<128x128xbf16>, vector<64x128xf32> -> vector<64x128xf32>
      %c0_173 = arith.constant 0 : index
      %c0_174 = arith.constant 0 : index
      %347 = vector.load %arg8[%c0_173, %c0_174] : memref<1x128xf32, #tpu.memory_space<vmem>>, vector<1x128xf32>
      %348 = vector.broadcast %347 : vector<1x128xf32> to vector<64x128xf32>
      %349 = arith.addf %346, %348 : vector<64x128xf32>
      %c0_175 = arith.constant 0 : index
      %c0_176 = arith.constant 0 : index
      %350 = vector.load %arg9[%c0_175, %c0_176] : memref<64x128xf32, #tpu.memory_space<vmem>>, vector<64x128xf32>
      tpu.vector_store %arg9[%c0_175, %c0_176], %349 {strides = array<i32>} : memref<64x128xf32, #tpu.memory_space<vmem>>, vector<64x128xf32>,
    } else {
    }
    return
  }
  func.func @transform_0(%arg0: i32) -> (i32, i32) {
    %c0_i32 = arith.constant 0 : i32
    %c0_i32_0 = arith.constant 0 : i32
    %c0_i32_1 = arith.constant 0 : i32
    return %c0_i32, %c0_i32_0 : i32, i32
  }
  func.func @transform_1(%arg0: i32) -> (i32, i32, i32) {
    %c0_i32 = arith.constant 0 : i32
    %c0_i32_0 = arith.constant 0 : i32
    %c0_i32_1 = arith.constant 0 : i32
    return %arg0, %c0_i32, %c0_i32_0 : i32, i32, i32
  }
  func.func @transform_2(%arg0: i32) -> (i32, i32, i32) {
    %c0_i32 = arith.constant 0 : i32
    %c0_i32_0 = arith.constant 0 : i32
    %c0_i32_1 = arith.constant 0 : i32
    return %arg0, %c0_i32, %c0_i32_0 : i32, i32, i32
  }
  func.func @transform_3(%arg0: i32) -> (i32, i32, i32) {
    %c0_i32 = arith.constant 0 : i32
    %c0_i32_0 = arith.constant 0 : i32
    %c0_i32_1 = arith.constant 0 : i32
    return %arg0, %c0_i32, %c0_i32_0 : i32, i32, i32
  }
  func.func @transform_4(%arg0: i32) -> (i32, i32, i32) {
    %c0_i32 = arith.constant 0 : i32
    %c0_i32_0 = arith.constant 0 : i32
    %c0_i32_1 = arith.constant 0 : i32
    return %arg0, %c0_i32, %c0_i32_0 : i32, i32, i32
  }
  func.func @transform_5(%arg0: i32) -> (i32, i32, i32) {
    %c0_i32 = arith.constant 0 : i32
    %c0_i32_0 = arith.constant 0 : i32
    %c0_i32_1 = arith.constant 0 : i32
    return %arg0, %c0_i32, %c0_i32_0 : i32, i32, i32
  }
  func.func @transform_6(%arg0: i32) -> (i32, i32) {
    %c0_i32 = arith.constant 0 : i32
    %c0_i32_0 = arith.constant 0 : i32
    %c0_i32_1 = arith.constant 0 : i32
    return %c0_i32, %c0_i32_0 : i32, i32
  }
  func.func @transform_7(%arg0: i32) -> (i32, i32) {
    %c0_i32 = arith.constant 0 : i32
    %c0_i32_0 = arith.constant 0 : i32
    %c0_i32_1 = arith.constant 0 : i32
    return %c0_i32, %c0_i32_0 : i32, i32
  }
  func.func @transform_8(%arg0: i32) -> (i32, i32) {
    %c0_i32 = arith.constant 0 : i32
    %c0_i32_0 = arith.constant 0 : i32
    %c0_i32_1 = arith.constant 0 : i32
    return %c0_i32, %c0_i32_0 : i32, i32
  }
  func.func @transform_9(%arg0: i32) -> (i32, i32, i32) {
    %c0_i32 = arith.constant 0 : i32
    %c0_i32_0 = arith.constant 0 : i32
    %c0_i32_1 = arith.constant 0 : i32
    return %arg0, %c0_i32, %c0_i32_0 : i32, i32, i32
  }
  func.func @transform_10(%arg0: i32) -> (i32, i32, i32) {
    %c0_i32 = arith.constant 0 : i32
    %c0_i32_0 = arith.constant 0 : i32
    %c0_i32_1 = arith.constant 0 : i32
    return %arg0, %c0_i32, %c0_i32_0 : i32, i32, i32
  }
}

</mosaic_0001>

<llo_original>
// kernel: tpu_custom_call.1
$region0: #{tpu_custom_call.1}
  #allocation0 [shape = 'u32[]', space=smem, size = 0x4, offset = 0x4, fixed_abs, tag = 'smem constant byte address 0x4 - core index']
  #allocation1 [shape = 'u32[144,128]{1,0:T(1,128)}', space=vmem, size = 0x12000, scoped, tag = 'internal scratch']
  #allocation2 [shape = 'f32[64,128]{1,0:T(8,128)}', space=vmem, size = 0x8000, scoped, tag = 'scratch operand']
  #allocation3 [shape = 'f32[64,512]{1,0:T(8,128)}', space=vmem, size = 0x20000, scoped, tag = 'scratch operand']
  #allocation4 [shape = 'f32[8,128]{1,0:T(8,128)}', space=vmem, size = 0x1000, scoped, tag = 'scratch operand']
  #allocation5 [shape = 'f32[8,128]{1,0:T(8,128)}', space=vmem, size = 0x1000, scoped, tag = 'scratch operand']
  %s0 = inlined_call_operand.hbm [shape: bf16[64,128], index: 0, kind: input, shape index: {}]
  %s1 = inlined_call_operand.hbm [shape: bf16[2,128,512], index: 1, kind: input, shape index: {}]
  %s2 = inlined_call_operand.hbm [shape: bf16[2,128,512], index: 2, kind: input, shape index: {}]
  %s3 = inlined_call_operand.hbm [shape: f32[2,1,512], index: 3, kind: input, shape index: {}]
  %s4 = inlined_call_operand.hbm [shape: f32[2,8,128], index: 4, kind: input, shape index: {}]
  %s5 = inlined_call_operand.vmem [shape: f32[2,8,128], index: 5, kind: input, shape index: {}]
  %s6 = inlined_call_operand.hbm [shape: bf16[128,128], index: 6, kind: input, shape index: {}]
  %s7 = inlined_call_operand.vmem [shape: f32[1,128], index: 7, kind: input, shape index: {}]
  %s8 = inlined_call_operand.hbm [shape: f32[64,128], index: 8, kind: output, shape index: {0}]
  %s9 = inlined_call_operand.hbm [shape: f32[2,8,128], index: 9, kind: output, shape index: {1}]
  %s10 = inlined_call_operand.hbm [shape: f32[2,8,128], index: 10, kind: output, shape index: {2}]
  %11 = xla_tuple %s8, %s9, %s10
  %s12 = sld [smem:[#allocation0]]
  $region117: #{tpu_custom_call.1} parent=0
    _
  %s14 = ssub.s32 1, %s12
  %s15 = scalar_select 0, %s14, %s12
  $region1: #{tpu_custom_call.1} parent=0
    #allocation6 [shape = 'u8[16384]{0}', space=vmem, size = 0x4000, scoped, tag = 'input window, operand 0, single buffered']
    #allocation7 [shape = 's32[2]{0}', space=sflag, size = 0x8, scoped, tag = 'scoped memory for tpu_custom_call.1']
    #allocation8 [shape = 's32[2]{0}', space=sflag, size = 0x8, scoped, tag = 'scoped memory for tpu_custom_call.1']
    #allocation9 [shape = 'u8[262144]{0}', space=vmem, size = 0x40000, scoped, tag = 'input window, operand 1']
    #allocation10 [shape = 's32[2]{0}', space=sflag, size = 0x8, scoped, tag = 'scoped memory for tpu_custom_call.1']
    #allocation11 [shape = 'u8[262144]{0}', space=vmem, size = 0x40000, scoped, tag = 'input window, operand 2']
    #allocation12 [shape = 'u8[4096]{0}', space=vmem, size = 0x1000, scoped, tag = 'input window, operand 3']
    #allocation13 [shape = 's32[2]{0}', space=sflag, size = 0x8, scoped, tag = 'scoped memory for tpu_custom_call.1']
    #allocation14 [shape = 'u8[8192]{0}', space=vmem, size = 0x2000, scoped, tag = 'input window, operand 4']
    #allocation15 [shape = 'u8[32768]{0}', space=vmem, size = 0x8000, scoped, tag = 'input window, operand 6, single buffered']
    #allocation16 [shape = 's32[1]{0}', space=sflag, size = 0x4, scoped, tag = 'scoped memory for tpu_custom_call.1']
    #allocation17 [shape = 'u8[32768]{0}', space=vmem, size = 0x8000, scoped, tag = 'output window, operand 0, single buffered']
    #allocation18 [shape = 'u8[8192]{0}', space=vmem, size = 0x2000, scoped, tag = 'output window, operand 1']
    #allocation19 [shape = 's32[2]{0}', space=sflag, size = 0x8, scoped, tag = 'scoped memory for tpu_custom_call.1']
    #allocation20 [shape = 'u8[8192]{0}', space=vmem, size = 0x2000, scoped, tag = 'output window, operand 2']
    %16 = vsyncpa [#allocation7], 0
    %17 = vsyncpa [#allocation10], 0
    %s18 = scalar_lea.sflag [#allocation10], 1
    %19 = vsyncpa %s18, 0
    %20 = vsyncpa [#allocation13], 0
    %s21 = scalar_lea.sflag [#allocation13], 1
    %22 = vsyncpa %s21, 0
    %23 = vsyncpa [#allocation16], 0
    %24 = vsyncpa [#allocation8], 0
    %25 = vsyncpa [#allocation19], 0
    %s26 = scalar_lea.sflag [#allocation19], 1
    %27 = vsyncpa %s26, 0
    loop: start=0, step=1, limit=4
    $region2: #{tpu_custom_call.1} parent=1 // loop_pre_header
      _
    $region3: #{tpu_custom_call.1} parent=1 // loop_header
      %s29 = sphi 0, %s33
      %p30 = scmp.ge.s32.totalorder %s29, 4
      %s37 = sphi 0, %s37
      %s39 = sphi 0, %s37
      %s40 = sphi 0, %s39
      %s54 = sphi 0, %s40
      %s60 = sphi 0, %s62
      %s63 = sphi 0, %s60
      %s64 = sphi 0, %s63
      %s80 = sphi 0, %s64
      %s86 = sphi 0, %s88
      %s89 = sphi 0, %s86
      %s90 = sphi 0, %s89
      %s106 = sphi 0, %s90
      %s112 = sphi 0, %s114
      %s115 = sphi 0, %s112
      %s116 = sphi 0, %s115
      %s132 = sphi 0, %s116
      %s138 = sphi 0, %s140
      %s141 = sphi 0, %s138
      %s142 = sphi 0, %s141
      %s158 = sphi 0, %s142
      %s164 = sphi 0, %s166
      %s167 = sphi 0, %s164
      %s168 = sphi 0, %s167
      %s184 = sphi 0, %s168
      %s188 = sphi 0, %s188
      %s190 = sphi 0, %s188
      %s191 = sphi 0, %s190
      %s205 = sphi 0, %s191
      %s209 = sphi 0, %s209
      %s211 = sphi 0, %s209
      %s212 = sphi 0, %s211
      %s226 = sphi 0, %s212
      %s230 = sphi 0, %s230
      %s232 = sphi 0, %s230
      %s233 = sphi 0, %s232
      %s247 = sphi 0, %s233
      %s253 = sphi 0, %s255
      %s256 = sphi 0, %s253
      %s257 = sphi 0, %s256
      %s273 = sphi 0, %s257
      %s279 = sphi 0, %s281
      %s282 = sphi 0, %s279
      %s283 = sphi 0, %s282
      %s299 = sphi 0, %s283
    $region4: #{tpu_custom_call.1} parent=1 // loop_header_branch
      %32 = sbr.rel (%p30) target = $region8
    $region5: #{tpu_custom_call.1} parent=1 // loop_body
      %s34 = ssub.s32 %s29, 1
      %s35 = ssub.s32 %s29, 2
      %s36 = sadd.s32 %s29, 1
      %s38 = sadd.s32 %s37, 1
      %p41 = scmp.eq.s32.totalorder %s29, 1
      %p42 = scmp.ne.s32.totalorder %s37, %s39
      %p43 = scmp.eq.s32.totalorder %s29, 0
      %p44 = por %p42, %p43
      %p45 = scmp.ne.s32.totalorder %s37, %s39
      %p46 = scmp.eq.s32.totalorder %s34, 1
      %p47 = por %p45, %p46
      %p48 = scmp.ne.s32.totalorder %s39, %s40
      %p49 = scmp.eq.s32.totalorder %s34, 0
      %p50 = por %p48, %p49
      %p51 = scmp.ne.s32.totalorder %s39, %s40
      %p52 = scmp.eq.s32.totalorder %s35, 1
      %p53 = por %p51, %p52
      %p55 = scmp.ne.s32.totalorder %s40, %s54
      %p56 = scmp.eq.s32.totalorder %s35, 0
      %p57 = por %p55, %p56
      %s58 = ssub.s32 %s29, %s36
      %p59 = scmp.eq.s32.totalorder %s58, 0
      %s61 = sadd.s32 %s60, 1
      %s62 = scalar_select %p59, %s60, %s61
      %p65 = pneg %p59
      %p66 = scmp.eq.s32.totalorder %s29, 1
      %p67 = por %p65, %p66
      %p68 = scmp.ne.s32.totalorder %s60, %s63
      %p69 = scmp.eq.s32.totalorder %s29, 0
      %p70 = por %p68, %p69
      %p71 = scmp.ne.s32.totalorder %s60, %s63
      %p72 = scmp.eq.s32.totalorder %s34, 1
      %p73 = por %p71, %p72
      %p74 = scmp.ne.s32.totalorder %s63, %s64
      %p75 = scmp.eq.s32.totalorder %s34, 0
      %p76 = por %p74, %p75
      %p77 = scmp.ne.s32.totalorder %s63, %s64
      %p78 = scmp.eq.s32.totalorder %s35, 1
      %p79 = por %p77, %p78
      %p81 = scmp.ne.s32.totalorder %s64, %s80
      %p82 = scmp.eq.s32.totalorder %s35, 0
      %p83 = por %p81, %p82
      %s84 = ssub.s32 %s29, %s36
      %p85 = scmp.eq.s32.totalorder %s84, 0
      %s87 = sadd.s32 %s86, 1
      %s88 = scalar_select %p85, %s86, %s87
      %p91 = pneg %p85
      %p92 = scmp.eq.s32.totalorder %s29, 1
      %p93 = por %p91, %p92
      %p94 = scmp.ne.s32.totalorder %s86, %s89
      %p95 = scmp.eq.s32.totalorder %s29, 0
      %p96 = por %p94, %p95
      %p97 = scmp.ne.s32.totalorder %s86, %s89
      %p98 = scmp.eq.s32.totalorder %s34, 1
      %p99 = por %p97, %p98
      %p100 = scmp.ne.s32.totalorder %s89, %s90
      %p101 = scmp.eq.s32.totalorder %s34, 0
      %p102 = por %p100, %p101
      %p103 = scmp.ne.s32.totalorder %s89, %s90
      %p104 = scmp.eq.s32.totalorder %s35, 1
      %p105 = por %p103, %p104
      %p107 = scmp.ne.s32.totalorder %s90, %s106
      %p108 = scmp.eq.s32.totalorder %s35, 0
      %p109 = por %p107, %p108
      %s110 = ssub.s32 %s29, %s36
      %p111 = scmp.eq.s32.totalorder %s110, 0
      %s113 = sadd.s32 %s112, 1
      %s114 = scalar_select %p111, %s112, %s113
      %p117 = pneg %p111
      %p118 = scmp.eq.s32.totalorder %s29, 1
      %p119 = por %p117, %p118
      %p120 = scmp.ne.s32.totalorder %s112, %s115
      %p121 = scmp.eq.s32.totalorder %s29, 0
      %p122 = por %p120, %p121
      %p123 = scmp.ne.s32.totalorder %s112, %s115
      %p124 = scmp.eq.s32.totalorder %s34, 1
      %p125 = por %p123, %p124
      %p126 = scmp.ne.s32.totalorder %s115, %s116
      %p127 = scmp.eq.s32.totalorder %s34, 0
      %p128 = por %p126, %p127
      %p129 = scmp.ne.s32.totalorder %s115, %s116
      %p130 = scmp.eq.s32.totalorder %s35, 1
      %p131 = por %p129, %p130
      %p133 = scmp.ne.s32.totalorder %s116, %s132
      %p134 = scmp.eq.s32.totalorder %s35, 0
      %p135 = por %p133, %p134
      %s136 = ssub.s32 %s29, %s36
      %p137 = scmp.eq.s32.totalorder %s136, 0
      %s139 = sadd.s32 %s138, 1
      %s140 = scalar_select %p137, %s138, %s139
      %p143 = pneg %p137
      %p144 = scmp.eq.s32.totalorder %s29, 1
      %p145 = por %p143, %p144
      %p146 = scmp.ne.s32.totalorder %s138, %s141
      %p147 = scmp.eq.s32.totalorder %s29, 0
      %p148 = por %p146, %p147
      %p149 = scmp.ne.s32.totalorder %s138, %s141
      %p150 = scmp.eq.s32.totalorder %s34, 1
      %p151 = por %p149, %p150
      %p152 = scmp.ne.s32.totalorder %s141, %s142
      %p153 = scmp.eq.s32.totalorder %s34, 0
      %p154 = por %p152, %p153
      %p155 = scmp.ne.s32.totalorder %s141, %s142
      %p156 = scmp.eq.s32.totalorder %s35, 1
      %p157 = por %p155, %p156
      %p159 = scmp.ne.s32.totalorder %s142, %s158
      %p160 = scmp.eq.s32.totalorder %s35, 0
      %p161 = por %p159, %p160
      %s162 = ssub.s32 %s29, %s36
      %p163 = scmp.eq.s32.totalorder %s162, 0
      %s165 = sadd.s32 %s164, 1
      %s166 = scalar_select %p163, %s164, %s165
      %p169 = pneg %p163
      %p170 = scmp.eq.s32.totalorder %s29, 1
      %p171 = por %p169, %p170
      %p172 = scmp.ne.s32.totalorder %s164, %s167
      %p173 = scmp.eq.s32.totalorder %s29, 0
      %p174 = por %p172, %p173
      %p175 = scmp.ne.s32.totalorder %s164, %s167
      %p176 = scmp.eq.s32.totalorder %s34, 1
      %p177 = por %p175, %p176
      %p178 = scmp.ne.s32.totalorder %s167, %s168
      %p179 = scmp.eq.s32.totalorder %s34, 0
      %p180 = por %p178, %p179
      %p181 = scmp.ne.s32.totalorder %s167, %s168
      %p182 = scmp.eq.s32.totalorder %s35, 1
      %p183 = por %p181, %p182
      %p185 = scmp.ne.s32.totalorder %s168, %s184
      %p186 = scmp.eq.s32.totalorder %s35, 0
      %p187 = por %p185, %p186
      %s189 = sadd.s32 %s188, 1
      %p192 = scmp.eq.s32.totalorder %s29, 1
      %p193 = scmp.ne.s32.totalorder %s188, %s190
      %p194 = scmp.eq.s32.totalorder %s29, 0
      %p195 = por %p193, %p194
      %p196 = scmp.ne.s32.totalorder %s188, %s190
      %p197 = scmp.eq.s32.totalorder %s34, 1
      %p198 = por %p196, %p197
      %p199 = scmp.ne.s32.totalorder %s190, %s191
      %p200 = scmp.eq.s32.totalorder %s34, 0
      %p201 = por %p199, %p200
      %p202 = scmp.ne.s32.totalorder %s190, %s191
      %p203 = scmp.eq.s32.totalorder %s35, 1
      %p204 = por %p202, %p203
      %p206 = scmp.ne.s32.totalorder %s191, %s205
      %p207 = scmp.eq.s32.totalorder %s35, 0
      %p208 = por %p206, %p207
      %s210 = sadd.s32 %s209, 1
      %p213 = scmp.eq.s32.totalorder %s29, 1
      %p214 = scmp.ne.s32.totalorder %s209, %s211
      %p215 = scmp.eq.s32.totalorder %s29, 0
      %p216 = por %p214, %p215
      %p217 = scmp.ne.s32.totalorder %s209, %s211
      %p218 = scmp.eq.s32.totalorder %s34, 1
      %p219 = por %p217, %p218
      %p220 = scmp.ne.s32.totalorder %s211, %s212
      %p221 = scmp.eq.s32.totalorder %s34, 0
      %p222 = por %p220, %p221
      %p223 = scmp.ne.s32.totalorder %s211, %s212
      %p224 = scmp.eq.s32.totalorder %s35, 1
      %p225 = por %p223, %p224
      %p227 = scmp.ne.s32.totalorder %s212, %s226
      %p228 = scmp.eq.s32.totalorder %s35, 0
      %p229 = por %p227, %p228
      %s231 = sadd.s32 %s230, 1
      %p234 = scmp.eq.s32.totalorder %s29, 1
      %p235 = scmp.ne.s32.totalorder %s230, %s232
      %p236 = scmp.eq.s32.totalorder %s29, 0
      %p237 = por %p235, %p236
      %p238 = scmp.ne.s32.totalorder %s230, %s232
      %p239 = scmp.eq.s32.totalorder %s34, 1
      %p240 = por %p238, %p239
      %p241 = scmp.ne.s32.totalorder %s232, %s233
      %p242 = scmp.eq.s32.totalorder %s34, 0
      %p243 = por %p241, %p242
      %p244 = scmp.ne.s32.totalorder %s232, %s233
      %p245 = scmp.eq.s32.totalorder %s35, 1
      %p246 = por %p244, %p245
      %p248 = scmp.ne.s32.totalorder %s233, %s247
      %p249 = scmp.eq.s32.totalorder %s35, 0
      %p250 = por %p248, %p249
      %s251 = ssub.s32 %s29, %s36
      %p252 = scmp.eq.s32.totalorder %s251, 0
      %s254 = sadd.s32 %s253, 1
      %s255 = scalar_select %p252, %s253, %s254
      %p258 = pneg %p252
      %p259 = scmp.eq.s32.totalorder %s29, 1
      %p260 = por %p258, %p259
      %p261 = scmp.ne.s32.totalorder %s253, %s256
      %p262 = scmp.eq.s32.totalorder %s29, 0
      %p263 = por %p261, %p262
      %p264 = scmp.ne.s32.totalorder %s253, %s256
      %p265 = scmp.eq.s32.totalorder %s34, 1
      %p266 = por %p264, %p265
      %p267 = scmp.ne.s32.totalorder %s256, %s257
      %p268 = scmp.eq.s32.totalorder %s34, 0
      %p269 = por %p267, %p268
      %p270 = scmp.ne.s32.totalorder %s256, %s257
      %p271 = scmp.eq.s32.totalorder %s35, 1
      %p272 = por %p270, %p271
      %p274 = scmp.ne.s32.totalorder %s257, %s273
      %p275 = scmp.eq.s32.totalorder %s35, 0
      %p276 = por %p274, %p275
      %s277 = ssub.s32 %s29, %s36
      %p278 = scmp.eq.s32.totalorder %s277, 0
      %s280 = sadd.s32 %s279, 1
      %s281 = scalar_select %p278, %s279, %s280
      %p284 = pneg %p278
      %p285 = scmp.eq.s32.totalorder %s29, 1
      %p286 = por %p284, %p285
      %p287 = scmp.ne.s32.totalorder %s279, %s282
      %p288 = scmp.eq.s32.totalorder %s29, 0
      %p289 = por %p287, %p288
      %p290 = scmp.ne.s32.totalorder %s279, %s282
      %p291 = scmp.eq.s32.totalorder %s34, 1
      %p292 = por %p290, %p291
      %p293 = scmp.ne.s32.totalorder %s282, %s283
      %p294 = scmp.eq.s32.totalorder %s34, 0
      %p295 = por %p293, %p294
      %p296 = scmp.ne.s32.totalorder %s282, %s283
      %p297 = scmp.eq.s32.totalorder %s35, 1
      %p298 = por %p296, %p297
      %p300 = scmp.ne.s32.totalorder %s283, %s299
      %p301 = scmp.eq.s32.totalorder %s35, 0
      %p302 = por %p300, %p301
      %p303 = scmp.le.s32.totalorder 1, %s29
      %p304 = scmp.lt.s32.totalorder %s29, 3
      %p305 = pnand %p303, %p304
      %p306 = pneg %p305
      // Predicated region
      $region9: #{tpu_custom_call.1} parent=5 // pred_check
        _
      $region10: #{tpu_custom_call.1} parent=5 // pred_check_branch
        %308 = sbr.rel (%p305) target = $region12
      $region11: #{tpu_custom_call.1} parent=5 // pred_region
        %s309 = ssub.s32 %s29, 1
        // Predicated region
        $region13: #{tpu_custom_call.1} parent=11 // pred_check
          %p310 = pneg %p50
        $region14: #{tpu_custom_call.1} parent=11 // pred_check_branch
          %312 = sbr.rel (%p310) target = $region16
        $region15: #{tpu_custom_call.1} parent=11 // pred_region
          %s314 = ssub.s32 512, 512
          %315 = vsyncadd [#allocation7], %s314
          %s316 = sshll.u32 [#allocation6], 4
          %s317 = int_to_ptr.vmem [resolvable:$true] %s316
          %322 = dma.hbm_to_vmem [thread:$0]  %s0, 512, %s317, [#allocation7], 64, 64, 4
        $region16: #{tpu_custom_call.1} parent=11 // pred_fallthru
          _
        // Predicated region
        $region17: #{tpu_custom_call.1} parent=11 // pred_check
          %p323 = pneg %p201
        $region18: #{tpu_custom_call.1} parent=11 // pred_check_branch
          %325 = sbr.rel (%p323) target = $region20
        $region19: #{tpu_custom_call.1} parent=11 // pred_region
          %s327 = ssub.s32 1024, 1024
          %328 = vsyncadd [#allocation16], %s327
          %s329 = sshll.u32 [#allocation15], 4
          %s330 = int_to_ptr.vmem [resolvable:$true] %s329
          %335 = dma.hbm_to_vmem [thread:$0]  %s6, 1024, %s330, [#allocation16], 64, 64, 4
        $region20: #{tpu_custom_call.1} parent=11 // pred_fallthru
          _
        // Predicated region
        $region21: #{tpu_custom_call.1} parent=11 // pred_check
          %p336 = pneg %p222
        $region22: #{tpu_custom_call.1} parent=11 // pred_check_branch
          %338 = sbr.rel (%p336) target = $region24
        $region23: #{tpu_custom_call.1} parent=11 // pred_region
          _
        $region24: #{tpu_custom_call.1} parent=11 // pred_fallthru
          _
      $region12: #{tpu_custom_call.1} parent=5 // pred_fallthru
        _
      %p339 = scmp.lt.s32.totalorder %s29, 2
      // Predicated region
      $region25: #{tpu_custom_call.1} parent=5 // pred_check
        %p340 = pneg %p339
      $region26: #{tpu_custom_call.1} parent=5 // pred_check_branch
        %342 = sbr.rel (%p340) target = $region28
      $region27: #{tpu_custom_call.1} parent=5 // pred_region
        // Predicated region
        $region29: #{tpu_custom_call.1} parent=27 // pred_check
          %p343 = pneg %p70
        $region30: #{tpu_custom_call.1} parent=27 // pred_check_branch
          %345 = sbr.rel (%p343) target = $region32
        $region31: #{tpu_custom_call.1} parent=27 // pred_region
          %s346 = sand.u32 %s29, 1
          %s347 = scalar_lea.sflag [#allocation10], %s346
          %s348 = sand.u32 %s60, 1
          %s349 = smul.addr %s348, 256
          %s350 = scalar_lea.vmem [#allocation9], %s349
          %s352 = ssub.s32 4096, 4096
          %353 = vsyncadd %s347, %s352
          %s354 = smul.addr %s29, 64
          %s355 = smul.addr %s354, 64
          %s356 = scalar_lea.hbm %s1, %s355
          %s357 = sshll.u32 %s350, 4
          %s358 = int_to_ptr.vmem [resolvable:$true] %s357
          %363 = dma.hbm_to_vmem [thread:$0]  %s356, 4096, %s358, %s347, 256, 256, 16
        $region32: #{tpu_custom_call.1} parent=27 // pred_fallthru
          _
        // Predicated region
        $region33: #{tpu_custom_call.1} parent=27 // pred_check
          %p364 = pneg %p96
        $region34: #{tpu_custom_call.1} parent=27 // pred_check_branch
          %366 = sbr.rel (%p364) target = $region36
        $region35: #{tpu_custom_call.1} parent=27 // pred_region
          %s367 = sand.u32 %s29, 1
          %s368 = scalar_lea.sflag [#allocation10], %s367
          %s369 = sand.u32 %s86, 1
          %s370 = smul.addr %s369, 256
          %s371 = scalar_lea.vmem [#allocation11], %s370
          %s373 = ssub.s32 4096, 4096
          %374 = vsyncadd %s368, %s373
          %s375 = smul.addr %s29, 64
          %s376 = smul.addr %s375, 64
          %s377 = scalar_lea.hbm %s2, %s376
          %s378 = sshll.u32 %s371, 4
          %s379 = int_to_ptr.vmem [resolvable:$true] %s378
          %384 = dma.hbm_to_vmem [thread:$0]  %s377, 4096, %s379, %s368, 256, 256, 16
        $region36: #{tpu_custom_call.1} parent=27 // pred_fallthru
          _
        // Predicated region
        $region37: #{tpu_custom_call.1} parent=27 // pred_check
          %p385 = pneg %p122
        $region38: #{tpu_custom_call.1} parent=27 // pred_check_branch
          %387 = sbr.rel (%p385) target = $region40
        $region39: #{tpu_custom_call.1} parent=27 // pred_region
          %s388 = sand.u32 %s29, 1
          %s389 = scalar_lea.sflag [#allocation13], %s388
          %s390 = sand.u32 %s112, 1
          %s391 = smul.addr %s390, 4
          %s392 = scalar_lea.vmem [#allocation12], %s391
          %s394 = ssub.s32 64, 64
          %395 = vsyncadd %s389, %s394
          %s396 = smul.addr %s29, 4
          %s397 = smul.addr %s396, 16
          %s398 = scalar_lea.hbm %s3, %s397
          %s400 = sshll.u32 %s392, 4
          %s401 = int_to_ptr.vmem [resolvable:$true] %s400
          %403 = dma.hbm_to_vmem [thread:$0]  %s398, 64, %s401, %s389
        $region40: #{tpu_custom_call.1} parent=27 // pred_fallthru
          _
        // Predicated region
        $region41: #{tpu_custom_call.1} parent=27 // pred_check
          %p404 = pneg %p148
        $region42: #{tpu_custom_call.1} parent=27 // pred_check_branch
          %406 = sbr.rel (%p404) target = $region44
        $region43: #{tpu_custom_call.1} parent=27 // pred_region
          %s407 = sand.u32 %s29, 1
          %s408 = scalar_lea.sflag [#allocation13], %s407
          %s409 = sand.u32 %s138, 1
          %s410 = smul.addr %s409, 8
          %s411 = scalar_lea.vmem [#allocation14], %s410
          %s413 = ssub.s32 128, 128
          %414 = vsyncadd %s408, %s413
          %s415 = smul.addr %s29, 128
          %s416 = scalar_lea.hbm %s4, %s415
          %s418 = sshll.u32 %s411, 4
          %s419 = int_to_ptr.vmem [resolvable:$true] %s418
          %421 = dma.hbm_to_vmem [thread:$0]  %s416, 128, %s419, %s408
        $region44: #{tpu_custom_call.1} parent=27 // pred_fallthru
          _
        // Predicated region
        $region45: #{tpu_custom_call.1} parent=27 // pred_check
          %p422 = pneg %p174
        $region46: #{tpu_custom_call.1} parent=27 // pred_check_branch
          %424 = sbr.rel (%p422) target = $region48
        $region47: #{tpu_custom_call.1} parent=27 // pred_region
          %p425 = scmp.lt.s32.totalorder %s29, 1
          %s426 = scalar_select %p425, %s29, 1
          %s427 = smul.addr %s426, 8
          %s428 = scalar_lea.vmem %s5, %s427
        $region48: #{tpu_custom_call.1} parent=27 // pred_fallthru
          _
      $region28: #{tpu_custom_call.1} parent=5 // pred_fallthru
        _
      %p429 = scmp.le.s32.totalorder 1, %s29
      %p430 = scmp.lt.s32.totalorder %s29, 3
      %p431 = pnand %p429, %p430
      %p432 = pneg %p431
      // Predicated region
      $region49: #{tpu_custom_call.1} parent=5 // pred_check
        _
      $region50: #{tpu_custom_call.1} parent=5 // pred_check_branch
        %434 = sbr.rel (%p431) target = $region52
      $region51: #{tpu_custom_call.1} parent=5 // pred_region
        %s435 = ssub.s32 %s29, 1
        // Predicated region
        $region53: #{tpu_custom_call.1} parent=51 // pred_check
          %p436 = pneg %p50
        $region54: #{tpu_custom_call.1} parent=51 // pred_check_branch
          %438 = sbr.rel (%p436) target = $region56
        $region55: #{tpu_custom_call.1} parent=51 // pred_region
          %439 = dma.done [#allocation7], 512
        $region56: #{tpu_custom_call.1} parent=51 // pred_fallthru
          _
        %s440 = sand.u32 %s34, 1
        %s441 = scalar_lea.sflag [#allocation10], %s440
        %s442 = sand.u32 %s63, 1
        %s443 = smul.addr %s442, 256
        %s444 = scalar_lea.vmem [#allocation9], %s443
        // Predicated region
        $region57: #{tpu_custom_call.1} parent=51 // pred_check
          %p445 = pneg %p76
        $region58: #{tpu_custom_call.1} parent=51 // pred_check_branch
          %447 = sbr.rel (%p445) target = $region60
        $region59: #{tpu_custom_call.1} parent=51 // pred_region
          %448 = dma.done %s441, 4096
        $region60: #{tpu_custom_call.1} parent=51 // pred_fallthru
          _
        %s449 = sand.u32 %s34, 1
        %s450 = scalar_lea.sflag [#allocation10], %s449
        %s451 = sand.u32 %s89, 1
        %s452 = smul.addr %s451, 256
        %s453 = scalar_lea.vmem [#allocation11], %s452
        // Predicated region
        $region61: #{tpu_custom_call.1} parent=51 // pred_check
          %p454 = pneg %p102
        $region62: #{tpu_custom_call.1} parent=51 // pred_check_branch
          %456 = sbr.rel (%p454) target = $region64
        $region63: #{tpu_custom_call.1} parent=51 // pred_region
          %457 = dma.done %s450, 4096
        $region64: #{tpu_custom_call.1} parent=51 // pred_fallthru
          _
        %s458 = sand.u32 %s34, 1
        %s459 = scalar_lea.sflag [#allocation13], %s458
        %s460 = sand.u32 %s115, 1
        %s461 = smul.addr %s460, 4
        %s462 = scalar_lea.vmem [#allocation12], %s461
        // Predicated region
        $region65: #{tpu_custom_call.1} parent=51 // pred_check
          %p463 = pneg %p128
        $region66: #{tpu_custom_call.1} parent=51 // pred_check_branch
          %465 = sbr.rel (%p463) target = $region68
        $region67: #{tpu_custom_call.1} parent=51 // pred_region
          %466 = dma.done %s459, 64
        $region68: #{tpu_custom_call.1} parent=51 // pred_fallthru
          _
        %s467 = sand.u32 %s34, 1
        %s468 = scalar_lea.sflag [#allocation13], %s467
        %s469 = sand.u32 %s141, 1
        %s470 = smul.addr %s469, 8
        %s471 = scalar_lea.vmem [#allocation14], %s470
        // Predicated region
        $region69: #{tpu_custom_call.1} parent=51 // pred_check
          %p472 = pneg %p154
        $region70: #{tpu_custom_call.1} parent=51 // pred_check_branch
          %474 = sbr.rel (%p472) target = $region72
        $region71: #{tpu_custom_call.1} parent=51 // pred_region
          %475 = dma.done %s468, 128
        $region72: #{tpu_custom_call.1} parent=51 // pred_fallthru
          _
        // Predicated region
        $region73: #{tpu_custom_call.1} parent=51 // pred_check
          %p476 = pneg %p201
        $region74: #{tpu_custom_call.1} parent=51 // pred_check_branch
          %478 = sbr.rel (%p476) target = $region76
        $region75: #{tpu_custom_call.1} parent=51 // pred_region
          %479 = dma.done [#allocation16], 1024
        $region76: #{tpu_custom_call.1} parent=51 // pred_fallthru
          _
        %p480 = pneg %p50
        %p481 = pneg %p47
        %s482 = sand.u32 %s34, 1
        %s483 = scalar_lea.sflag [#allocation10], %s482
        %s484 = sand.u32 %s63, 1
        %s485 = smul.addr %s484, 256
        %s486 = scalar_lea.vmem [#allocation9], %s485
        %p487 = pneg %p76
        %p488 = pneg %p73
        %s489 = sand.u32 %s34, 1
        %s490 = scalar_lea.sflag [#allocation10], %s489
        %s491 = sand.u32 %s89, 1
        %s492 = smul.addr %s491, 256
        %s493 = scalar_lea.vmem [#allocation11], %s492
        %p494 = pneg %p102
        %p495 = pneg %p99
        %s496 = sand.u32 %s34, 1
        %s497 = scalar_lea.sflag [#allocation13], %s496
        %s498 = sand.u32 %s115, 1
        %s499 = smul.addr %s498, 4
        %s500 = scalar_lea.vmem [#allocation12], %s499
        %p501 = pneg %p128
        %p502 = pneg %p125
        %s503 = sand.u32 %s34, 1
        %s504 = scalar_lea.sflag [#allocation13], %s503
        %s505 = sand.u32 %s141, 1
        %s506 = smul.addr %s505, 8
        %s507 = scalar_lea.vmem [#allocation14], %s506
        %p508 = pneg %p154
        %p509 = pneg %p151
        %p510 = scmp.lt.s32.totalorder %s34, 1
        %s511 = scalar_select %p510, %s34, 1
        %s512 = smul.addr %s511, 8
        %s513 = scalar_lea.vmem %s5, %s512
        %p514 = pneg %p180
        %p515 = pneg %p177
        %p516 = pneg %p201
        %p517 = pneg %p198
        %p518 = pneg %p222
        %p519 = pneg %p219
        %p520 = pneg %p243
        %p521 = pneg %p240
        %p522 = pneg %p269
        %p523 = pneg %p266
        %s524 = sand.u32 %s34, 1
        %s525 = scalar_lea.sflag [#allocation19], %s524
        %s526 = sand.u32 %s256, 1
        %s527 = smul.addr %s526, 8
        %s528 = scalar_lea.vmem [#allocation18], %s527
        %p529 = pneg %p295
        %p530 = pneg %p292
        %s531 = sand.u32 %s34, 1
        %s532 = scalar_lea.sflag [#allocation19], %s531
        %s533 = sand.u32 %s282, 1
        %s534 = smul.addr %s533, 8
        %s535 = scalar_lea.vmem [#allocation20], %s534
        %p536 = scmp.lt.s32.totalorder %s34, 1
        %s537 = scalar_select %p536, %s34, 1
        %s538 = smul.addr %s537, 8
        %s539 = scalar_lea.vmem %s5, %s538
        %p541 = scmp.eq.s32.totalorder %s34, 0
        // Predicated region
        $region77: #{tpu_custom_call.1} parent=51 // pred_check
          %p542 = pneg %p541
        $region78: #{tpu_custom_call.1} parent=51 // pred_check_branch
          %544 = sbr.rel (%p542) target = $region80
        $region79: #{tpu_custom_call.1} parent=51 // pred_region
          %v545 = vld [vmem:[#allocation6] sm:$0xf]
          %v546 = vld [vmem:[#allocation6 + $0x4] sm:$0xf]
          %v547 = vld [vmem:[#allocation6 + $0x8] sm:$0xf]
          %v548 = vld [vmem:[#allocation6 + $0xc] sm:$0xf]
          %v549 = vld [vmem:[#allocation6 + $0x10] sm:$0xf]
          %v550 = vld [vmem:[#allocation6 + $0x14] sm:$0xf]
          %v551 = vld [vmem:[#allocation6 + $0x18] sm:$0xf]
          %v552 = vld [vmem:[#allocation6 + $0x1c] sm:$0xf]
          %v553 = vld [vmem:[%s444] sm:$0xff]
          %v554 = vld [vmem:[%s444 + $0x8] sm:$0xff]
          %v555 = vld [vmem:[%s444 + $0x10] sm:$0xff]
          %v556 = vld [vmem:[%s444 + $0x18] sm:$0xff]
          %v557 = vld [vmem:[%s444 + $0x20] sm:$0xff]
          %v558 = vld [vmem:[%s444 + $0x28] sm:$0xff]
          %v559 = vld [vmem:[%s444 + $0x30] sm:$0xff]
          %v560 = vld [vmem:[%s444 + $0x38] sm:$0xff]
          %v561 = vld [vmem:[%s444 + $0x40] sm:$0xff]
          %v562 = vld [vmem:[%s444 + $0x48] sm:$0xff]
          %v563 = vld [vmem:[%s444 + $0x50] sm:$0xff]
          %v564 = vld [vmem:[%s444 + $0x58] sm:$0xff]
          %v565 = vld [vmem:[%s444 + $0x60] sm:$0xff]
          %v566 = vld [vmem:[%s444 + $0x68] sm:$0xff]
          %v567 = vld [vmem:[%s444 + $0x70] sm:$0xff]
          %v568 = vld [vmem:[%s444 + $0x78] sm:$0xff]
          %v569 = vld [vmem:[%s444 + $0x80] sm:$0xff]
          %v570 = vld [vmem:[%s444 + $0x88] sm:$0xff]
          %v571 = vld [vmem:[%s444 + $0x90] sm:$0xff]
          %v572 = vld [vmem:[%s444 + $0x98] sm:$0xff]
          %v573 = vld [vmem:[%s444 + $0xa0] sm:$0xff]
          %v574 = vld [vmem:[%s444 + $0xa8] sm:$0xff]
          %v575 = vld [vmem:[%s444 + $0xb0] sm:$0xff]
          %v576 = vld [vmem:[%s444 + $0xb8] sm:$0xff]
          %v577 = vld [vmem:[%s444 + $0xc0] sm:$0xff]
          %v578 = vld [vmem:[%s444 + $0xc8] sm:$0xff]
          %v579 = vld [vmem:[%s444 + $0xd0] sm:$0xff]
          %v580 = vld [vmem:[%s444 + $0xd8] sm:$0xff]
          %v581 = vld [vmem:[%s444 + $0xe0] sm:$0xff]
          %v582 = vld [vmem:[%s444 + $0xe8] sm:$0xff]
          %v583 = vld [vmem:[%s444 + $0xf0] sm:$0xff]
          %v584 = vld [vmem:[%s444 + $0xf8] sm:$0xff]
          %v585 = vld [vmem:[%s462] sm:$0xf]
          %v587 = vlaneseq
          %v588 = vshrl.u32 %v587, 7
          %v589 = vsub.s32 0, %v588
          %v590 = vrot.slane %v585, %v589
          %v591 = vlaneseq
          %v592 = vshrl.u32 %v591, 7
          %v593 = vsub.s32 1, %v592
          %v594 = vrot.slane %v585, %v593
          %v595 = vlaneseq
          %v596 = vshrl.u32 %v595, 7
          %v597 = vsub.s32 2, %v596
          %v598 = vrot.slane %v585, %v597
          %v599 = vlaneseq
          %v600 = vshrl.u32 %v599, 7
          %v601 = vsub.s32 3, %v600
          %v602 = vrot.slane %v585, %v601
          %v615 = vunpack.c.l.b16 %v545
          %v616 = vunpack.c.l.b16 %v546
          %v617 = vunpack.c.l.b16 %v547
          %v618 = vunpack.c.l.b16 %v548
          %v619 = vunpack.c.l.b16 %v549
          %v620 = vunpack.c.l.b16 %v550
          %v621 = vunpack.c.l.b16 %v551
          %v622 = vunpack.c.l.b16 %v552
          %v623 = vpack.c.b16 %v616, %v615
          %v624 = vpack.c.b16 %v618, %v617
          %v625 = vpack.c.b16 %v620, %v619
          %v626 = vpack.c.b16 %v622, %v621
          %v663 = vunpack.c.l.b16 %v553
          %v664 = vunpack.c.h.b16 %v553
          %v665 = vunpack.c.l.b16 %v554
          %v666 = vunpack.c.h.b16 %v554
          %v667 = vunpack.c.l.b16 %v555
          %v668 = vunpack.c.h.b16 %v555
          %v669 = vunpack.c.l.b16 %v556
          %v670 = vunpack.c.h.b16 %v556
          %v671 = vunpack.c.l.b16 %v557
          %v672 = vunpack.c.h.b16 %v557
          %v673 = vunpack.c.l.b16 %v558
          %v674 = vunpack.c.h.b16 %v558
          %v675 = vunpack.c.l.b16 %v559
          %v676 = vunpack.c.h.b16 %v559
          %v677 = vunpack.c.l.b16 %v560
          %v678 = vunpack.c.h.b16 %v560
          %v679 = vunpack.c.l.b16 %v561
          %v680 = vunpack.c.h.b16 %v561
          %v681 = vunpack.c.l.b16 %v562
          %v682 = vunpack.c.h.b16 %v562
          %v683 = vunpack.c.l.b16 %v563
          %v684 = vunpack.c.h.b16 %v563
          %v685 = vunpack.c.l.b16 %v564
          %v686 = vunpack.c.h.b16 %v564
          %v687 = vunpack.c.l.b16 %v565
          %v688 = vunpack.c.h.b16 %v565
          %v689 = vunpack.c.l.b16 %v566
          %v690 = vunpack.c.h.b16 %v566
          %v691 = vunpack.c.l.b16 %v567
          %v692 = vunpack.c.h.b16 %v567
          %v693 = vunpack.c.l.b16 %v568
          %v694 = vunpack.c.h.b16 %v568
          %v695 = vunpack.c.l.b16 %v569
          %v696 = vunpack.c.h.b16 %v569
          %v697 = vunpack.c.l.b16 %v570
          %v698 = vunpack.c.h.b16 %v570
          %v699 = vunpack.c.l.b16 %v571
          %v700 = vunpack.c.h.b16 %v571
          %v701 = vunpack.c.l.b16 %v572
          %v702 = vunpack.c.h.b16 %v572
          %v703 = vunpack.c.l.b16 %v573
          %v704 = vunpack.c.h.b16 %v573
          %v705 = vunpack.c.l.b16 %v574
          %v706 = vunpack.c.h.b16 %v574
          %v707 = vunpack.c.l.b16 %v575
          %v708 = vunpack.c.h.b16 %v575
          %v709 = vunpack.c.l.b16 %v576
          %v710 = vunpack.c.h.b16 %v576
          %v711 = vunpack.c.l.b16 %v577
          %v712 = vunpack.c.h.b16 %v577
          %v713 = vunpack.c.l.b16 %v578
          %v714 = vunpack.c.h.b16 %v578
          %v715 = vunpack.c.l.b16 %v579
          %v716 = vunpack.c.h.b16 %v579
          %v717 = vunpack.c.l.b16 %v580
          %v718 = vunpack.c.h.b16 %v580
          %v719 = vunpack.c.l.b16 %v581
          %v720 = vunpack.c.h.b16 %v581
          %v721 = vunpack.c.l.b16 %v582
          %v722 = vunpack.c.h.b16 %v582
          %v723 = vunpack.c.l.b16 %v583
          %v724 = vunpack.c.h.b16 %v583
          %v725 = vunpack.c.l.b16 %v584
          %v726 = vunpack.c.h.b16 %v584
          %v727 = vpack.c.b16 %v667, %v663
          %v728 = vpack.c.b16 %v668, %v664
          %v729 = vpack.c.b16 %v669, %v665
          %v730 = vpack.c.b16 %v670, %v666
          %v731 = vpack.c.b16 %v675, %v671
          %v732 = vpack.c.b16 %v676, %v672
          %v733 = vpack.c.b16 %v677, %v673
          %v734 = vpack.c.b16 %v678, %v674
          %v735 = vpack.c.b16 %v683, %v679
          %v736 = vpack.c.b16 %v684, %v680
          %v737 = vpack.c.b16 %v685, %v681
          %v738 = vpack.c.b16 %v686, %v682
          %v739 = vpack.c.b16 %v691, %v687
          %v740 = vpack.c.b16 %v692, %v688
          %v741 = vpack.c.b16 %v693, %v689
          %v742 = vpack.c.b16 %v694, %v690
          %v743 = vpack.c.b16 %v699, %v695
          %v744 = vpack.c.b16 %v700, %v696
          %v745 = vpack.c.b16 %v701, %v697
          %v746 = vpack.c.b16 %v702, %v698
          %v747 = vpack.c.b16 %v707, %v703
          %v748 = vpack.c.b16 %v708, %v704
          %v749 = vpack.c.b16 %v709, %v705
          %v750 = vpack.c.b16 %v710, %v706
          %v751 = vpack.c.b16 %v715, %v711
          %v752 = vpack.c.b16 %v716, %v712
          %v753 = vpack.c.b16 %v717, %v713
          %v754 = vpack.c.b16 %v718, %v714
          %v755 = vpack.c.b16 %v723, %v719
          %v756 = vpack.c.b16 %v724, %v720
          %v757 = vpack.c.b16 %v725, %v721
          %v758 = vpack.c.b16 %v726, %v722
          %791 = vmatprep.subr.bf16.mxu0 %v728
          %792 = vmatpush1.bf16.msra.mxu0 %v727
          %793 = vmatprep.subr.bf16.mxu0 %v732
          %794 = vmatpush1.bf16.msra.mxu0 %v731
          %795 = vmatprep.subr.bf16.mxu0 %v736
          %796 = vmatpush1.bf16.msra.mxu0 %v735
          %797 = vmatprep.subr.bf16.mxu0 %v740
          %798 = vmatpush1.bf16.msra.mxu0 %v739
          %799 = vmatprep.subr.bf16.mxu0 %v744
          %800 = vmatpush1.bf16.msra.mxu0 %v743
          %801 = vmatprep.subr.bf16.mxu0 %v748
          %802 = vmatpush1.bf16.msra.mxu0 %v747
          %803 = vmatprep.subr.bf16.mxu0 %v752
          %804 = vmatpush1.bf16.msra.mxu0 %v751
          %805 = vmatprep.subr.bf16.mxu0 %v756
          %806 = vmatpush1.bf16.msra.mxu0 %v755
          %807 = vmatprep.subr.bf16.mxu0 0
          %808 = vmatpush1.bf16.msra.mxu0 0
          %809 = vmatprep.subr.bf16.mxu0 0
          %810 = vmatpush1.bf16.msra.mxu0 0
          %811 = vmatprep.subr.bf16.mxu0 0
          %812 = vmatpush1.bf16.msra.mxu0 0
          %813 = vmatprep.subr.bf16.mxu0 0
          %814 = vmatpush1.bf16.msra.mxu0 0
          %815 = vmatprep.subr.bf16.mxu0 0
          %816 = vmatpush1.bf16.msra.mxu0 0
          %817 = vmatprep.subr.bf16.mxu0 0
          %818 = vmatpush1.bf16.msra.mxu0 0
          %819 = vmatprep.subr.bf16.mxu0 0
          %820 = vmatpush1.bf16.msra.mxu0 0
          %821 = vmatprep.subr.bf16.mxu0 0
          %822 = vmatpush1.bf16.msra.mxu0 0
          %823 = vmatprep.mubr.bf16.mxu0 0
          %824 = vmatmul.mubr.bf16.gmra.mrb[0].mxu0 %v623
          %v825 = vpop.f32.mrb[0].mxu0
          %v826 = vadd.f32 %v590, %v825
          %v827 = vpop.f32.mrb[0].mxu0
          %v828 = vadd.f32 %v594, %v827
          %v829 = vpop.f32.mrb[0].mxu0
          %v830 = vadd.f32 %v590, %v829
          %v831 = vpop.f32.mrb[0].mxu0
          %v832 = vadd.f32 %v594, %v831
          %833 = vmatprep.mubr.bf16.mxu0 0
          %834 = vmatmul.mubr.bf16.gmra.mrb[0].mxu0 %v624
          %v835 = vpop.f32.mrb[0].mxu0
          %v836 = vadd.f32 %v590, %v835
          %v837 = vpop.f32.mrb[0].mxu0
          %v838 = vadd.f32 %v594, %v837
          %v839 = vpop.f32.mrb[0].mxu0
          %v840 = vadd.f32 %v590, %v839
          %v841 = vpop.f32.mrb[0].mxu0
          %v842 = vadd.f32 %v594, %v841
          %843 = vmatprep.mubr.bf16.mxu0 0
          %844 = vmatmul.mubr.bf16.gmra.mrb[0].mxu0 %v625
          %v845 = vpop.f32.mrb[0].mxu0
          %v846 = vadd.f32 %v590, %v845
          %v847 = vpop.f32.mrb[0].mxu0
          %v848 = vadd.f32 %v594, %v847
          %v849 = vpop.f32.mrb[0].mxu0
          %v850 = vadd.f32 %v590, %v849
          %v851 = vpop.f32.mrb[0].mxu0
          %v852 = vadd.f32 %v594, %v851
          %853 = vmatprep.mubr.bf16.mxu0 0
          %854 = vmatmul.mubr.bf16.gmra.mrb[0].mxu0 %v626
          %v855 = vpop.f32.mrb[0].mxu0
          %v856 = vadd.f32 %v590, %v855
          %v857 = vpop.f32.mrb[0].mxu0
          %v858 = vadd.f32 %v594, %v857
          %v859 = vpop.f32.mrb[0].mxu0
          %v860 = vadd.f32 %v590, %v859
          %v861 = vpop.f32.mrb[0].mxu0
          %v862 = vadd.f32 %v594, %v861
          %863 = vdwg.mxu0
          %864 = vmatprep.subr.bf16.mxu0 %v730
          %865 = vmatpush1.bf16.msra.mxu0 %v729
          %866 = vmatprep.subr.bf16.mxu0 %v734
          %867 = vmatpush1.bf16.msra.mxu0 %v733
          %868 = vmatprep.subr.bf16.mxu0 %v738
          %869 = vmatpush1.bf16.msra.mxu0 %v737
          %870 = vmatprep.subr.bf16.mxu0 %v742
          %871 = vmatpush1.bf16.msra.mxu0 %v741
          %872 = vmatprep.subr.bf16.mxu0 %v746
          %873 = vmatpush1.bf16.msra.mxu0 %v745
          %874 = vmatprep.subr.bf16.mxu0 %v750
          %875 = vmatpush1.bf16.msra.mxu0 %v749
          %876 = vmatprep.subr.bf16.mxu0 %v754
          %877 = vmatpush1.bf16.msra.mxu0 %v753
          %878 = vmatprep.subr.bf16.mxu0 %v758
          %879 = vmatpush1.bf16.msra.mxu0 %v757
          %880 = vmatprep.subr.bf16.mxu0 0
          %881 = vmatpush1.bf16.msra.mxu0 0
          %882 = vmatprep.subr.bf16.mxu0 0
          %883 = vmatpush1.bf16.msra.mxu0 0
          %884 = vmatprep.subr.bf16.mxu0 0
          %885 = vmatpush1.bf16.msra.mxu0 0
          %886 = vmatprep.subr.bf16.mxu0 0
          %887 = vmatpush1.bf16.msra.mxu0 0
          %888 = vmatprep.subr.bf16.mxu0 0
          %889 = vmatpush1.bf16.msra.mxu0 0
          %890 = vmatprep.subr.bf16.mxu0 0
          %891 = vmatpush1.bf16.msra.mxu0 0
          %892 = vmatprep.subr.bf16.mxu0 0
          %893 = vmatpush1.bf16.msra.mxu0 0
          %894 = vmatprep.subr.bf16.mxu0 0
          %895 = vmatpush1.bf16.msra.mxu0 0
          %896 = vmatprep.mubr.bf16.mxu0 0
          %897 = vmatmul.mubr.bf16.gmra.mrb[0].mxu0 %v623
          %v898 = vpop.f32.mrb[0].mxu0
          %v899 = vadd.f32 %v598, %v898
          %v900 = vpop.f32.mrb[0].mxu0
          %v901 = vadd.f32 %v602, %v900
          %v902 = vpop.f32.mrb[0].mxu0
          %v903 = vadd.f32 %v598, %v902
          %v904 = vpop.f32.mrb[0].mxu0
          %v905 = vadd.f32 %v602, %v904
          %906 = vmatprep.mubr.bf16.mxu0 0
          %907 = vmatmul.mubr.bf16.gmra.mrb[0].mxu0 %v624
          %v908 = vpop.f32.mrb[0].mxu0
          %v909 = vadd.f32 %v598, %v908
          %v910 = vpop.f32.mrb[0].mxu0
          %v911 = vadd.f32 %v602, %v910
          %v912 = vpop.f32.mrb[0].mxu0
          %v913 = vadd.f32 %v598, %v912
          %v914 = vpop.f32.mrb[0].mxu0
          %v915 = vadd.f32 %v602, %v914
          %916 = vmatprep.mubr.bf16.mxu0 0
          %917 = vmatmul.mubr.bf16.gmra.mrb[0].mxu0 %v625
          %v918 = vpop.f32.mrb[0].mxu0
          %v919 = vadd.f32 %v598, %v918
          %v920 = vpop.f32.mrb[0].mxu0
          %v921 = vadd.f32 %v602, %v920
          %v922 = vpop.f32.mrb[0].mxu0
          %v923 = vadd.f32 %v598, %v922
          %v924 = vpop.f32.mrb[0].mxu0
          %v925 = vadd.f32 %v602, %v924
          %926 = vmatprep.mubr.bf16.mxu0 0
          %927 = vmatmul.mubr.bf16.gmra.mrb[0].mxu0 %v626
          %v928 = vpop.f32.mrb[0].mxu0
          %v929 = vadd.f32 %v598, %v928
          %v930 = vpop.f32.mrb[0].mxu0
          %v931 = vadd.f32 %v602, %v930
          %v932 = vpop.f32.mrb[0].mxu0
          %v933 = vadd.f32 %v598, %v932
          %v934 = vpop.f32.mrb[0].mxu0
          %v935 = vadd.f32 %v602, %v934
          %936 = vdwg.mxu0
          %937 = vst [vmem:[#allocation3] sm:$0xff] %v826
          %938 = vst [vmem:[#allocation3 + $0x8] sm:$0xff] %v828
          %939 = vst [vmem:[#allocation3 + $0x10] sm:$0xff] %v899
          %940 = vst [vmem:[#allocation3 + $0x18] sm:$0xff] %v901
          %941 = vst [vmem:[#allocation3 + $0x20] sm:$0xff] %v830
          %942 = vst [vmem:[#allocation3 + $0x28] sm:$0xff] %v832
          %943 = vst [vmem:[#allocation3 + $0x30] sm:$0xff] %v903
          %944 = vst [vmem:[#allocation3 + $0x38] sm:$0xff] %v905
          %945 = vst [vmem:[#allocation3 + $0x40] sm:$0xff] %v836
          %946 = vst [vmem:[#allocation3 + $0x48] sm:$0xff] %v838
          %947 = vst [vmem:[#allocation3 + $0x50] sm:$0xff] %v909
          %948 = vst [vmem:[#allocation3 + $0x58] sm:$0xff] %v911
          %949 = vst [vmem:[#allocation3 + $0x60] sm:$0xff] %v840
          %950 = vst [vmem:[#allocation3 + $0x68] sm:$0xff] %v842
          %951 = vst [vmem:[#allocation3 + $0x70] sm:$0xff] %v913
          %952 = vst [vmem:[#allocation3 + $0x78] sm:$0xff] %v915
          %953 = vst [vmem:[#allocation3 + $0x80] sm:$0xff] %v846
          %954 = vst [vmem:[#allocation3 + $0x88] sm:$0xff] %v848
          %955 = vst [vmem:[#allocation3 + $0x90] sm:$0xff] %v919
          %956 = vst [vmem:[#allocation3 + $0x98] sm:$0xff] %v921
          %957 = vst [vmem:[#allocation3 + $0xa0] sm:$0xff] %v850
          %958 = vst [vmem:[#allocation3 + $0xa8] sm:$0xff] %v852
          %959 = vst [vmem:[#allocation3 + $0xb0] sm:$0xff] %v923
          %960 = vst [vmem:[#allocation3 + $0xb8] sm:$0xff] %v925
          %961 = vst [vmem:[#allocation3 + $0xc0] sm:$0xff] %v856
          %962 = vst [vmem:[#allocation3 + $0xc8] sm:$0xff] %v858
          %963 = vst [vmem:[#allocation3 + $0xd0] sm:$0xff] %v929
          %964 = vst [vmem:[#allocation3 + $0xd8] sm:$0xff] %v931
          %965 = vst [vmem:[#allocation3 + $0xe0] sm:$0xff] %v860
          %966 = vst [vmem:[#allocation3 + $0xe8] sm:$0xff] %v862
          %967 = vst [vmem:[#allocation3 + $0xf0] sm:$0xff] %v933
          %968 = vst [vmem:[#allocation3 + $0xf8] sm:$0xff] %v935
        $region80: #{tpu_custom_call.1} parent=51 // pred_fallthru
          _
        %p969 = scmp.gt.s32.totalorder %s34, 0
        // Predicated region
        $region81: #{tpu_custom_call.1} parent=51 // pred_check
          %p970 = pneg %p969
        $region82: #{tpu_custom_call.1} parent=51 // pred_check_branch
          %972 = sbr.rel (%p970) target = $region84
        $region83: #{tpu_custom_call.1} parent=51 // pred_region
          %v973 = vld [vmem:[#allocation2] sm:$0xff]
          %v974 = vld [vmem:[#allocation2 + $0x8] sm:$0xff]
          %v975 = vld [vmem:[#allocation2 + $0x10] sm:$0xff]
          %v976 = vld [vmem:[#allocation2 + $0x18] sm:$0xff]
          %v977 = vld [vmem:[#allocation2 + $0x20] sm:$0xff]
          %v978 = vld [vmem:[#allocation2 + $0x28] sm:$0xff]
          %v979 = vld [vmem:[#allocation2 + $0x30] sm:$0xff]
          %v980 = vld [vmem:[#allocation2 + $0x38] sm:$0xff]
          %v981 = vpack.c.bf16 %v974, %v973
          %v982 = vpack.c.bf16 %v976, %v975
          %v983 = vpack.c.bf16 %v978, %v977
          %v984 = vpack.c.bf16 %v980, %v979
          %v985 = vld [vmem:[%s444] sm:$0xff]
          %v986 = vld [vmem:[%s444 + $0x8] sm:$0xff]
          %v987 = vld [vmem:[%s444 + $0x10] sm:$0xff]
          %v988 = vld [vmem:[%s444 + $0x18] sm:$0xff]
          %v989 = vld [vmem:[%s444 + $0x20] sm:$0xff]
          %v990 = vld [vmem:[%s444 + $0x28] sm:$0xff]
          %v991 = vld [vmem:[%s444 + $0x30] sm:$0xff]
          %v992 = vld [vmem:[%s444 + $0x38] sm:$0xff]
          %v993 = vld [vmem:[%s444 + $0x40] sm:$0xff]
          %v994 = vld [vmem:[%s444 + $0x48] sm:$0xff]
          %v995 = vld [vmem:[%s444 + $0x50] sm:$0xff]
          %v996 = vld [vmem:[%s444 + $0x58] sm:$0xff]
          %v997 = vld [vmem:[%s444 + $0x60] sm:$0xff]
          %v998 = vld [vmem:[%s444 + $0x68] sm:$0xff]
          %v999 = vld [vmem:[%s444 + $0x70] sm:$0xff]
          %v1000 = vld [vmem:[%s444 + $0x78] sm:$0xff]
          %v1001 = vld [vmem:[%s444 + $0x80] sm:$0xff]
          %v1002 = vld [vmem:[%s444 + $0x88] sm:$0xff]
          %v1003 = vld [vmem:[%s444 + $0x90] sm:$0xff]
          %v1004 = vld [vmem:[%s444 + $0x98] sm:$0xff]
          %v1005 = vld [vmem:[%s444 + $0xa0] sm:$0xff]
          %v1006 = vld [vmem:[%s444 + $0xa8] sm:$0xff]
          %v1007 = vld [vmem:[%s444 + $0xb0] sm:$0xff]
          %v1008 = vld [vmem:[%s444 + $0xb8] sm:$0xff]
          %v1009 = vld [vmem:[%s444 + $0xc0] sm:$0xff]
          %v1010 = vld [vmem:[%s444 + $0xc8] sm:$0xff]
          %v1011 = vld [vmem:[%s444 + $0xd0] sm:$0xff]
          %v1012 = vld [vmem:[%s444 + $0xd8] sm:$0xff]
          %v1013 = vld [vmem:[%s444 + $0xe0] sm:$0xff]
          %v1014 = vld [vmem:[%s444 + $0xe8] sm:$0xff]
          %v1015 = vld [vmem:[%s444 + $0xf0] sm:$0xff]
          %v1016 = vld [vmem:[%s444 + $0xf8] sm:$0xff]
          %v1017 = vld [vmem:[%s462] sm:$0xf]
          %v1019 = vlaneseq
          %v1020 = vshrl.u32 %v1019, 7
          %v1021 = vsub.s32 0, %v1020
          %v1022 = vrot.slane %v1017, %v1021
          %v1023 = vlaneseq
          %v1024 = vshrl.u32 %v1023, 7
          %v1025 = vsub.s32 1, %v1024
          %v1026 = vrot.slane %v1017, %v1025
          %v1027 = vlaneseq
          %v1028 = vshrl.u32 %v1027, 7
          %v1029 = vsub.s32 2, %v1028
          %v1030 = vrot.slane %v1017, %v1029
          %v1031 = vlaneseq
          %v1032 = vshrl.u32 %v1031, 7
          %v1033 = vsub.s32 3, %v1032
          %v1034 = vrot.slane %v1017, %v1033
          %v1071 = vunpack.c.l.b16 %v985
          %v1072 = vunpack.c.h.b16 %v985
          %v1073 = vunpack.c.l.b16 %v986
          %v1074 = vunpack.c.h.b16 %v986
          %v1075 = vunpack.c.l.b16 %v987
          %v1076 = vunpack.c.h.b16 %v987
          %v1077 = vunpack.c.l.b16 %v988
          %v1078 = vunpack.c.h.b16 %v988
          %v1079 = vunpack.c.l.b16 %v989
          %v1080 = vunpack.c.h.b16 %v989
          %v1081 = vunpack.c.l.b16 %v990
          %v1082 = vunpack.c.h.b16 %v990
          %v1083 = vunpack.c.l.b16 %v991
          %v1084 = vunpack.c.h.b16 %v991
          %v1085 = vunpack.c.l.b16 %v992
          %v1086 = vunpack.c.h.b16 %v992
          %v1087 = vunpack.c.l.b16 %v993
          %v1088 = vunpack.c.h.b16 %v993
          %v1089 = vunpack.c.l.b16 %v994
          %v1090 = vunpack.c.h.b16 %v994
          %v1091 = vunpack.c.l.b16 %v995
          %v1092 = vunpack.c.h.b16 %v995
          %v1093 = vunpack.c.l.b16 %v996
          %v1094 = vunpack.c.h.b16 %v996
          %v1095 = vunpack.c.l.b16 %v997
          %v1096 = vunpack.c.h.b16 %v997
          %v1097 = vunpack.c.l.b16 %v998
          %v1098 = vunpack.c.h.b16 %v998
          %v1099 = vunpack.c.l.b16 %v999
          %v1100 = vunpack.c.h.b16 %v999
          %v1101 = vunpack.c.l.b16 %v1000
          %v1102 = vunpack.c.h.b16 %v1000
          %v1103 = vunpack.c.l.b16 %v1001
          %v1104 = vunpack.c.h.b16 %v1001
          %v1105 = vunpack.c.l.b16 %v1002
          %v1106 = vunpack.c.h.b16 %v1002
          %v1107 = vunpack.c.l.b16 %v1003
          %v1108 = vunpack.c.h.b16 %v1003
          %v1109 = vunpack.c.l.b16 %v1004
          %v1110 = vunpack.c.h.b16 %v1004
          %v1111 = vunpack.c.l.b16 %v1005
          %v1112 = vunpack.c.h.b16 %v1005
          %v1113 = vunpack.c.l.b16 %v1006
          %v1114 = vunpack.c.h.b16 %v1006
          %v1115 = vunpack.c.l.b16 %v1007
          %v1116 = vunpack.c.h.b16 %v1007
          %v1117 = vunpack.c.l.b16 %v1008
          %v1118 = vunpack.c.h.b16 %v1008
          %v1119 = vunpack.c.l.b16 %v1009
          %v1120 = vunpack.c.h.b16 %v1009
          %v1121 = vunpack.c.l.b16 %v1010
          %v1122 = vunpack.c.h.b16 %v1010
          %v1123 = vunpack.c.l.b16 %v1011
          %v1124 = vunpack.c.h.b16 %v1011
          %v1125 = vunpack.c.l.b16 %v1012
          %v1126 = vunpack.c.h.b16 %v1012
          %v1127 = vunpack.c.l.b16 %v1013
          %v1128 = vunpack.c.h.b16 %v1013
          %v1129 = vunpack.c.l.b16 %v1014
          %v1130 = vunpack.c.h.b16 %v1014
          %v1131 = vunpack.c.l.b16 %v1015
          %v1132 = vunpack.c.h.b16 %v1015
          %v1133 = vunpack.c.l.b16 %v1016
          %v1134 = vunpack.c.h.b16 %v1016
          %v1135 = vpack.c.b16 %v1075, %v1071
          %v1136 = vpack.c.b16 %v1076, %v1072
          %v1137 = vpack.c.b16 %v1077, %v1073
          %v1138 = vpack.c.b16 %v1078, %v1074
          %v1139 = vpack.c.b16 %v1083, %v1079
          %v1140 = vpack.c.b16 %v1084, %v1080
          %v1141 = vpack.c.b16 %v1085, %v1081
          %v1142 = vpack.c.b16 %v1086, %v1082
          %v1143 = vpack.c.b16 %v1091, %v1087
          %v1144 = vpack.c.b16 %v1092, %v1088
          %v1145 = vpack.c.b16 %v1093, %v1089
          %v1146 = vpack.c.b16 %v1094, %v1090
          %v1147 = vpack.c.b16 %v1099, %v1095
          %v1148 = vpack.c.b16 %v1100, %v1096
          %v1149 = vpack.c.b16 %v1101, %v1097
          %v1150 = vpack.c.b16 %v1102, %v1098
          %v1151 = vpack.c.b16 %v1107, %v1103
          %v1152 = vpack.c.b16 %v1108, %v1104
          %v1153 = vpack.c.b16 %v1109, %v1105
          %v1154 = vpack.c.b16 %v1110, %v1106
          %v1155 = vpack.c.b16 %v1115, %v1111
          %v1156 = vpack.c.b16 %v1116, %v1112
          %v1157 = vpack.c.b16 %v1117, %v1113
          %v1158 = vpack.c.b16 %v1118, %v1114
          %v1159 = vpack.c.b16 %v1123, %v1119
          %v1160 = vpack.c.b16 %v1124, %v1120
          %v1161 = vpack.c.b16 %v1125, %v1121
          %v1162 = vpack.c.b16 %v1126, %v1122
          %v1163 = vpack.c.b16 %v1131, %v1127
          %v1164 = vpack.c.b16 %v1132, %v1128
          %v1165 = vpack.c.b16 %v1133, %v1129
          %v1166 = vpack.c.b16 %v1134, %v1130
          %1199 = vmatprep.subr.bf16.mxu0 %v1136
          %1200 = vmatpush1.bf16.msra.mxu0 %v1135
          %1201 = vmatprep.subr.bf16.mxu0 %v1140
          %1202 = vmatpush1.bf16.msra.mxu0 %v1139
          %1203 = vmatprep.subr.bf16.mxu0 %v1144
          %1204 = vmatpush1.bf16.msra.mxu0 %v1143
          %1205 = vmatprep.subr.bf16.mxu0 %v1148
          %1206 = vmatpush1.bf16.msra.mxu0 %v1147
          %1207 = vmatprep.subr.bf16.mxu0 %v1152
          %1208 = vmatpush1.bf16.msra.mxu0 %v1151
          %1209 = vmatprep.subr.bf16.mxu0 %v1156
          %1210 = vmatpush1.bf16.msra.mxu0 %v1155
          %1211 = vmatprep.subr.bf16.mxu0 %v1160
          %1212 = vmatpush1.bf16.msra.mxu0 %v1159
          %1213 = vmatprep.subr.bf16.mxu0 %v1164
          %1214 = vmatpush1.bf16.msra.mxu0 %v1163
          %1215 = vmatprep.subr.bf16.mxu0 0
          %1216 = vmatpush1.bf16.msra.mxu0 0
          %1217 = vmatprep.subr.bf16.mxu0 0
          %1218 = vmatpush1.bf16.msra.mxu0 0
          %1219 = vmatprep.subr.bf16.mxu0 0
          %1220 = vmatpush1.bf16.msra.mxu0 0
          %1221 = vmatprep.subr.bf16.mxu0 0
          %1222 = vmatpush1.bf16.msra.mxu0 0
          %1223 = vmatprep.subr.bf16.mxu0 0
          %1224 = vmatpush1.bf16.msra.mxu0 0
          %1225 = vmatprep.subr.bf16.mxu0 0
          %1226 = vmatpush1.bf16.msra.mxu0 0
          %1227 = vmatprep.subr.bf16.mxu0 0
          %1228 = vmatpush1.bf16.msra.mxu0 0
          %1229 = vmatprep.subr.bf16.mxu0 0
          %1230 = vmatpush1.bf16.msra.mxu0 0
          %1231 = vmatprep.mubr.bf16.mxu0 0
          %1232 = vmatmul.mubr.bf16.gmra.mrb[0].mxu0 %v981
          %v1233 = vpop.f32.mrb[0].mxu0
          %v1234 = vadd.f32 %v1022, %v1233
          %v1235 = vpop.f32.mrb[0].mxu0
          %v1236 = vadd.f32 %v1026, %v1235
          %v1237 = vpop.f32.mrb[0].mxu0
          %v1238 = vadd.f32 %v1022, %v1237
          %v1239 = vpop.f32.mrb[0].mxu0
          %v1240 = vadd.f32 %v1026, %v1239
          %1241 = vmatprep.mubr.bf16.mxu0 0
          %1242 = vmatmul.mubr.bf16.gmra.mrb[0].mxu0 %v982
          %v1243 = vpop.f32.mrb[0].mxu0
          %v1244 = vadd.f32 %v1022, %v1243
          %v1245 = vpop.f32.mrb[0].mxu0
          %v1246 = vadd.f32 %v1026, %v1245
          %v1247 = vpop.f32.mrb[0].mxu0
          %v1248 = vadd.f32 %v1022, %v1247
          %v1249 = vpop.f32.mrb[0].mxu0
          %v1250 = vadd.f32 %v1026, %v1249
          %1251 = vmatprep.mubr.bf16.mxu0 0
          %1252 = vmatmul.mubr.bf16.gmra.mrb[0].mxu0 %v983
          %v1253 = vpop.f32.mrb[0].mxu0
          %v1254 = vadd.f32 %v1022, %v1253
          %v1255 = vpop.f32.mrb[0].mxu0
          %v1256 = vadd.f32 %v1026, %v1255
          %v1257 = vpop.f32.mrb[0].mxu0
          %v1258 = vadd.f32 %v1022, %v1257
          %v1259 = vpop.f32.mrb[0].mxu0
          %v1260 = vadd.f32 %v1026, %v1259
          %1261 = vmatprep.mubr.bf16.mxu0 0
          %1262 = vmatmul.mubr.bf16.gmra.mrb[0].mxu0 %v984
          %v1263 = vpop.f32.mrb[0].mxu0
          %v1264 = vadd.f32 %v1022, %v1263
          %v1265 = vpop.f32.mrb[0].mxu0
          %v1266 = vadd.f32 %v1026, %v1265
          %v1267 = vpop.f32.mrb[0].mxu0
          %v1268 = vadd.f32 %v1022, %v1267
          %v1269 = vpop.f32.mrb[0].mxu0
          %v1270 = vadd.f32 %v1026, %v1269
          %1271 = vdwg.mxu0
          %1272 = vmatprep.subr.bf16.mxu0 %v1138
          %1273 = vmatpush1.bf16.msra.mxu0 %v1137
          %1274 = vmatprep.subr.bf16.mxu0 %v1142
          %1275 = vmatpush1.bf16.msra.mxu0 %v1141
          %1276 = vmatprep.subr.bf16.mxu0 %v1146
          %1277 = vmatpush1.bf16.msra.mxu0 %v1145
          %1278 = vmatprep.subr.bf16.mxu0 %v1150
          %1279 = vmatpush1.bf16.msra.mxu0 %v1149
          %1280 = vmatprep.subr.bf16.mxu0 %v1154
          %1281 = vmatpush1.bf16.msra.mxu0 %v1153
          %1282 = vmatprep.subr.bf16.mxu0 %v1158
          %1283 = vmatpush1.bf16.msra.mxu0 %v1157
          %1284 = vmatprep.subr.bf16.mxu0 %v1162
          %1285 = vmatpush1.bf16.msra.mxu0 %v1161
          %1286 = vmatprep.subr.bf16.mxu0 %v1166
          %1287 = vmatpush1.bf16.msra.mxu0 %v1165
          %1288 = vmatprep.subr.bf16.mxu0 0
          %1289 = vmatpush1.bf16.msra.mxu0 0
          %1290 = vmatprep.subr.bf16.mxu0 0
          %1291 = vmatpush1.bf16.msra.mxu0 0
          %1292 = vmatprep.subr.bf16.mxu0 0
          %1293 = vmatpush1.bf16.msra.mxu0 0
          %1294 = vmatprep.subr.bf16.mxu0 0
          %1295 = vmatpush1.bf16.msra.mxu0 0
          %1296 = vmatprep.subr.bf16.mxu0 0
          %1297 = vmatpush1.bf16.msra.mxu0 0
          %1298 = vmatprep.subr.bf16.mxu0 0
          %1299 = vmatpush1.bf16.msra.mxu0 0
          %1300 = vmatprep.subr.bf16.mxu0 0
          %1301 = vmatpush1.bf16.msra.mxu0 0
          %1302 = vmatprep.subr.bf16.mxu0 0
          %1303 = vmatpush1.bf16.msra.mxu0 0
          %1304 = vmatprep.mubr.bf16.mxu0 0
          %1305 = vmatmul.mubr.bf16.gmra.mrb[0].mxu0 %v981
          %v1306 = vpop.f32.mrb[0].mxu0
          %v1307 = vadd.f32 %v1030, %v1306
          %v1308 = vpop.f32.mrb[0].mxu0
          %v1309 = vadd.f32 %v1034, %v1308
          %v1310 = vpop.f32.mrb[0].mxu0
          %v1311 = vadd.f32 %v1030, %v1310
          %v1312 = vpop.f32.mrb[0].mxu0
          %v1313 = vadd.f32 %v1034, %v1312
          %1314 = vmatprep.mubr.bf16.mxu0 0
          %1315 = vmatmul.mubr.bf16.gmra.mrb[0].mxu0 %v982
          %v1316 = vpop.f32.mrb[0].mxu0
          %v1317 = vadd.f32 %v1030, %v1316
          %v1318 = vpop.f32.mrb[0].mxu0
          %v1319 = vadd.f32 %v1034, %v1318
          %v1320 = vpop.f32.mrb[0].mxu0
          %v1321 = vadd.f32 %v1030, %v1320
          %v1322 = vpop.f32.mrb[0].mxu0
          %v1323 = vadd.f32 %v1034, %v1322
          %1324 = vmatprep.mubr.bf16.mxu0 0
          %1325 = vmatmul.mubr.bf16.gmra.mrb[0].mxu0 %v983
          %v1326 = vpop.f32.mrb[0].mxu0
          %v1327 = vadd.f32 %v1030, %v1326
          %v1328 = vpop.f32.mrb[0].mxu0
          %v1329 = vadd.f32 %v1034, %v1328
          %v1330 = vpop.f32.mrb[0].mxu0
          %v1331 = vadd.f32 %v1030, %v1330
          %v1332 = vpop.f32.mrb[0].mxu0
          %v1333 = vadd.f32 %v1034, %v1332
          %1334 = vmatprep.mubr.bf16.mxu0 0
          %1335 = vmatmul.mubr.bf16.gmra.mrb[0].mxu0 %v984
          %v1336 = vpop.f32.mrb[0].mxu0
          %v1337 = vadd.f32 %v1030, %v1336
          %v1338 = vpop.f32.mrb[0].mxu0
          %v1339 = vadd.f32 %v1034, %v1338
          %v1340 = vpop.f32.mrb[0].mxu0
          %v1341 = vadd.f32 %v1030, %v1340
          %v1342 = vpop.f32.mrb[0].mxu0
          %v1343 = vadd.f32 %v1034, %v1342
          %1344 = vdwg.mxu0
          %1345 = vst [vmem:[#allocation3] sm:$0xff] %v1234
          %1346 = vst [vmem:[#allocation3 + $0x8] sm:$0xff] %v1236
          %1347 = vst [vmem:[#allocation3 + $0x10] sm:$0xff] %v1307
          %1348 = vst [vmem:[#allocation3 + $0x18] sm:$0xff] %v1309
          %1349 = vst [vmem:[#allocation3 + $0x20] sm:$0xff] %v1238
          %1350 = vst [vmem:[#allocation3 + $0x28] sm:$0xff] %v1240
          %1351 = vst [vmem:[#allocation3 + $0x30] sm:$0xff] %v1311
          %1352 = vst [vmem:[#allocation3 + $0x38] sm:$0xff] %v1313
          %1353 = vst [vmem:[#allocation3 + $0x40] sm:$0xff] %v1244
          %1354 = vst [vmem:[#allocation3 + $0x48] sm:$0xff] %v1246
          %1355 = vst [vmem:[#allocation3 + $0x50] sm:$0xff] %v1317
          %1356 = vst [vmem:[#allocation3 + $0x58] sm:$0xff] %v1319
          %1357 = vst [vmem:[#allocation3 + $0x60] sm:$0xff] %v1248
          %1358 = vst [vmem:[#allocation3 + $0x68] sm:$0xff] %v1250
          %1359 = vst [vmem:[#allocation3 + $0x70] sm:$0xff] %v1321
          %1360 = vst [vmem:[#allocation3 + $0x78] sm:$0xff] %v1323
          %1361 = vst [vmem:[#allocation3 + $0x80] sm:$0xff] %v1254
          %1362 = vst [vmem:[#allocation3 + $0x88] sm:$0xff] %v1256
          %1363 = vst [vmem:[#allocation3 + $0x90] sm:$0xff] %v1327
          %1364 = vst [vmem:[#allocation3 + $0x98] sm:$0xff] %v1329
          %1365 = vst [vmem:[#allocation3 + $0xa0] sm:$0xff] %v1258
          %1366 = vst [vmem:[#allocation3 + $0xa8] sm:$0xff] %v1260
          %1367 = vst [vmem:[#allocation3 + $0xb0] sm:$0xff] %v1331
          %1368 = vst [vmem:[#allocation3 + $0xb8] sm:$0xff] %v1333
          %1369 = vst [vmem:[#allocation3 + $0xc0] sm:$0xff] %v1264
          %1370 = vst [vmem:[#allocation3 + $0xc8] sm:$0xff] %v1266
          %1371 = vst [vmem:[#allocation3 + $0xd0] sm:$0xff] %v1337
          %1372 = vst [vmem:[#allocation3 + $0xd8] sm:$0xff] %v1339
          %1373 = vst [vmem:[#allocation3 + $0xe0] sm:$0xff] %v1268
          %1374 = vst [vmem:[#allocation3 + $0xe8] sm:$0xff] %v1270
          %1375 = vst [vmem:[#allocation3 + $0xf0] sm:$0xff] %v1341
          %1376 = vst [vmem:[#allocation3 + $0xf8] sm:$0xff] %v1343
        $region84: #{tpu_custom_call.1} parent=51 // pred_fallthru
          _
        %v1377 = vld [vmem:[%s471] sm:$0xff]
        %1378 = vst [vmem:[#allocation4] sm:$0xff] %v1377
        %v1379 = vld [vmem:[%s539] sm:$0xff]
        %1380 = vst [vmem:[#allocation5] sm:$0xff] %v1379
        %s1381 = smul.u32 0, 4
        %s1382 = smul.addr %s1381, 8
        %s1383 = scalar_lea.vmem [#allocation3], %s1382
        %v1384 = vld [vmem:[%s1383] sm:$0xff]
        %v1385 = vld [vmem:[%s1383 + $0x8] sm:$0xff]
        %v1386 = vld [vmem:[%s1383 + $0x10] sm:$0xff]
        %v1387 = vld [vmem:[%s1383 + $0x18] sm:$0xff]
        %v1388 = vld [vmem:[#allocation4] sm:$0xff]
        %v1389 = vpack.c.bf16 %v1388, %v1388
        %v1390 = vld [vmem:[%s453] sm:$0xff]
        %v1391 = vld [vmem:[%s453 + $0x8] sm:$0xff]
        %v1392 = vld [vmem:[%s453 + $0x10] sm:$0xff]
        %v1393 = vld [vmem:[%s453 + $0x18] sm:$0xff]
        %v1394 = vld [vmem:[%s453 + $0x20] sm:$0xff]
        %v1395 = vld [vmem:[%s453 + $0x28] sm:$0xff]
        %v1396 = vld [vmem:[%s453 + $0x30] sm:$0xff]
        %v1397 = vld [vmem:[%s453 + $0x38] sm:$0xff]
        %v1398 = vld [vmem:[%s453 + $0x40] sm:$0xff]
        %v1399 = vld [vmem:[%s453 + $0x48] sm:$0xff]
        %v1400 = vld [vmem:[%s453 + $0x50] sm:$0xff]
        %v1401 = vld [vmem:[%s453 + $0x58] sm:$0xff]
        %v1402 = vld [vmem:[%s453 + $0x60] sm:$0xff]
        %v1403 = vld [vmem:[%s453 + $0x68] sm:$0xff]
        %v1404 = vld [vmem:[%s453 + $0x70] sm:$0xff]
        %v1405 = vld [vmem:[%s453 + $0x78] sm:$0xff]
        %v1406 = vld [vmem:[%s453 + $0x80] sm:$0xff]
        %v1407 = vld [vmem:[%s453 + $0x88] sm:$0xff]
        %v1408 = vld [vmem:[%s453 + $0x90] sm:$0xff]
        %v1409 = vld [vmem:[%s453 + $0x98] sm:$0xff]
        %v1410 = vld [vmem:[%s453 + $0xa0] sm:$0xff]
        %v1411 = vld [vmem:[%s453 + $0xa8] sm:$0xff]
        %v1412 = vld [vmem:[%s453 + $0xb0] sm:$0xff]
        %v1413 = vld [vmem:[%s453 + $0xb8] sm:$0xff]
        %v1414 = vld [vmem:[%s453 + $0xc0] sm:$0xff]
        %v1415 = vld [vmem:[%s453 + $0xc8] sm:$0xff]
        %v1416 = vld [vmem:[%s453 + $0xd0] sm:$0xff]
        %v1417 = vld [vmem:[%s453 + $0xd8] sm:$0xff]
        %v1418 = vld [vmem:[%s453 + $0xe0] sm:$0xff]
        %v1419 = vld [vmem:[%s453 + $0xe8] sm:$0xff]
        %v1420 = vld [vmem:[%s453 + $0xf0] sm:$0xff]
        %v1421 = vld [vmem:[%s453 + $0xf8] sm:$0xff]
        %v1454 = vunpack.c.l.b16 %v1390
        %v1455 = vunpack.c.h.b16 %v1390
        %v1456 = vunpack.c.l.b16 %v1391
        %v1457 = vunpack.c.h.b16 %v1391
        %v1458 = vunpack.c.l.b16 %v1392
        %v1459 = vunpack.c.h.b16 %v1392
        %v1460 = vunpack.c.l.b16 %v1393
        %v1461 = vunpack.c.h.b16 %v1393
        %v1462 = vunpack.c.l.b16 %v1394
        %v1463 = vunpack.c.h.b16 %v1394
        %v1464 = vunpack.c.l.b16 %v1395
        %v1465 = vunpack.c.h.b16 %v1395
        %v1466 = vunpack.c.l.b16 %v1396
        %v1467 = vunpack.c.h.b16 %v1396
        %v1468 = vunpack.c.l.b16 %v1397
        %v1469 = vunpack.c.h.b16 %v1397
        %v1470 = vunpack.c.l.b16 %v1398
        %v1471 = vunpack.c.h.b16 %v1398
        %v1472 = vunpack.c.l.b16 %v1399
        %v1473 = vunpack.c.h.b16 %v1399
        %v1474 = vunpack.c.l.b16 %v1400
        %v1475 = vunpack.c.h.b16 %v1400
        %v1476 = vunpack.c.l.b16 %v1401
        %v1477 = vunpack.c.h.b16 %v1401
        %v1478 = vunpack.c.l.b16 %v1402
        %v1479 = vunpack.c.h.b16 %v1402
        %v1480 = vunpack.c.l.b16 %v1403
        %v1481 = vunpack.c.h.b16 %v1403
        %v1482 = vunpack.c.l.b16 %v1404
        %v1483 = vunpack.c.h.b16 %v1404
        %v1484 = vunpack.c.l.b16 %v1405
        %v1485 = vunpack.c.h.b16 %v1405
        %v1486 = vunpack.c.l.b16 %v1406
        %v1487 = vunpack.c.h.b16 %v1406
        %v1488 = vunpack.c.l.b16 %v1407
        %v1489 = vunpack.c.h.b16 %v1407
        %v1490 = vunpack.c.l.b16 %v1408
        %v1491 = vunpack.c.h.b16 %v1408
        %v1492 = vunpack.c.l.b16 %v1409
        %v1493 = vunpack.c.h.b16 %v1409
        %v1494 = vunpack.c.l.b16 %v1410
        %v1495 = vunpack.c.h.b16 %v1410
        %v1496 = vunpack.c.l.b16 %v1411
        %v1497 = vunpack.c.h.b16 %v1411
        %v1498 = vunpack.c.l.b16 %v1412
        %v1499 = vunpack.c.h.b16 %v1412
        %v1500 = vunpack.c.l.b16 %v1413
        %v1501 = vunpack.c.h.b16 %v1413
        %v1502 = vunpack.c.l.b16 %v1414
        %v1503 = vunpack.c.h.b16 %v1414
        %v1504 = vunpack.c.l.b16 %v1415
        %v1505 = vunpack.c.h.b16 %v1415
        %v1506 = vunpack.c.l.b16 %v1416
        %v1507 = vunpack.c.h.b16 %v1416
        %v1508 = vunpack.c.l.b16 %v1417
        %v1509 = vunpack.c.h.b16 %v1417
        %v1510 = vunpack.c.l.b16 %v1418
        %v1511 = vunpack.c.h.b16 %v1418
        %v1512 = vunpack.c.l.b16 %v1419
        %v1513 = vunpack.c.h.b16 %v1419
        %v1514 = vunpack.c.l.b16 %v1420
        %v1515 = vunpack.c.h.b16 %v1420
        %v1516 = vunpack.c.l.b16 %v1421
        %v1517 = vunpack.c.h.b16 %v1421
        %v1518 = vpack.c.b16 %v1458, %v1454
        %v1519 = vpack.c.b16 %v1459, %v1455
        %v1520 = vpack.c.b16 %v1460, %v1456
        %v1521 = vpack.c.b16 %v1461, %v1457
        %v1522 = vpack.c.b16 %v1466, %v1462
        %v1523 = vpack.c.b16 %v1467, %v1463
        %v1524 = vpack.c.b16 %v1468, %v1464
        %v1525 = vpack.c.b16 %v1469, %v1465
        %v1526 = vpack.c.b16 %v1474, %v1470
        %v1527 = vpack.c.b16 %v1475, %v1471
        %v1528 = vpack.c.b16 %v1476, %v1472
        %v1529 = vpack.c.b16 %v1477, %v1473
        %v1530 = vpack.c.b16 %v1482, %v1478
        %v1531 = vpack.c.b16 %v1483, %v1479
        %v1532 = vpack.c.b16 %v1484, %v1480
        %v1533 = vpack.c.b16 %v1485, %v1481
        %v1534 = vpack.c.b16 %v1490, %v1486
        %v1535 = vpack.c.b16 %v1491, %v1487
        %v1536 = vpack.c.b16 %v1492, %v1488
        %v1537 = vpack.c.b16 %v1493, %v1489
        %v1538 = vpack.c.b16 %v1498, %v1494
        %v1539 = vpack.c.b16 %v1499, %v1495
        %v1540 = vpack.c.b16 %v1500, %v1496
        %v1541 = vpack.c.b16 %v1501, %v1497
        %v1542 = vpack.c.b16 %v1506, %v1502
        %v1543 = vpack.c.b16 %v1507, %v1503
        %v1544 = vpack.c.b16 %v1508, %v1504
        %v1545 = vpack.c.b16 %v1509, %v1505
        %v1546 = vpack.c.b16 %v1514, %v1510
        %v1547 = vpack.c.b16 %v1515, %v1511
        %v1548 = vpack.c.b16 %v1516, %v1512
        %v1549 = vpack.c.b16 %v1517, %v1513
        %1582 = vmatprep.subr.bf16.mxu0 %v1519
        %1583 = vmatpush1.bf16.msra.mxu0 %v1518
        %1584 = vmatprep.subr.bf16.mxu0 %v1523
        %1585 = vmatpush1.bf16.msra.mxu0 %v1522
        %1586 = vmatprep.subr.bf16.mxu0 %v1527
        %1587 = vmatpush1.bf16.msra.mxu0 %v1526
        %1588 = vmatprep.subr.bf16.mxu0 %v1531
        %1589 = vmatpush1.bf16.msra.mxu0 %v1530
        %1590 = vmatprep.subr.bf16.mxu0 %v1535
        %1591 = vmatpush1.bf16.msra.mxu0 %v1534
        %1592 = vmatprep.subr.bf16.mxu0 %v1539
        %1593 = vmatpush1.bf16.msra.mxu0 %v1538
        %1594 = vmatprep.subr.bf16.mxu0 %v1543
        %1595 = vmatpush1.bf16.msra.mxu0 %v1542
        %1596 = vmatprep.subr.bf16.mxu0 %v1547
        %1597 = vmatpush1.bf16.msra.mxu0 %v1546
        %1598 = vmatprep.subr.bf16.mxu0 0
        %1599 = vmatpush1.bf16.msra.mxu0 0
        %1600 = vmatprep.subr.bf16.mxu0 0
        %1601 = vmatpush1.bf16.msra.mxu0 0
        %1602 = vmatprep.subr.bf16.mxu0 0
        %1603 = vmatpush1.bf16.msra.mxu0 0
        %1604 = vmatprep.subr.bf16.mxu0 0
        %1605 = vmatpush1.bf16.msra.mxu0 0
        %1606 = vmatprep.subr.bf16.mxu0 0
        %1607 = vmatpush1.bf16.msra.mxu0 0
        %1608 = vmatprep.subr.bf16.mxu0 0
        %1609 = vmatpush1.bf16.msra.mxu0 0
        %1610 = vmatprep.subr.bf16.mxu0 0
        %1611 = vmatpush1.bf16.msra.mxu0 0
        %1612 = vmatprep.subr.bf16.mxu0 0
        %1613 = vmatpush1.bf16.msra.mxu0 0
        %1614 = vmatprep.mubr.bf16.mxu0 0
        %1615 = vmatmul.mubr.bf16.gmra.mrb[0].mxu0 %v1389
        %v1616 = vpop.f32.mrb[0].mxu0
        %v1617 = vadd.f32 0.0, %v1616
        %v1618 = vpop.f32.mrb[0].mxu0
        %v1619 = vadd.f32 0.0, %v1618
        %v1620 = vpop.f32.mrb[0].mxu0
        %v1621 = vpop.f32.mrb[0].mxu0
        %1622 = vdwg.mxu0
        %1623 = vmatprep.subr.bf16.mxu0 %v1521
        %1624 = vmatpush1.bf16.msra.mxu0 %v1520
        %1625 = vmatprep.subr.bf16.mxu0 %v1525
        %1626 = vmatpush1.bf16.msra.mxu0 %v1524
        %1627 = vmatprep.subr.bf16.mxu0 %v1529
        %1628 = vmatpush1.bf16.msra.mxu0 %v1528
        %1629 = vmatprep.subr.bf16.mxu0 %v1533
        %1630 = vmatpush1.bf16.msra.mxu0 %v1532
        %1631 = vmatprep.subr.bf16.mxu0 %v1537
        %1632 = vmatpush1.bf16.msra.mxu0 %v1536
        %1633 = vmatprep.subr.bf16.mxu0 %v1541
        %1634 = vmatpush1.bf16.msra.mxu0 %v1540
        %1635 = vmatprep.subr.bf16.mxu0 %v1545
        %1636 = vmatpush1.bf16.msra.mxu0 %v1544
        %1637 = vmatprep.subr.bf16.mxu0 %v1549
        %1638 = vmatpush1.bf16.msra.mxu0 %v1548
        %1639 = vmatprep.subr.bf16.mxu0 0
        %1640 = vmatpush1.bf16.msra.mxu0 0
        %1641 = vmatprep.subr.bf16.mxu0 0
        %1642 = vmatpush1.bf16.msra.mxu0 0
        %1643 = vmatprep.subr.bf16.mxu0 0
        %1644 = vmatpush1.bf16.msra.mxu0 0
        %1645 = vmatprep.subr.bf16.mxu0 0
        %1646 = vmatpush1.bf16.msra.mxu0 0
        %1647 = vmatprep.subr.bf16.mxu0 0
        %1648 = vmatpush1.bf16.msra.mxu0 0
        %1649 = vmatprep.subr.bf16.mxu0 0
        %1650 = vmatpush1.bf16.msra.mxu0 0
        %1651 = vmatprep.subr.bf16.mxu0 0
        %1652 = vmatpush1.bf16.msra.mxu0 0
        %1653 = vmatprep.subr.bf16.mxu0 0
        %1654 = vmatpush1.bf16.msra.mxu0 0
        %1655 = vmatprep.mubr.bf16.mxu0 0
        %1656 = vmatmul.mubr.bf16.gmra.mrb[0].mxu0 %v1389
        %v1657 = vpop.f32.mrb[0].mxu0
        %v1658 = vadd.f32 0.0, %v1657
        %v1659 = vpop.f32.mrb[0].mxu0
        %v1660 = vadd.f32 0.0, %v1659
        %v1661 = vpop.f32.mrb[0].mxu0
        %v1662 = vpop.f32.mrb[0].mxu0
        %1663 = vdwg.mxu0
        %v1664 = vadd.f32 %v1384, %v1617
        %v1665 = vadd.f32 %v1385, %v1619
        %v1666 = vadd.f32 %v1386, %v1658
        %v1667 = vadd.f32 %v1387, %v1660
        %v1668 = vxor.u32 %v1664, 2147483648
        %v1669 = vmul.f32 %v1668, 1.442695
        %v1670 = vpow.pop %v1669
        %v1671 = vadd.f32 %v1670, 1.0
        %v1672 = vrcp.pop %v1671
        %v1673 = vmul.f32 1.0, %v1672
        %v1674 = vxor.u32 %v1665, 2147483648
        %v1675 = vmul.f32 %v1674, 1.442695
        %v1676 = vpow.pop %v1675
        %v1677 = vadd.f32 %v1676, 1.0
        %v1678 = vrcp.pop %v1677
        %v1679 = vmul.f32 1.0, %v1678
        %v1680 = vtanh.pop %v1666
        %v1681 = vxor.u32 %v1667, 2147483648
        %v1682 = vmul.f32 %v1681, 1.442695
        %v1683 = vpow.pop %v1682
        %v1684 = vadd.f32 %v1683, 1.0
        %v1685 = vrcp.pop %v1684
        %v1686 = vmul.f32 1.0, %v1685
        %v1687 = vld [vmem:[#allocation5] sm:$0xff]
        %v1688 = vmul.f32 %v1679, %v1687
        %v1689 = vmul.f32 %v1673, %v1680
        %v1690 = vadd.f32 %v1688, %v1689
        %v1691 = vtanh.pop %v1690
        %v1692 = vmul.f32 %v1686, %v1691
        %1693 = vst [vmem:[#allocation5] sm:$0xff] %v1690
        %1694 = vst [vmem:[#allocation4] sm:$0xff] %v1692
        %1695 = vst [vmem:[#allocation2] sm:$0xff] %v1692
        %s1696 = smul.u32 1, 4
        %s1697 = smul.addr %s1696, 8
        %s1698 = scalar_lea.vmem [#allocation3], %s1697
        %v1699 = vld [vmem:[%s1698] sm:$0xff]
        %v1700 = vld [vmem:[%s1698 + $0x8] sm:$0xff]
        %v1701 = vld [vmem:[%s1698 + $0x10] sm:$0xff]
        %v1702 = vld [vmem:[%s1698 + $0x18] sm:$0xff]
        %v1703 = vld [vmem:[#allocation4] sm:$0xff]
        %v1704 = vpack.c.bf16 %v1703, %v1703
        %v1705 = vld [vmem:[%s453] sm:$0xff]
        %v1706 = vld [vmem:[%s453 + $0x8] sm:$0xff]
        %v1707 = vld [vmem:[%s453 + $0x10] sm:$0xff]
        %v1708 = vld [vmem:[%s453 + $0x18] sm:$0xff]
        %v1709 = vld [vmem:[%s453 + $0x20] sm:$0xff]
        %v1710 = vld [vmem:[%s453 + $0x28] sm:$0xff]
        %v1711 = vld [vmem:[%s453 + $0x30] sm:$0xff]
        %v1712 = vld [vmem:[%s453 + $0x38] sm:$0xff]
        %v1713 = vld [vmem:[%s453 + $0x40] sm:$0xff]
        %v1714 = vld [vmem:[%s453 + $0x48] sm:$0xff]
        %v1715 = vld [vmem:[%s453 + $0x50] sm:$0xff]
        %v1716 = vld [vmem:[%s453 + $0x58] sm:$0xff]
        %v1717 = vld [vmem:[%s453 + $0x60] sm:$0xff]
        %v1718 = vld [vmem:[%s453 + $0x68] sm:$0xff]
        %v1719 = vld [vmem:[%s453 + $0x70] sm:$0xff]
        %v1720 = vld [vmem:[%s453 + $0x78] sm:$0xff]
        %v1721 = vld [vmem:[%s453 + $0x80] sm:$0xff]
        %v1722 = vld [vmem:[%s453 + $0x88] sm:$0xff]
        %v1723 = vld [vmem:[%s453 + $0x90] sm:$0xff]
        %v1724 = vld [vmem:[%s453 + $0x98] sm:$0xff]
        %v1725 = vld [vmem:[%s453 + $0xa0] sm:$0xff]
        %v1726 = vld [vmem:[%s453 + $0xa8] sm:$0xff]
        %v1727 = vld [vmem:[%s453 + $0xb0] sm:$0xff]
        %v1728 = vld [vmem:[%s453 + $0xb8] sm:$0xff]
        %v1729 = vld [vmem:[%s453 + $0xc0] sm:$0xff]
        %v1730 = vld [vmem:[%s453 + $0xc8] sm:$0xff]
        %v1731 = vld [vmem:[%s453 + $0xd0] sm:$0xff]
        %v1732 = vld [vmem:[%s453 + $0xd8] sm:$0xff]
        %v1733 = vld [vmem:[%s453 + $0xe0] sm:$0xff]
        %v1734 = vld [vmem:[%s453 + $0xe8] sm:$0xff]
        %v1735 = vld [vmem:[%s453 + $0xf0] sm:$0xff]
        %v1736 = vld [vmem:[%s453 + $0xf8] sm:$0xff]
        %v1769 = vunpack.c.l.b16 %v1705
        %v1770 = vunpack.c.h.b16 %v1705
        %v1771 = vunpack.c.l.b16 %v1706
        %v1772 = vunpack.c.h.b16 %v1706
        %v1773 = vunpack.c.l.b16 %v1707
        %v1774 = vunpack.c.h.b16 %v1707
        %v1775 = vunpack.c.l.b16 %v1708
        %v1776 = vunpack.c.h.b16 %v1708
        %v1777 = vunpack.c.l.b16 %v1709
        %v1778 = vunpack.c.h.b16 %v1709
        %v1779 = vunpack.c.l.b16 %v1710
        %v1780 = vunpack.c.h.b16 %v1710
        %v1781 = vunpack.c.l.b16 %v1711
        %v1782 = vunpack.c.h.b16 %v1711
        %v1783 = vunpack.c.l.b16 %v1712
        %v1784 = vunpack.c.h.b16 %v1712
        %v1785 = vunpack.c.l.b16 %v1713
        %v1786 = vunpack.c.h.b16 %v1713
        %v1787 = vunpack.c.l.b16 %v1714
        %v1788 = vunpack.c.h.b16 %v1714
        %v1789 = vunpack.c.l.b16 %v1715
        %v1790 = vunpack.c.h.b16 %v1715
        %v1791 = vunpack.c.l.b16 %v1716
        %v1792 = vunpack.c.h.b16 %v1716
        %v1793 = vunpack.c.l.b16 %v1717
        %v1794 = vunpack.c.h.b16 %v1717
        %v1795 = vunpack.c.l.b16 %v1718
        %v1796 = vunpack.c.h.b16 %v1718
        %v1797 = vunpack.c.l.b16 %v1719
        %v1798 = vunpack.c.h.b16 %v1719
        %v1799 = vunpack.c.l.b16 %v1720
        %v1800 = vunpack.c.h.b16 %v1720
        %v1801 = vunpack.c.l.b16 %v1721
        %v1802 = vunpack.c.h.b16 %v1721
        %v1803 = vunpack.c.l.b16 %v1722
        %v1804 = vunpack.c.h.b16 %v1722
        %v1805 = vunpack.c.l.b16 %v1723
        %v1806 = vunpack.c.h.b16 %v1723
        %v1807 = vunpack.c.l.b16 %v1724
        %v1808 = vunpack.c.h.b16 %v1724
        %v1809 = vunpack.c.l.b16 %v1725
        %v1810 = vunpack.c.h.b16 %v1725
        %v1811 = vunpack.c.l.b16 %v1726
        %v1812 = vunpack.c.h.b16 %v1726
        %v1813 = vunpack.c.l.b16 %v1727
        %v1814 = vunpack.c.h.b16 %v1727
        %v1815 = vunpack.c.l.b16 %v1728
        %v1816 = vunpack.c.h.b16 %v1728
        %v1817 = vunpack.c.l.b16 %v1729
        %v1818 = vunpack.c.h.b16 %v1729
        %v1819 = vunpack.c.l.b16 %v1730
        %v1820 = vunpack.c.h.b16 %v1730
        %v1821 = vunpack.c.l.b16 %v1731
        %v1822 = vunpack.c.h.b16 %v1731
        %v1823 = vunpack.c.l.b16 %v1732
        %v1824 = vunpack.c.h.b16 %v1732
        %v1825 = vunpack.c.l.b16 %v1733
        %v1826 = vunpack.c.h.b16 %v1733
        %v1827 = vunpack.c.l.b16 %v1734
        %v1828 = vunpack.c.h.b16 %v1734
        %v1829 = vunpack.c.l.b16 %v1735
        %v1830 = vunpack.c.h.b16 %v1735
        %v1831 = vunpack.c.l.b16 %v1736
        %v1832 = vunpack.c.h.b16 %v1736
        %v1833 = vpack.c.b16 %v1773, %v1769
        %v1834 = vpack.c.b16 %v1774, %v1770
        %v1835 = vpack.c.b16 %v1775, %v1771
        %v1836 = vpack.c.b16 %v1776, %v1772
        %v1837 = vpack.c.b16 %v1781, %v1777
        %v1838 = vpack.c.b16 %v1782, %v1778
        %v1839 = vpack.c.b16 %v1783, %v1779
        %v1840 = vpack.c.b16 %v1784, %v1780
        %v1841 = vpack.c.b16 %v1789, %v1785
        %v1842 = vpack.c.b16 %v1790, %v1786
        %v1843 = vpack.c.b16 %v1791, %v1787
        %v1844 = vpack.c.b16 %v1792, %v1788
        %v1845 = vpack.c.b16 %v1797, %v1793
        %v1846 = vpack.c.b16 %v1798, %v1794
        %v1847 = vpack.c.b16 %v1799, %v1795
        %v1848 = vpack.c.b16 %v1800, %v1796
        %v1849 = vpack.c.b16 %v1805, %v1801
        %v1850 = vpack.c.b16 %v1806, %v1802
        %v1851 = vpack.c.b16 %v1807, %v1803
        %v1852 = vpack.c.b16 %v1808, %v1804
        %v1853 = vpack.c.b16 %v1813, %v1809
        %v1854 = vpack.c.b16 %v1814, %v1810
        %v1855 = vpack.c.b16 %v1815, %v1811
        %v1856 = vpack.c.b16 %v1816, %v1812
        %v1857 = vpack.c.b16 %v1821, %v1817
        %v1858 = vpack.c.b16 %v1822, %v1818
        %v1859 = vpack.c.b16 %v1823, %v1819
        %v1860 = vpack.c.b16 %v1824, %v1820
        %v1861 = vpack.c.b16 %v1829, %v1825
        %v1862 = vpack.c.b16 %v1830, %v1826
        %v1863 = vpack.c.b16 %v1831, %v1827
        %v1864 = vpack.c.b16 %v1832, %v1828
        %1897 = vmatprep.subr.bf16.mxu0 %v1834
        %1898 = vmatpush1.bf16.msra.mxu0 %v1833
        %1899 = vmatprep.subr.bf16.mxu0 %v1838
        %1900 = vmatpush1.bf16.msra.mxu0 %v1837
        %1901 = vmatprep.subr.bf16.mxu0 %v1842
        %1902 = vmatpush1.bf16.msra.mxu0 %v1841
        %1903 = vmatprep.subr.bf16.mxu0 %v1846
        %1904 = vmatpush1.bf16.msra.mxu0 %v1845
        %1905 = vmatprep.subr.bf16.mxu0 %v1850
        %1906 = vmatpush1.bf16.msra.mxu0 %v1849
        %1907 = vmatprep.subr.bf16.mxu0 %v1854
        %1908 = vmatpush1.bf16.msra.mxu0 %v1853
        %1909 = vmatprep.subr.bf16.mxu0 %v1858
        %1910 = vmatpush1.bf16.msra.mxu0 %v1857
        %1911 = vmatprep.subr.bf16.mxu0 %v1862
        %1912 = vmatpush1.bf16.msra.mxu0 %v1861
        %1913 = vmatprep.subr.bf16.mxu0 0
        %1914 = vmatpush1.bf16.msra.mxu0 0
        %1915 = vmatprep.subr.bf16.mxu0 0
        %1916 = vmatpush1.bf16.msra.mxu0 0
        %1917 = vmatprep.subr.bf16.mxu0 0
        %1918 = vmatpush1.bf16.msra.mxu0 0
        %1919 = vmatprep.subr.bf16.mxu0 0
        %1920 = vmatpush1.bf16.msra.mxu0 0
        %1921 = vmatprep.subr.bf16.mxu0 0
        %1922 = vmatpush1.bf16.msra.mxu0 0
        %1923 = vmatprep.subr.bf16.mxu0 0
        %1924 = vmatpush1.bf16.msra.mxu0 0
        %1925 = vmatprep.subr.bf16.mxu0 0
        %1926 = vmatpush1.bf16.msra.mxu0 0
        %1927 = vmatprep.subr.bf16.mxu0 0
        %1928 = vmatpush1.bf16.msra.mxu0 0
        %1929 = vmatprep.mubr.bf16.mxu0 0
        %1930 = vmatmul.mubr.bf16.gmra.mrb[0].mxu0 %v1704
        %v1931 = vpop.f32.mrb[0].mxu0
        %v1932 = vadd.f32 0.0, %v1931
        %v1933 = vpop.f32.mrb[0].mxu0
        %v1934 = vadd.f32 0.0, %v1933
        %v1935 = vpop.f32.mrb[0].mxu0
        %v1936 = vpop.f32.mrb[0].mxu0
        %1937 = vdwg.mxu0
        %1938 = vmatprep.subr.bf16.mxu0 %v1836
        %1939 = vmatpush1.bf16.msra.mxu0 %v1835
        %1940 = vmatprep.subr.bf16.mxu0 %v1840
        %1941 = vmatpush1.bf16.msra.mxu0 %v1839
        %1942 = vmatprep.subr.bf16.mxu0 %v1844
        %1943 = vmatpush1.bf16.msra.mxu0 %v1843
        %1944 = vmatprep.subr.bf16.mxu0 %v1848
        %1945 = vmatpush1.bf16.msra.mxu0 %v1847
        %1946 = vmatprep.subr.bf16.mxu0 %v1852
        %1947 = vmatpush1.bf16.msra.mxu0 %v1851
        %1948 = vmatprep.subr.bf16.mxu0 %v1856
        %1949 = vmatpush1.bf16.msra.mxu0 %v1855
        %1950 = vmatprep.subr.bf16.mxu0 %v1860
        %1951 = vmatpush1.bf16.msra.mxu0 %v1859
        %1952 = vmatprep.subr.bf16.mxu0 %v1864
        %1953 = vmatpush1.bf16.msra.mxu0 %v1863
        %1954 = vmatprep.subr.bf16.mxu0 0
        %1955 = vmatpush1.bf16.msra.mxu0 0
        %1956 = vmatprep.subr.bf16.mxu0 0
        %1957 = vmatpush1.bf16.msra.mxu0 0
        %1958 = vmatprep.subr.bf16.mxu0 0
        %1959 = vmatpush1.bf16.msra.mxu0 0
        %1960 = vmatprep.subr.bf16.mxu0 0
        %1961 = vmatpush1.bf16.msra.mxu0 0
        %1962 = vmatprep.subr.bf16.mxu0 0
        %1963 = vmatpush1.bf16.msra.mxu0 0
        %1964 = vmatprep.subr.bf16.mxu0 0
        %1965 = vmatpush1.bf16.msra.mxu0 0
        %1966 = vmatprep.subr.bf16.mxu0 0
        %1967 = vmatpush1.bf16.msra.mxu0 0
        %1968 = vmatprep.subr.bf16.mxu0 0
        %1969 = vmatpush1.bf16.msra.mxu0 0
        %1970 = vmatprep.mubr.bf16.mxu0 0
        %1971 = vmatmul.mubr.bf16.gmra.mrb[0].mxu0 %v1704
        %v1972 = vpop.f32.mrb[0].mxu0
        %v1973 = vadd.f32 0.0, %v1972
        %v1974 = vpop.f32.mrb[0].mxu0
        %v1975 = vadd.f32 0.0, %v1974
        %v1976 = vpop.f32.mrb[0].mxu0
        %v1977 = vpop.f32.mrb[0].mxu0
        %1978 = vdwg.mxu0
        %v1979 = vadd.f32 %v1699, %v1932
        %v1980 = vadd.f32 %v1700, %v1934
        %v1981 = vadd.f32 %v1701, %v1973
        %v1982 = vadd.f32 %v1702, %v1975
        %v1983 = vxor.u32 %v1979, 2147483648
        %v1984 = vmul.f32 %v1983, 1.442695
        %v1985 = vpow.pop %v1984
        %v1986 = vadd.f32 %v1985, 1.0
        %v1987 = vrcp.pop %v1986
        %v1988 = vmul.f32 1.0, %v1987
        %v1989 = vxor.u32 %v1980, 2147483648
        %v1990 = vmul.f32 %v1989, 1.442695
        %v1991 = vpow.pop %v1990
        %v1992 = vadd.f32 %v1991, 1.0
        %v1993 = vrcp.pop %v1992
        %v1994 = vmul.f32 1.0, %v1993
        %v1995 = vtanh.pop %v1981
        %v1996 = vxor.u32 %v1982, 2147483648
        %v1997 = vmul.f32 %v1996, 1.442695
        %v1998 = vpow.pop %v1997
        %v1999 = vadd.f32 %v1998, 1.0
        %v2000 = vrcp.pop %v1999
        %v2001 = vmul.f32 1.0, %v2000
        %v2002 = vld [vmem:[#allocation5] sm:$0xff]
        %v2003 = vmul.f32 %v1994, %v2002
        %v2004 = vmul.f32 %v1988, %v1995
        %v2005 = vadd.f32 %v2003, %v2004
        %v2006 = vtanh.pop %v2005
        %v2007 = vmul.f32 %v2001, %v2006
        %2008 = vst [vmem:[#allocation5] sm:$0xff] %v2005
        %2009 = vst [vmem:[#allocation4] sm:$0xff] %v2007
        %s2010 = scalar_lea.vmem [#allocation2], 8
        %2011 = vst [vmem:[%s2010] sm:$0xff] %v2007
        %s2012 = smul.u32 2, 4
        %s2013 = smul.addr %s2012, 8
        %s2014 = scalar_lea.vmem [#allocation3], %s2013
        %v2015 = vld [vmem:[%s2014] sm:$0xff]
        %v2016 = vld [vmem:[%s2014 + $0x8] sm:$0xff]
        %v2017 = vld [vmem:[%s2014 + $0x10] sm:$0xff]
        %v2018 = vld [vmem:[%s2014 + $0x18] sm:$0xff]
        %v2019 = vld [vmem:[#allocation4] sm:$0xff]
        %v2020 = vpack.c.bf16 %v2019, %v2019
        %v2021 = vld [vmem:[%s453] sm:$0xff]
        %v2022 = vld [vmem:[%s453 + $0x8] sm:$0xff]
        %v2023 = vld [vmem:[%s453 + $0x10] sm:$0xff]
        %v2024 = vld [vmem:[%s453 + $0x18] sm:$0xff]
        %v2025 = vld [vmem:[%s453 + $0x20] sm:$0xff]
        %v2026 = vld [vmem:[%s453 + $0x28] sm:$0xff]
        %v2027 = vld [vmem:[%s453 + $0x30] sm:$0xff]
        %v2028 = vld [vmem:[%s453 + $0x38] sm:$0xff]
        %v2029 = vld [vmem:[%s453 + $0x40] sm:$0xff]
        %v2030 = vld [vmem:[%s453 + $0x48] sm:$0xff]
        %v2031 = vld [vmem:[%s453 + $0x50] sm:$0xff]
        %v2032 = vld [vmem:[%s453 + $0x58] sm:$0xff]
        %v2033 = vld [vmem:[%s453 + $0x60] sm:$0xff]
        %v2034 = vld [vmem:[%s453 + $0x68] sm:$0xff]
        %v2035 = vld [vmem:[%s453 + $0x70] sm:$0xff]
        %v2036 = vld [vmem:[%s453 + $0x78] sm:$0xff]
        %v2037 = vld [vmem:[%s453 + $0x80] sm:$0xff]
        %v2038 = vld [vmem:[%s453 + $0x88] sm:$0xff]
        %v2039 = vld [vmem:[%s453 + $0x90] sm:$0xff]
        %v2040 = vld [vmem:[%s453 + $0x98] sm:$0xff]
        %v2041 = vld [vmem:[%s453 + $0xa0] sm:$0xff]
        %v2042 = vld [vmem:[%s453 + $0xa8] sm:$0xff]
        %v2043 = vld [vmem:[%s453 + $0xb0] sm:$0xff]
        %v2044 = vld [vmem:[%s453 + $0xb8] sm:$0xff]
        %v2045 = vld [vmem:[%s453 + $0xc0] sm:$0xff]
        %v2046 = vld [vmem:[%s453 + $0xc8] sm:$0xff]
        %v2047 = vld [vmem:[%s453 + $0xd0] sm:$0xff]
        %v2048 = vld [vmem:[%s453 + $0xd8] sm:$0xff]
        %v2049 = vld [vmem:[%s453 + $0xe0] sm:$0xff]
        %v2050 = vld [vmem:[%s453 + $0xe8] sm:$0xff]
        %v2051 = vld [vmem:[%s453 + $0xf0] sm:$0xff]
        %v2052 = vld [vmem:[%s453 + $0xf8] sm:$0xff]
        %v2085 = vunpack.c.l.b16 %v2021
        %v2086 = vunpack.c.h.b16 %v2021
        %v2087 = vunpack.c.l.b16 %v2022
        %v2088 = vunpack.c.h.b16 %v2022
        %v2089 = vunpack.c.l.b16 %v2023
        %v2090 = vunpack.c.h.b16 %v2023
        %v2091 = vunpack.c.l.b16 %v2024
        %v2092 = vunpack.c.h.b16 %v2024
        %v2093 = vunpack.c.l.b16 %v2025
        %v2094 = vunpack.c.h.b16 %v2025
        %v2095 = vunpack.c.l.b16 %v2026
        %v2096 = vunpack.c.h.b16 %v2026
        %v2097 = vunpack.c.l.b16 %v2027
        %v2098 = vunpack.c.h.b16 %v2027
        %v2099 = vunpack.c.l.b16 %v2028
        %v2100 = vunpack.c.h.b16 %v2028
        %v2101 = vunpack.c.l.b16 %v2029
        %v2102 = vunpack.c.h.b16 %v2029
        %v2103 = vunpack.c.l.b16 %v2030
        %v2104 = vunpack.c.h.b16 %v2030
        %v2105 = vunpack.c.l.b16 %v2031
        %v2106 = vunpack.c.h.b16 %v2031
        %v2107 = vunpack.c.l.b16 %v2032
        %v2108 = vunpack.c.h.b16 %v2032
        %v2109 = vunpack.c.l.b16 %v2033
        %v2110 = vunpack.c.h.b16 %v2033
        %v2111 = vunpack.c.l.b16 %v2034
        %v2112 = vunpack.c.h.b16 %v2034
        %v2113 = vunpack.c.l.b16 %v2035
        %v2114 = vunpack.c.h.b16 %v2035
        %v2115 = vunpack.c.l.b16 %v2036
        %v2116 = vunpack.c.h.b16 %v2036
        %v2117 = vunpack.c.l.b16 %v2037
        %v2118 = vunpack.c.h.b16 %v2037
        %v2119 = vunpack.c.l.b16 %v2038
        %v2120 = vunpack.c.h.b16 %v2038
        %v2121 = vunpack.c.l.b16 %v2039
        %v2122 = vunpack.c.h.b16 %v2039
        %v2123 = vunpack.c.l.b16 %v2040
        %v2124 = vunpack.c.h.b16 %v2040
        %v2125 = vunpack.c.l.b16 %v2041
        %v2126 = vunpack.c.h.b16 %v2041
        %v2127 = vunpack.c.l.b16 %v2042
        %v2128 = vunpack.c.h.b16 %v2042
        %v2129 = vunpack.c.l.b16 %v2043
        %v2130 = vunpack.c.h.b16 %v2043
        %v2131 = vunpack.c.l.b16 %v2044
        %v2132 = vunpack.c.h.b16 %v2044
        %v2133 = vunpack.c.l.b16 %v2045
        %v2134 = vunpack.c.h.b16 %v2045
        %v2135 = vunpack.c.l.b16 %v2046
        %v2136 = vunpack.c.h.b16 %v2046
        %v2137 = vunpack.c.l.b16 %v2047
        %v2138 = vunpack.c.h.b16 %v2047
        %v2139 = vunpack.c.l.b16 %v2048
        %v2140 = vunpack.c.h.b16 %v2048
        %v2141 = vunpack.c.l.b16 %v2049
        %v2142 = vunpack.c.h.b16 %v2049
        %v2143 = vunpack.c.l.b16 %v2050
        %v2144 = vunpack.c.h.b16 %v2050
        %v2145 = vunpack.c.l.b16 %v2051
        %v2146 = vunpack.c.h.b16 %v2051
        %v2147 = vunpack.c.l.b16 %v2052
        %v2148 = vunpack.c.h.b16 %v2052
        %v2149 = vpack.c.b16 %v2089, %v2085
        %v2150 = vpack.c.b16 %v2090, %v2086
        %v2151 = vpack.c.b16 %v2091, %v2087
        %v2152 = vpack.c.b16 %v2092, %v2088
        %v2153 = vpack.c.b16 %v2097, %v2093
        %v2154 = vpack.c.b16 %v2098, %v2094
        %v2155 = vpack.c.b16 %v2099, %v2095
        %v2156 = vpack.c.b16 %v2100, %v2096
        %v2157 = vpack.c.b16 %v2105, %v2101
        %v2158 = vpack.c.b16 %v2106, %v2102
        %v2159 = vpack.c.b16 %v2107, %v2103
        %v2160 = vpack.c.b16 %v2108, %v2104
        %v2161 = vpack.c.b16 %v2113, %v2109
        %v2162 = vpack.c.b16 %v2114, %v2110
        %v2163 = vpack.c.b16 %v2115, %v2111
        %v2164 = vpack.c.b16 %v2116, %v2112
        %v2165 = vpack.c.b16 %v2121, %v2117
        %v2166 = vpack.c.b16 %v2122, %v2118
        %v2167 = vpack.c.b16 %v2123, %v2119
        %v2168 = vpack.c.b16 %v2124, %v2120
        %v2169 = vpack.c.b16 %v2129, %v2125
        %v2170 = vpack.c.b16 %v2130, %v2126
        %v2171 = vpack.c.b16 %v2131, %v2127
        %v2172 = vpack.c.b16 %v2132, %v2128
        %v2173 = vpack.c.b16 %v2137, %v2133
        %v2174 = vpack.c.b16 %v2138, %v2134
        %v2175 = vpack.c.b16 %v2139, %v2135
        %v2176 = vpack.c.b16 %v2140, %v2136
        %v2177 = vpack.c.b16 %v2145, %v2141
        %v2178 = vpack.c.b16 %v2146, %v2142
        %v2179 = vpack.c.b16 %v2147, %v2143
        %v2180 = vpack.c.b16 %v2148, %v2144
        %2213 = vmatprep.subr.bf16.mxu0 %v2150
        %2214 = vmatpush1.bf16.msra.mxu0 %v2149
        %2215 = vmatprep.subr.bf16.mxu0 %v2154
        %2216 = vmatpush1.bf16.msra.mxu0 %v2153
        %2217 = vmatprep.subr.bf16.mxu0 %v2158
        %2218 = vmatpush1.bf16.msra.mxu0 %v2157
        %2219 = vmatprep.subr.bf16.mxu0 %v2162
        %2220 = vmatpush1.bf16.msra.mxu0 %v2161
        %2221 = vmatprep.subr.bf16.mxu0 %v2166
        %2222 = vmatpush1.bf16.msra.mxu0 %v2165
        %2223 = vmatprep.subr.bf16.mxu0 %v2170
        %2224 = vmatpush1.bf16.msra.mxu0 %v2169
        %2225 = vmatprep.subr.bf16.mxu0 %v2174
        %2226 = vmatpush1.bf16.msra.mxu0 %v2173
        %2227 = vmatprep.subr.bf16.mxu0 %v2178
        %2228 = vmatpush1.bf16.msra.mxu0 %v2177
        %2229 = vmatprep.subr.bf16.mxu0 0
        %2230 = vmatpush1.bf16.msra.mxu0 0
        %2231 = vmatprep.subr.bf16.mxu0 0
        %2232 = vmatpush1.bf16.msra.mxu0 0
        %2233 = vmatprep.subr.bf16.mxu0 0
        %2234 = vmatpush1.bf16.msra.mxu0 0
        %2235 = vmatprep.subr.bf16.mxu0 0
        %2236 = vmatpush1.bf16.msra.mxu0 0
        %2237 = vmatprep.subr.bf16.mxu0 0
        %2238 = vmatpush1.bf16.msra.mxu0 0
        %2239 = vmatprep.subr.bf16.mxu0 0
        %2240 = vmatpush1.bf16.msra.mxu0 0
        %2241 = vmatprep.subr.bf16.mxu0 0
        %2242 = vmatpush1.bf16.msra.mxu0 0
        %2243 = vmatprep.subr.bf16.mxu0 0
        %2244 = vmatpush1.bf16.msra.mxu0 0
        %2245 = vmatprep.mubr.bf16.mxu0 0
        %2246 = vmatmul.mubr.bf16.gmra.mrb[0].mxu0 %v2020
        %v2247 = vpop.f32.mrb[0].mxu0
        %v2248 = vadd.f32 0.0, %v2247
        %v2249 = vpop.f32.mrb[0].mxu0
        %v2250 = vadd.f32 0.0, %v2249
        %v2251 = vpop.f32.mrb[0].mxu0
        %v2252 = vpop.f32.mrb[0].mxu0
        %2253 = vdwg.mxu0
        %2254 = vmatprep.subr.bf16.mxu0 %v2152
        %2255 = vmatpush1.bf16.msra.mxu0 %v2151
        %2256 = vmatprep.subr.bf16.mxu0 %v2156
        %2257 = vmatpush1.bf16.msra.mxu0 %v2155
        %2258 = vmatprep.subr.bf16.mxu0 %v2160
        %2259 = vmatpush1.bf16.msra.mxu0 %v2159
        %2260 = vmatprep.subr.bf16.mxu0 %v2164
        %2261 = vmatpush1.bf16.msra.mxu0 %v2163
        %2262 = vmatprep.subr.bf16.mxu0 %v2168
        %2263 = vmatpush1.bf16.msra.mxu0 %v2167
        %2264 = vmatprep.subr.bf16.mxu0 %v2172
        %2265 = vmatpush1.bf16.msra.mxu0 %v2171
        %2266 = vmatprep.subr.bf16.mxu0 %v2176
        %2267 = vmatpush1.bf16.msra.mxu0 %v2175
        %2268 = vmatprep.subr.bf16.mxu0 %v2180
        %2269 = vmatpush1.bf16.msra.mxu0 %v2179
        %2270 = vmatprep.subr.bf16.mxu0 0
        %2271 = vmatpush1.bf16.msra.mxu0 0
        %2272 = vmatprep.subr.bf16.mxu0 0
        %2273 = vmatpush1.bf16.msra.mxu0 0
        %2274 = vmatprep.subr.bf16.mxu0 0
        %2275 = vmatpush1.bf16.msra.mxu0 0
        %2276 = vmatprep.subr.bf16.mxu0 0
        %2277 = vmatpush1.bf16.msra.mxu0 0
        %2278 = vmatprep.subr.bf16.mxu0 0
        %2279 = vmatpush1.bf16.msra.mxu0 0
        %2280 = vmatprep.subr.bf16.mxu0 0
        %2281 = vmatpush1.bf16.msra.mxu0 0
        %2282 = vmatprep.subr.bf16.mxu0 0
        %2283 = vmatpush1.bf16.msra.mxu0 0
        %2284 = vmatprep.subr.bf16.mxu0 0
        %2285 = vmatpush1.bf16.msra.mxu0 0
        %2286 = vmatprep.mubr.bf16.mxu0 0
        %2287 = vmatmul.mubr.bf16.gmra.mrb[0].mxu0 %v2020
        %v2288 = vpop.f32.mrb[0].mxu0
        %v2289 = vadd.f32 0.0, %v2288
        %v2290 = vpop.f32.mrb[0].mxu0
        %v2291 = vadd.f32 0.0, %v2290
        %v2292 = vpop.f32.mrb[0].mxu0
        %v2293 = vpop.f32.mrb[0].mxu0
        %2294 = vdwg.mxu0
        %v2295 = vadd.f32 %v2015, %v2248
        %v2296 = vadd.f32 %v2016, %v2250
        %v2297 = vadd.f32 %v2017, %v2289
        %v2298 = vadd.f32 %v2018, %v2291
        %v2299 = vxor.u32 %v2295, 2147483648
        %v2300 = vmul.f32 %v2299, 1.442695
        %v2301 = vpow.pop %v2300
        %v2302 = vadd.f32 %v2301, 1.0
        %v2303 = vrcp.pop %v2302
        %v2304 = vmul.f32 1.0, %v2303
        %v2305 = vxor.u32 %v2296, 2147483648
        %v2306 = vmul.f32 %v2305, 1.442695
        %v2307 = vpow.pop %v2306
        %v2308 = vadd.f32 %v2307, 1.0
        %v2309 = vrcp.pop %v2308
        %v2310 = vmul.f32 1.0, %v2309
        %v2311 = vtanh.pop %v2297
        %v2312 = vxor.u32 %v2298, 2147483648
        %v2313 = vmul.f32 %v2312, 1.442695
        %v2314 = vpow.pop %v2313
        %v2315 = vadd.f32 %v2314, 1.0
        %v2316 = vrcp.pop %v2315
        %v2317 = vmul.f32 1.0, %v2316
        %v2318 = vld [vmem:[#allocation5] sm:$0xff]
        %v2319 = vmul.f32 %v2310, %v2318
        %v2320 = vmul.f32 %v2304, %v2311
        %v2321 = vadd.f32 %v2319, %v2320
        %v2322 = vtanh.pop %v2321
        %v2323 = vmul.f32 %v2317, %v2322
        %2324 = vst [vmem:[#allocation5] sm:$0xff] %v2321
        %2325 = vst [vmem:[#allocation4] sm:$0xff] %v2323
        %s2326 = scalar_lea.vmem [#allocation2], 16
        %2327 = vst [vmem:[%s2326] sm:$0xff] %v2323
        %s2328 = smul.u32 3, 4
        %s2329 = smul.addr %s2328, 8
        %s2330 = scalar_lea.vmem [#allocation3], %s2329
        %v2331 = vld [vmem:[%s2330] sm:$0xff]
        %v2332 = vld [vmem:[%s2330 + $0x8] sm:$0xff]
        %v2333 = vld [vmem:[%s2330 + $0x10] sm:$0xff]
        %v2334 = vld [vmem:[%s2330 + $0x18] sm:$0xff]
        %v2335 = vld [vmem:[#allocation4] sm:$0xff]
        %v2336 = vpack.c.bf16 %v2335, %v2335
        %v2337 = vld [vmem:[%s453] sm:$0xff]
        %v2338 = vld [vmem:[%s453 + $0x8] sm:$0xff]
        %v2339 = vld [vmem:[%s453 + $0x10] sm:$0xff]
        %v2340 = vld [vmem:[%s453 + $0x18] sm:$0xff]
        %v2341 = vld [vmem:[%s453 + $0x20] sm:$0xff]
        %v2342 = vld [vmem:[%s453 + $0x28] sm:$0xff]
        %v2343 = vld [vmem:[%s453 + $0x30] sm:$0xff]
        %v2344 = vld [vmem:[%s453 + $0x38] sm:$0xff]
        %v2345 = vld [vmem:[%s453 + $0x40] sm:$0xff]
        %v2346 = vld [vmem:[%s453 + $0x48] sm:$0xff]
        %v2347 = vld [vmem:[%s453 + $0x50] sm:$0xff]
        %v2348 = vld [vmem:[%s453 + $0x58] sm:$0xff]
        %v2349 = vld [vmem:[%s453 + $0x60] sm:$0xff]
        %v2350 = vld [vmem:[%s453 + $0x68] sm:$0xff]
        %v2351 = vld [vmem:[%s453 + $0x70] sm:$0xff]
        %v2352 = vld [vmem:[%s453 + $0x78] sm:$0xff]
        %v2353 = vld [vmem:[%s453 + $0x80] sm:$0xff]
        %v2354 = vld [vmem:[%s453 + $0x88] sm:$0xff]
        %v2355 = vld [vmem:[%s453 + $0x90] sm:$0xff]
        %v2356 = vld [vmem:[%s453 + $0x98] sm:$0xff]
        %v2357 = vld [vmem:[%s453 + $0xa0] sm:$0xff]
        %v2358 = vld [vmem:[%s453 + $0xa8] sm:$0xff]
        %v2359 = vld [vmem:[%s453 + $0xb0] sm:$0xff]
        %v2360 = vld [vmem:[%s453 + $0xb8] sm:$0xff]
        %v2361 = vld [vmem:[%s453 + $0xc0] sm:$0xff]
        %v2362 = vld [vmem:[%s453 + $0xc8] sm:$0xff]
        %v2363 = vld [vmem:[%s453 + $0xd0] sm:$0xff]
        %v2364 = vld [vmem:[%s453 + $0xd8] sm:$0xff]
        %v2365 = vld [vmem:[%s453 + $0xe0] sm:$0xff]
        %v2366 = vld [vmem:[%s453 + $0xe8] sm:$0xff]
        %v2367 = vld [vmem:[%s453 + $0xf0] sm:$0xff]
        %v2368 = vld [vmem:[%s453 + $0xf8] sm:$0xff]
        %v2401 = vunpack.c.l.b16 %v2337
        %v2402 = vunpack.c.h.b16 %v2337
        %v2403 = vunpack.c.l.b16 %v2338
        %v2404 = vunpack.c.h.b16 %v2338
        %v2405 = vunpack.c.l.b16 %v2339
        %v2406 = vunpack.c.h.b16 %v2339
        %v2407 = vunpack.c.l.b16 %v2340
        %v2408 = vunpack.c.h.b16 %v2340
        %v2409 = vunpack.c.l.b16 %v2341
        %v2410 = vunpack.c.h.b16 %v2341
        %v2411 = vunpack.c.l.b16 %v2342
        %v2412 = vunpack.c.h.b16 %v2342
        %v2413 = vunpack.c.l.b16 %v2343
        %v2414 = vunpack.c.h.b16 %v2343
        %v2415 = vunpack.c.l.b16 %v2344
        %v2416 = vunpack.c.h.b16 %v2344
        %v2417 = vunpack.c.l.b16 %v2345
        %v2418 = vunpack.c.h.b16 %v2345
        %v2419 = vunpack.c.l.b16 %v2346
        %v2420 = vunpack.c.h.b16 %v2346
        %v2421 = vunpack.c.l.b16 %v2347
        %v2422 = vunpack.c.h.b16 %v2347
        %v2423 = vunpack.c.l.b16 %v2348
        %v2424 = vunpack.c.h.b16 %v2348
        %v2425 = vunpack.c.l.b16 %v2349
        %v2426 = vunpack.c.h.b16 %v2349
        %v2427 = vunpack.c.l.b16 %v2350
        %v2428 = vunpack.c.h.b16 %v2350
        %v2429 = vunpack.c.l.b16 %v2351
        %v2430 = vunpack.c.h.b16 %v2351
        %v2431 = vunpack.c.l.b16 %v2352
        %v2432 = vunpack.c.h.b16 %v2352
        %v2433 = vunpack.c.l.b16 %v2353
        %v2434 = vunpack.c.h.b16 %v2353
        %v2435 = vunpack.c.l.b16 %v2354
        %v2436 = vunpack.c.h.b16 %v2354
        %v2437 = vunpack.c.l.b16 %v2355
        %v2438 = vunpack.c.h.b16 %v2355
        %v2439 = vunpack.c.l.b16 %v2356
        %v2440 = vunpack.c.h.b16 %v2356
        %v2441 = vunpack.c.l.b16 %v2357
        %v2442 = vunpack.c.h.b16 %v2357
        %v2443 = vunpack.c.l.b16 %v2358
        %v2444 = vunpack.c.h.b16 %v2358
        %v2445 = vunpack.c.l.b16 %v2359
        %v2446 = vunpack.c.h.b16 %v2359
        %v2447 = vunpack.c.l.b16 %v2360
        %v2448 = vunpack.c.h.b16 %v2360
        %v2449 = vunpack.c.l.b16 %v2361
        %v2450 = vunpack.c.h.b16 %v2361
        %v2451 = vunpack.c.l.b16 %v2362
        %v2452 = vunpack.c.h.b16 %v2362
        %v2453 = vunpack.c.l.b16 %v2363
        %v2454 = vunpack.c.h.b16 %v2363
        %v2455 = vunpack.c.l.b16 %v2364
        %v2456 = vunpack.c.h.b16 %v2364
        %v2457 = vunpack.c.l.b16 %v2365
        %v2458 = vunpack.c.h.b16 %v2365
        %v2459 = vunpack.c.l.b16 %v2366
        %v2460 = vunpack.c.h.b16 %v2366
        %v2461 = vunpack.c.l.b16 %v2367
        %v2462 = vunpack.c.h.b16 %v2367
        %v2463 = vunpack.c.l.b16 %v2368
        %v2464 = vunpack.c.h.b16 %v2368
        %v2465 = vpack.c.b16 %v2405, %v2401
        %v2466 = vpack.c.b16 %v2406, %v2402
        %v2467 = vpack.c.b16 %v2407, %v2403
        %v2468 = vpack.c.b16 %v2408, %v2404
        %v2469 = vpack.c.b16 %v2413, %v2409
        %v2470 = vpack.c.b16 %v2414, %v2410
        %v2471 = vpack.c.b16 %v2415, %v2411
        %v2472 = vpack.c.b16 %v2416, %v2412
        %v2473 = vpack.c.b16 %v2421, %v2417
        %v2474 = vpack.c.b16 %v2422, %v2418
        %v2475 = vpack.c.b16 %v2423, %v2419
        %v2476 = vpack.c.b16 %v2424, %v2420
        %v2477 = vpack.c.b16 %v2429, %v2425
        %v2478 = vpack.c.b16 %v2430, %v2426
        %v2479 = vpack.c.b16 %v2431, %v2427
        %v2480 = vpack.c.b16 %v2432, %v2428
        %v2481 = vpack.c.b16 %v2437, %v2433
        %v2482 = vpack.c.b16 %v2438, %v2434
        %v2483 = vpack.c.b16 %v2439, %v2435
        %v2484 = vpack.c.b16 %v2440, %v2436
        %v2485 = vpack.c.b16 %v2445, %v2441
        %v2486 = vpack.c.b16 %v2446, %v2442
        %v2487 = vpack.c.b16 %v2447, %v2443
        %v2488 = vpack.c.b16 %v2448, %v2444
        %v2489 = vpack.c.b16 %v2453, %v2449
        %v2490 = vpack.c.b16 %v2454, %v2450
        %v2491 = vpack.c.b16 %v2455, %v2451
        %v2492 = vpack.c.b16 %v2456, %v2452
        %v2493 = vpack.c.b16 %v2461, %v2457
        %v2494 = vpack.c.b16 %v2462, %v2458
        %v2495 = vpack.c.b16 %v2463, %v2459
        %v2496 = vpack.c.b16 %v2464, %v2460
        %2529 = vmatprep.subr.bf16.mxu0 %v2466
        %2530 = vmatpush1.bf16.msra.mxu0 %v2465
        %2531 = vmatprep.subr.bf16.mxu0 %v2470
        %2532 = vmatpush1.bf16.msra.mxu0 %v2469
        %2533 = vmatprep.subr.bf16.mxu0 %v2474
        %2534 = vmatpush1.bf16.msra.mxu0 %v2473
        %2535 = vmatprep.subr.bf16.mxu0 %v2478
        %2536 = vmatpush1.bf16.msra.mxu0 %v2477
        %2537 = vmatprep.subr.bf16.mxu0 %v2482
        %2538 = vmatpush1.bf16.msra.mxu0 %v2481
        %2539 = vmatprep.subr.bf16.mxu0 %v2486
        %2540 = vmatpush1.bf16.msra.mxu0 %v2485
        %2541 = vmatprep.subr.bf16.mxu0 %v2490
        %2542 = vmatpush1.bf16.msra.mxu0 %v2489
        %2543 = vmatprep.subr.bf16.mxu0 %v2494
        %2544 = vmatpush1.bf16.msra.mxu0 %v2493
        %2545 = vmatprep.subr.bf16.mxu0 0
        %2546 = vmatpush1.bf16.msra.mxu0 0
        %2547 = vmatprep.subr.bf16.mxu0 0
        %2548 = vmatpush1.bf16.msra.mxu0 0
        %2549 = vmatprep.subr.bf16.mxu0 0
        %2550 = vmatpush1.bf16.msra.mxu0 0
        %2551 = vmatprep.subr.bf16.mxu0 0
        %2552 = vmatpush1.bf16.msra.mxu0 0
        %2553 = vmatprep.subr.bf16.mxu0 0
        %2554 = vmatpush1.bf16.msra.mxu0 0
        %2555 = vmatprep.subr.bf16.mxu0 0
        %2556 = vmatpush1.bf16.msra.mxu0 0
        %2557 = vmatprep.subr.bf16.mxu0 0
        %2558 = vmatpush1.bf16.msra.mxu0 0
        %2559 = vmatprep.subr.bf16.mxu0 0
        %2560 = vmatpush1.bf16.msra.mxu0 0
        %2561 = vmatprep.mubr.bf16.mxu0 0
        %2562 = vmatmul.mubr.bf16.gmra.mrb[0].mxu0 %v2336
        %v2563 = vpop.f32.mrb[0].mxu0
        %v2564 = vadd.f32 0.0, %v2563
        %v2565 = vpop.f32.mrb[0].mxu0
        %v2566 = vadd.f32 0.0, %v2565
        %v2567 = vpop.f32.mrb[0].mxu0
        %v2568 = vpop.f32.mrb[0].mxu0
        %2569 = vdwg.mxu0
        %2570 = vmatprep.subr.bf16.mxu0 %v2468
        %2571 = vmatpush1.bf16.msra.mxu0 %v2467
        %2572 = vmatprep.subr.bf16.mxu0 %v2472
        %2573 = vmatpush1.bf16.msra.mxu0 %v2471
        %2574 = vmatprep.subr.bf16.mxu0 %v2476
        %2575 = vmatpush1.bf16.msra.mxu0 %v2475
        %2576 = vmatprep.subr.bf16.mxu0 %v2480
        %2577 = vmatpush1.bf16.msra.mxu0 %v2479
        %2578 = vmatprep.subr.bf16.mxu0 %v2484
        %2579 = vmatpush1.bf16.msra.mxu0 %v2483
        %2580 = vmatprep.subr.bf16.mxu0 %v2488
        %2581 = vmatpush1.bf16.msra.mxu0 %v2487
        %2582 = vmatprep.subr.bf16.mxu0 %v2492
        %2583 = vmatpush1.bf16.msra.mxu0 %v2491
        %2584 = vmatprep.subr.bf16.mxu0 %v2496
        %2585 = vmatpush1.bf16.msra.mxu0 %v2495
        %2586 = vmatprep.subr.bf16.mxu0 0
        %2587 = vmatpush1.bf16.msra.mxu0 0
        %2588 = vmatprep.subr.bf16.mxu0 0
        %2589 = vmatpush1.bf16.msra.mxu0 0
        %2590 = vmatprep.subr.bf16.mxu0 0
        %2591 = vmatpush1.bf16.msra.mxu0 0
        %2592 = vmatprep.subr.bf16.mxu0 0
        %2593 = vmatpush1.bf16.msra.mxu0 0
        %2594 = vmatprep.subr.bf16.mxu0 0
        %2595 = vmatpush1.bf16.msra.mxu0 0
        %2596 = vmatprep.subr.bf16.mxu0 0
        %2597 = vmatpush1.bf16.msra.mxu0 0
        %2598 = vmatprep.subr.bf16.mxu0 0
        %2599 = vmatpush1.bf16.msra.mxu0 0
        %2600 = vmatprep.subr.bf16.mxu0 0
        %2601 = vmatpush1.bf16.msra.mxu0 0
        %2602 = vmatprep.mubr.bf16.mxu0 0
        %2603 = vmatmul.mubr.bf16.gmra.mrb[0].mxu0 %v2336
        %v2604 = vpop.f32.mrb[0].mxu0
        %v2605 = vadd.f32 0.0, %v2604
        %v2606 = vpop.f32.mrb[0].mxu0
        %v2607 = vadd.f32 0.0, %v2606
        %v2608 = vpop.f32.mrb[0].mxu0
        %v2609 = vpop.f32.mrb[0].mxu0
        %2610 = vdwg.mxu0
        %v2611 = vadd.f32 %v2331, %v2564
        %v2612 = vadd.f32 %v2332, %v2566
        %v2613 = vadd.f32 %v2333, %v2605
        %v2614 = vadd.f32 %v2334, %v2607
        %v2615 = vxor.u32 %v2611, 2147483648
        %v2616 = vmul.f32 %v2615, 1.442695
        %v2617 = vpow.pop %v2616
        %v2618 = vadd.f32 %v2617, 1.0
        %v2619 = vrcp.pop %v2618
        %v2620 = vmul.f32 1.0, %v2619
        %v2621 = vxor.u32 %v2612, 2147483648
        %v2622 = vmul.f32 %v2621, 1.442695
        %v2623 = vpow.pop %v2622
        %v2624 = vadd.f32 %v2623, 1.0
        %v2625 = vrcp.pop %v2624
        %v2626 = vmul.f32 1.0, %v2625
        %v2627 = vtanh.pop %v2613
        %v2628 = vxor.u32 %v2614, 2147483648
        %v2629 = vmul.f32 %v2628, 1.442695
        %v2630 = vpow.pop %v2629
        %v2631 = vadd.f32 %v2630, 1.0
        %v2632 = vrcp.pop %v2631
        %v2633 = vmul.f32 1.0, %v2632
        %v2634 = vld [vmem:[#allocation5] sm:$0xff]
        %v2635 = vmul.f32 %v2626, %v2634
        %v2636 = vmul.f32 %v2620, %v2627
        %v2637 = vadd.f32 %v2635, %v2636
        %v2638 = vtanh.pop %v2637
        %v2639 = vmul.f32 %v2633, %v2638
        %2640 = vst [vmem:[#allocation5] sm:$0xff] %v2637
        %2641 = vst [vmem:[#allocation4] sm:$0xff] %v2639
        %s2642 = scalar_lea.vmem [#allocation2], 24
        %2643 = vst [vmem:[%s2642] sm:$0xff] %v2639
        %s2644 = smul.u32 4, 4
        %s2645 = smul.addr %s2644, 8
        %s2646 = scalar_lea.vmem [#allocation3], %s2645
        %v2647 = vld [vmem:[%s2646] sm:$0xff]
        %v2648 = vld [vmem:[%s2646 + $0x8] sm:$0xff]
        %v2649 = vld [vmem:[%s2646 + $0x10] sm:$0xff]
        %v2650 = vld [vmem:[%s2646 + $0x18] sm:$0xff]
        %v2651 = vld [vmem:[#allocation4] sm:$0xff]
        %v2652 = vpack.c.bf16 %v2651, %v2651
        %v2653 = vld [vmem:[%s453] sm:$0xff]
        %v2654 = vld [vmem:[%s453 + $0x8] sm:$0xff]
        %v2655 = vld [vmem:[%s453 + $0x10] sm:$0xff]
        %v2656 = vld [vmem:[%s453 + $0x18] sm:$0xff]
        %v2657 = vld [vmem:[%s453 + $0x20] sm:$0xff]
        %v2658 = vld [vmem:[%s453 + $0x28] sm:$0xff]
        %v2659 = vld [vmem:[%s453 + $0x30] sm:$0xff]
        %v2660 = vld [vmem:[%s453 + $0x38] sm:$0xff]
        %v2661 = vld [vmem:[%s453 + $0x40] sm:$0xff]
        %v2662 = vld [vmem:[%s453 + $0x48] sm:$0xff]
        %v2663 = vld [vmem:[%s453 + $0x50] sm:$0xff]
        %v2664 = vld [vmem:[%s453 + $0x58] sm:$0xff]
        %v2665 = vld [vmem:[%s453 + $0x60] sm:$0xff]
        %v2666 = vld [vmem:[%s453 + $0x68] sm:$0xff]
        %v2667 = vld [vmem:[%s453 + $0x70] sm:$0xff]
        %v2668 = vld [vmem:[%s453 + $0x78] sm:$0xff]
        %v2669 = vld [vmem:[%s453 + $0x80] sm:$0xff]
        %v2670 = vld [vmem:[%s453 + $0x88] sm:$0xff]
        %v2671 = vld [vmem:[%s453 + $0x90] sm:$0xff]
        %v2672 = vld [vmem:[%s453 + $0x98] sm:$0xff]
        %v2673 = vld [vmem:[%s453 + $0xa0] sm:$0xff]
        %v2674 = vld [vmem:[%s453 + $0xa8] sm:$0xff]
        %v2675 = vld [vmem:[%s453 + $0xb0] sm:$0xff]
        %v2676 = vld [vmem:[%s453 + $0xb8] sm:$0xff]
        %v2677 = vld [vmem:[%s453 + $0xc0] sm:$0xff]
        %v2678 = vld [vmem:[%s453 + $0xc8] sm:$0xff]
        %v2679 = vld [vmem:[%s453 + $0xd0] sm:$0xff]
        %v2680 = vld [vmem:[%s453 + $0xd8] sm:$0xff]
        %v2681 = vld [vmem:[%s453 + $0xe0] sm:$0xff]
        %v2682 = vld [vmem:[%s453 + $0xe8] sm:$0xff]
        %v2683 = vld [vmem:[%s453 + $0xf0] sm:$0xff]
        %v2684 = vld [vmem:[%s453 + $0xf8] sm:$0xff]
        %v2717 = vunpack.c.l.b16 %v2653
        %v2718 = vunpack.c.h.b16 %v2653
        %v2719 = vunpack.c.l.b16 %v2654
        %v2720 = vunpack.c.h.b16 %v2654
        %v2721 = vunpack.c.l.b16 %v2655
        %v2722 = vunpack.c.h.b16 %v2655
        %v2723 = vunpack.c.l.b16 %v2656
        %v2724 = vunpack.c.h.b16 %v2656
        %v2725 = vunpack.c.l.b16 %v2657
        %v2726 = vunpack.c.h.b16 %v2657
        %v2727 = vunpack.c.l.b16 %v2658
        %v2728 = vunpack.c.h.b16 %v2658
        %v2729 = vunpack.c.l.b16 %v2659
        %v2730 = vunpack.c.h.b16 %v2659
        %v2731 = vunpack.c.l.b16 %v2660
        %v2732 = vunpack.c.h.b16 %v2660
        %v2733 = vunpack.c.l.b16 %v2661
        %v2734 = vunpack.c.h.b16 %v2661
        %v2735 = vunpack.c.l.b16 %v2662
        %v2736 = vunpack.c.h.b16 %v2662
        %v2737 = vunpack.c.l.b16 %v2663
        %v2738 = vunpack.c.h.b16 %v2663
        %v2739 = vunpack.c.l.b16 %v2664
        %v2740 = vunpack.c.h.b16 %v2664
        %v2741 = vunpack.c.l.b16 %v2665
        %v2742 = vunpack.c.h.b16 %v2665
        %v2743 = vunpack.c.l.b16 %v2666
        %v2744 = vunpack.c.h.b16 %v2666
        %v2745 = vunpack.c.l.b16 %v2667
        %v2746 = vunpack.c.h.b16 %v2667
        %v2747 = vunpack.c.l.b16 %v2668
        %v2748 = vunpack.c.h.b16 %v2668
        %v2749 = vunpack.c.l.b16 %v2669
        %v2750 = vunpack.c.h.b16 %v2669
        %v2751 = vunpack.c.l.b16 %v2670
        %v2752 = vunpack.c.h.b16 %v2670
        %v2753 = vunpack.c.l.b16 %v2671
        %v2754 = vunpack.c.h.b16 %v2671
        %v2755 = vunpack.c.l.b16 %v2672
        %v2756 = vunpack.c.h.b16 %v2672
        %v2757 = vunpack.c.l.b16 %v2673
        %v2758 = vunpack.c.h.b16 %v2673
        %v2759 = vunpack.c.l.b16 %v2674
        %v2760 = vunpack.c.h.b16 %v2674
        %v2761 = vunpack.c.l.b16 %v2675
        %v2762 = vunpack.c.h.b16 %v2675
        %v2763 = vunpack.c.l.b16 %v2676
        %v2764 = vunpack.c.h.b16 %v2676
        %v2765 = vunpack.c.l.b16 %v2677
        %v2766 = vunpack.c.h.b16 %v2677
        %v2767 = vunpack.c.l.b16 %v2678
        %v2768 = vunpack.c.h.b16 %v2678
        %v2769 = vunpack.c.l.b16 %v2679
        %v2770 = vunpack.c.h.b16 %v2679
        %v2771 = vunpack.c.l.b16 %v2680
        %v2772 = vunpack.c.h.b16 %v2680
        %v2773 = vunpack.c.l.b16 %v2681
        %v2774 = vunpack.c.h.b16 %v2681
        %v2775 = vunpack.c.l.b16 %v2682
        %v2776 = vunpack.c.h.b16 %v2682
        %v2777 = vunpack.c.l.b16 %v2683
        %v2778 = vunpack.c.h.b16 %v2683
        %v2779 = vunpack.c.l.b16 %v2684
        %v2780 = vunpack.c.h.b16 %v2684
        %v2781 = vpack.c.b16 %v2721, %v2717
        %v2782 = vpack.c.b16 %v2722, %v2718
        %v2783 = vpack.c.b16 %v2723, %v2719
        %v2784 = vpack.c.b16 %v2724, %v2720
        %v2785 = vpack.c.b16 %v2729, %v2725
        %v2786 = vpack.c.b16 %v2730, %v2726
        %v2787 = vpack.c.b16 %v2731, %v2727
        %v2788 = vpack.c.b16 %v2732, %v2728
        %v2789 = vpack.c.b16 %v2737, %v2733
        %v2790 = vpack.c.b16 %v2738, %v2734
        %v2791 = vpack.c.b16 %v2739, %v2735
        %v2792 = vpack.c.b16 %v2740, %v2736
        %v2793 = vpack.c.b16 %v2745, %v2741
        %v2794 = vpack.c.b16 %v2746, %v2742
        %v2795 = vpack.c.b16 %v2747, %v2743
        %v2796 = vpack.c.b16 %v2748, %v2744
        %v2797 = vpack.c.b16 %v2753, %v2749
        %v2798 = vpack.c.b16 %v2754, %v2750
        %v2799 = vpack.c.b16 %v2755, %v2751
        %v2800 = vpack.c.b16 %v2756, %v2752
        %v2801 = vpack.c.b16 %v2761, %v2757
        %v2802 = vpack.c.b16 %v2762, %v2758
        %v2803 = vpack.c.b16 %v2763, %v2759
        %v2804 = vpack.c.b16 %v2764, %v2760
        %v2805 = vpack.c.b16 %v2769, %v2765
        %v2806 = vpack.c.b16 %v2770, %v2766
        %v2807 = vpack.c.b16 %v2771, %v2767
        %v2808 = vpack.c.b16 %v2772, %v2768
        %v2809 = vpack.c.b16 %v2777, %v2773
        %v2810 = vpack.c.b16 %v2778, %v2774
        %v2811 = vpack.c.b16 %v2779, %v2775
        %v2812 = vpack.c.b16 %v2780, %v2776
        %2845 = vmatprep.subr.bf16.mxu0 %v2782
        %2846 = vmatpush1.bf16.msra.mxu0 %v2781
        %2847 = vmatprep.subr.bf16.mxu0 %v2786
        %2848 = vmatpush1.bf16.msra.mxu0 %v2785
        %2849 = vmatprep.subr.bf16.mxu0 %v2790
        %2850 = vmatpush1.bf16.msra.mxu0 %v2789
        %2851 = vmatprep.subr.bf16.mxu0 %v2794
        %2852 = vmatpush1.bf16.msra.mxu0 %v2793
        %2853 = vmatprep.subr.bf16.mxu0 %v2798
        %2854 = vmatpush1.bf16.msra.mxu0 %v2797
        %2855 = vmatprep.subr.bf16.mxu0 %v2802
        %2856 = vmatpush1.bf16.msra.mxu0 %v2801
        %2857 = vmatprep.subr.bf16.mxu0 %v2806
        %2858 = vmatpush1.bf16.msra.mxu0 %v2805
        %2859 = vmatprep.subr.bf16.mxu0 %v2810
        %2860 = vmatpush1.bf16.msra.mxu0 %v2809
        %2861 = vmatprep.subr.bf16.mxu0 0
        %2862 = vmatpush1.bf16.msra.mxu0 0
        %2863 = vmatprep.subr.bf16.mxu0 0
        %2864 = vmatpush1.bf16.msra.mxu0 0
        %2865 = vmatprep.subr.bf16.mxu0 0
        %2866 = vmatpush1.bf16.msra.mxu0 0
        %2867 = vmatprep.subr.bf16.mxu0 0
        %2868 = vmatpush1.bf16.msra.mxu0 0
        %2869 = vmatprep.subr.bf16.mxu0 0
        %2870 = vmatpush1.bf16.msra.mxu0 0
        %2871 = vmatprep.subr.bf16.mxu0 0
        %2872 = vmatpush1.bf16.msra.mxu0 0
        %2873 = vmatprep.subr.bf16.mxu0 0
        %2874 = vmatpush1.bf16.msra.mxu0 0
        %2875 = vmatprep.subr.bf16.mxu0 0
        %2876 = vmatpush1.bf16.msra.mxu0 0
        %2877 = vmatprep.mubr.bf16.mxu0 0
        %2878 = vmatmul.mubr.bf16.gmra.mrb[0].mxu0 %v2652
        %v2879 = vpop.f32.mrb[0].mxu0
        %v2880 = vadd.f32 0.0, %v2879
        %v2881 = vpop.f32.mrb[0].mxu0
        %v2882 = vadd.f32 0.0, %v2881
        %v2883 = vpop.f32.mrb[0].mxu0
        %v2884 = vpop.f32.mrb[0].mxu0
        %2885 = vdwg.mxu0
        %2886 = vmatprep.subr.bf16.mxu0 %v2784
        %2887 = vmatpush1.bf16.msra.mxu0 %v2783
        %2888 = vmatprep.subr.bf16.mxu0 %v2788
        %2889 = vmatpush1.bf16.msra.mxu0 %v2787
        %2890 = vmatprep.subr.bf16.mxu0 %v2792
        %2891 = vmatpush1.bf16.msra.mxu0 %v2791
        %2892 = vmatprep.subr.bf16.mxu0 %v2796
        %2893 = vmatpush1.bf16.msra.mxu0 %v2795
        %2894 = vmatprep.subr.bf16.mxu0 %v2800
        %2895 = vmatpush1.bf16.msra.mxu0 %v2799
        %2896 = vmatprep.subr.bf16.mxu0 %v2804
        %2897 = vmatpush1.bf16.msra.mxu0 %v2803
        %2898 = vmatprep.subr.bf16.mxu0 %v2808
        %2899 = vmatpush1.bf16.msra.mxu0 %v2807
        %2900 = vmatprep.subr.bf16.mxu0 %v2812
        %2901 = vmatpush1.bf16.msra.mxu0 %v2811
        %2902 = vmatprep.subr.bf16.mxu0 0
        %2903 = vmatpush1.bf16.msra.mxu0 0
        %2904 = vmatprep.subr.bf16.mxu0 0
        %2905 = vmatpush1.bf16.msra.mxu0 0
        %2906 = vmatprep.subr.bf16.mxu0 0
        %2907 = vmatpush1.bf16.msra.mxu0 0
        %2908 = vmatprep.subr.bf16.mxu0 0
        %2909 = vmatpush1.bf16.msra.mxu0 0
        %2910 = vmatprep.subr.bf16.mxu0 0
        %2911 = vmatpush1.bf16.msra.mxu0 0
        %2912 = vmatprep.subr.bf16.mxu0 0
        %2913 = vmatpush1.bf16.msra.mxu0 0
        %2914 = vmatprep.subr.bf16.mxu0 0
        %2915 = vmatpush1.bf16.msra.mxu0 0
        %2916 = vmatprep.subr.bf16.mxu0 0
        %2917 = vmatpush1.bf16.msra.mxu0 0
        %2918 = vmatprep.mubr.bf16.mxu0 0
        %2919 = vmatmul.mubr.bf16.gmra.mrb[0].mxu0 %v2652
        %v2920 = vpop.f32.mrb[0].mxu0
        %v2921 = vadd.f32 0.0, %v2920
        %v2922 = vpop.f32.mrb[0].mxu0
        %v2923 = vadd.f32 0.0, %v2922
        %v2924 = vpop.f32.mrb[0].mxu0
        %v2925 = vpop.f32.mrb[0].mxu0
        %2926 = vdwg.mxu0
        %v2927 = vadd.f32 %v2647, %v2880
        %v2928 = vadd.f32 %v2648, %v2882
        %v2929 = vadd.f32 %v2649, %v2921
        %v2930 = vadd.f32 %v2650, %v2923
        %v2931 = vxor.u32 %v2927, 2147483648
        %v2932 = vmul.f32 %v2931, 1.442695
        %v2933 = vpow.pop %v2932
        %v2934 = vadd.f32 %v2933, 1.0
        %v2935 = vrcp.pop %v2934
        %v2936 = vmul.f32 1.0, %v2935
        %v2937 = vxor.u32 %v2928, 2147483648
        %v2938 = vmul.f32 %v2937, 1.442695
        %v2939 = vpow.pop %v2938
        %v2940 = vadd.f32 %v2939, 1.0
        %v2941 = vrcp.pop %v2940
        %v2942 = vmul.f32 1.0, %v2941
        %v2943 = vtanh.pop %v2929
        %v2944 = vxor.u32 %v2930, 2147483648
        %v2945 = vmul.f32 %v2944, 1.442695
        %v2946 = vpow.pop %v2945
        %v2947 = vadd.f32 %v2946, 1.0
        %v2948 = vrcp.pop %v2947
        %v2949 = vmul.f32 1.0, %v2948
        %v2950 = vld [vmem:[#allocation5] sm:$0xff]
        %v2951 = vmul.f32 %v2942, %v2950
        %v2952 = vmul.f32 %v2936, %v2943
        %v2953 = vadd.f32 %v2951, %v2952
        %v2954 = vtanh.pop %v2953
        %v2955 = vmul.f32 %v2949, %v2954
        %2956 = vst [vmem:[#allocation5] sm:$0xff] %v2953
        %2957 = vst [vmem:[#allocation4] sm:$0xff] %v2955
        %s2958 = scalar_lea.vmem [#allocation2], 32
        %2959 = vst [vmem:[%s2958] sm:$0xff] %v2955
        %s2960 = smul.u32 5, 4
        %s2961 = smul.addr %s2960, 8
        %s2962 = scalar_lea.vmem [#allocation3], %s2961
        %v2963 = vld [vmem:[%s2962] sm:$0xff]
        %v2964 = vld [vmem:[%s2962 + $0x8] sm:$0xff]
        %v2965 = vld [vmem:[%s2962 + $0x10] sm:$0xff]
        %v2966 = vld [vmem:[%s2962 + $0x18] sm:$0xff]
        %v2967 = vld [vmem:[#allocation4] sm:$0xff]
        %v2968 = vpack.c.bf16 %v2967, %v2967
        %v2969 = vld [vmem:[%s453] sm:$0xff]
        %v2970 = vld [vmem:[%s453 + $0x8] sm:$0xff]
        %v2971 = vld [vmem:[%s453 + $0x10] sm:$0xff]
        %v2972 = vld [vmem:[%s453 + $0x18] sm:$0xff]
        %v2973 = vld [vmem:[%s453 + $0x20] sm:$0xff]
        %v2974 = vld [vmem:[%s453 + $0x28] sm:$0xff]
        %v2975 = vld [vmem:[%s453 + $0x30] sm:$0xff]
        %v2976 = vld [vmem:[%s453 + $0x38] sm:$0xff]
        %v2977 = vld [vmem:[%s453 + $0x40] sm:$0xff]
        %v2978 = vld [vmem:[%s453 + $0x48] sm:$0xff]
        %v2979 = vld [vmem:[%s453 + $0x50] sm:$0xff]
        %v2980 = vld [vmem:[%s453 + $0x58] sm:$0xff]
        %v2981 = vld [vmem:[%s453 + $0x60] sm:$0xff]
        %v2982 = vld [vmem:[%s453 + $0x68] sm:$0xff]
        %v2983 = vld [vmem:[%s453 + $0x70] sm:$0xff]
        %v2984 = vld [vmem:[%s453 + $0x78] sm:$0xff]
        %v2985 = vld [vmem:[%s453 + $0x80] sm:$0xff]
        %v2986 = vld [vmem:[%s453 + $0x88] sm:$0xff]
        %v2987 = vld [vmem:[%s453 + $0x90] sm:$0xff]
        %v2988 = vld [vmem:[%s453 + $0x98] sm:$0xff]
        %v2989 = vld [vmem:[%s453 + $0xa0] sm:$0xff]
        %v2990 = vld [vmem:[%s453 + $0xa8] sm:$0xff]
        %v2991 = vld [vmem:[%s453 + $0xb0] sm:$0xff]
        %v2992 = vld [vmem:[%s453 + $0xb8] sm:$0xff]
        %v2993 = vld [vmem:[%s453 + $0xc0] sm:$0xff]
        %v2994 = vld [vmem:[%s453 + $0xc8] sm:$0xff]
        %v2995 = vld [vmem:[%s453 + $0xd0] sm:$0xff]
        %v2996 = vld [vmem:[%s453 + $0xd8] sm:$0xff]
        %v2997 = vld [vmem:[%s453 + $0xe0] sm:$0xff]
        %v2998 = vld [vmem:[%s453 + $0xe8] sm:$0xff]
        %v2999 = vld [vmem:[%s453 + $0xf0] sm:$0xff]
        %v3000 = vld [vmem:[%s453 + $0xf8] sm:$0xff]
        %v3033 = vunpack.c.l.b16 %v2969
        %v3034 = vunpack.c.h.b16 %v2969
        %v3035 = vunpack.c.l.b16 %v2970
        %v3036 = vunpack.c.h.b16 %v2970
        %v3037 = vunpack.c.l.b16 %v2971
        %v3038 = vunpack.c.h.b16 %v2971
        %v3039 = vunpack.c.l.b16 %v2972
        %v3040 = vunpack.c.h.b16 %v2972
        %v3041 = vunpack.c.l.b16 %v2973
        %v3042 = vunpack.c.h.b16 %v2973
        %v3043 = vunpack.c.l.b16 %v2974
        %v3044 = vunpack.c.h.b16 %v2974
        %v3045 = vunpack.c.l.b16 %v2975
        %v3046 = vunpack.c.h.b16 %v2975
        %v3047 = vunpack.c.l.b16 %v2976
        %v3048 = vunpack.c.h.b16 %v2976
        %v3049 = vunpack.c.l.b16 %v2977
        %v3050 = vunpack.c.h.b16 %v2977
        %v3051 = vunpack.c.l.b16 %v2978
        %v3052 = vunpack.c.h.b16 %v2978
        %v3053 = vunpack.c.l.b16 %v2979
        %v3054 = vunpack.c.h.b16 %v2979
        %v3055 = vunpack.c.l.b16 %v2980
        %v3056 = vunpack.c.h.b16 %v2980
        %v3057 = vunpack.c.l.b16 %v2981
        %v3058 = vunpack.c.h.b16 %v2981
        %v3059 = vunpack.c.l.b16 %v2982
        %v3060 = vunpack.c.h.b16 %v2982
        %v3061 = vunpack.c.l.b16 %v2983
        %v3062 = vunpack.c.h.b16 %v2983
        %v3063 = vunpack.c.l.b16 %v2984
        %v3064 = vunpack.c.h.b16 %v2984
        %v3065 = vunpack.c.l.b16 %v2985
        %v3066 = vunpack.c.h.b16 %v2985
        %v3067 = vunpack.c.l.b16 %v2986
        %v3068 = vunpack.c.h.b16 %v2986
        %v3069 = vunpack.c.l.b16 %v2987
        %v3070 = vunpack.c.h.b16 %v2987
        %v3071 = vunpack.c.l.b16 %v2988
        %v3072 = vunpack.c.h.b16 %v2988
        %v3073 = vunpack.c.l.b16 %v2989
        %v3074 = vunpack.c.h.b16 %v2989
        %v3075 = vunpack.c.l.b16 %v2990
        %v3076 = vunpack.c.h.b16 %v2990
        %v3077 = vunpack.c.l.b16 %v2991
        %v3078 = vunpack.c.h.b16 %v2991
        %v3079 = vunpack.c.l.b16 %v2992
        %v3080 = vunpack.c.h.b16 %v2992
        %v3081 = vunpack.c.l.b16 %v2993
        %v3082 = vunpack.c.h.b16 %v2993
        %v3083 = vunpack.c.l.b16 %v2994
        %v3084 = vunpack.c.h.b16 %v2994
        %v3085 = vunpack.c.l.b16 %v2995
        %v3086 = vunpack.c.h.b16 %v2995
        %v3087 = vunpack.c.l.b16 %v2996
        %v3088 = vunpack.c.h.b16 %v2996
        %v3089 = vunpack.c.l.b16 %v2997
        %v3090 = vunpack.c.h.b16 %v2997
        %v3091 = vunpack.c.l.b16 %v2998
        %v3092 = vunpack.c.h.b16 %v2998
        %v3093 = vunpack.c.l.b16 %v2999
        %v3094 = vunpack.c.h.b16 %v2999
        %v3095 = vunpack.c.l.b16 %v3000
        %v3096 = vunpack.c.h.b16 %v3000
        %v3097 = vpack.c.b16 %v3037, %v3033
        %v3098 = vpack.c.b16 %v3038, %v3034
        %v3099 = vpack.c.b16 %v3039, %v3035
        %v3100 = vpack.c.b16 %v3040, %v3036
        %v3101 = vpack.c.b16 %v3045, %v3041
        %v3102 = vpack.c.b16 %v3046, %v3042
        %v3103 = vpack.c.b16 %v3047, %v3043
        %v3104 = vpack.c.b16 %v3048, %v3044
        %v3105 = vpack.c.b16 %v3053, %v3049
        %v3106 = vpack.c.b16 %v3054, %v3050
        %v3107 = vpack.c.b16 %v3055, %v3051
        %v3108 = vpack.c.b16 %v3056, %v3052
        %v3109 = vpack.c.b16 %v3061, %v3057
        %v3110 = vpack.c.b16 %v3062, %v3058
        %v3111 = vpack.c.b16 %v3063, %v3059
        %v3112 = vpack.c.b16 %v3064, %v3060
        %v3113 = vpack.c.b16 %v3069, %v3065
        %v3114 = vpack.c.b16 %v3070, %v3066
        %v3115 = vpack.c.b16 %v3071, %v3067
        %v3116 = vpack.c.b16 %v3072, %v3068
        %v3117 = vpack.c.b16 %v3077, %v3073
        %v3118 = vpack.c.b16 %v3078, %v3074
        %v3119 = vpack.c.b16 %v3079, %v3075
        %v3120 = vpack.c.b16 %v3080, %v3076
        %v3121 = vpack.c.b16 %v3085, %v3081
        %v3122 = vpack.c.b16 %v3086, %v3082
        %v3123 = vpack.c.b16 %v3087, %v3083
        %v3124 = vpack.c.b16 %v3088, %v3084
        %v3125 = vpack.c.b16 %v3093, %v3089
        %v3126 = vpack.c.b16 %v3094, %v3090
        %v3127 = vpack.c.b16 %v3095, %v3091
        %v3128 = vpack.c.b16 %v3096, %v3092
        %3161 = vmatprep.subr.bf16.mxu0 %v3098
        %3162 = vmatpush1.bf16.msra.mxu0 %v3097
        %3163 = vmatprep.subr.bf16.mxu0 %v3102
        %3164 = vmatpush1.bf16.msra.mxu0 %v3101
        %3165 = vmatprep.subr.bf16.mxu0 %v3106
        %3166 = vmatpush1.bf16.msra.mxu0 %v3105
        %3167 = vmatprep.subr.bf16.mxu0 %v3110
        %3168 = vmatpush1.bf16.msra.mxu0 %v3109
        %3169 = vmatprep.subr.bf16.mxu0 %v3114
        %3170 = vmatpush1.bf16.msra.mxu0 %v3113
        %3171 = vmatprep.subr.bf16.mxu0 %v3118
        %3172 = vmatpush1.bf16.msra.mxu0 %v3117
        %3173 = vmatprep.subr.bf16.mxu0 %v3122
        %3174 = vmatpush1.bf16.msra.mxu0 %v3121
        %3175 = vmatprep.subr.bf16.mxu0 %v3126
        %3176 = vmatpush1.bf16.msra.mxu0 %v3125
        %3177 = vmatprep.subr.bf16.mxu0 0
        %3178 = vmatpush1.bf16.msra.mxu0 0
        %3179 = vmatprep.subr.bf16.mxu0 0
        %3180 = vmatpush1.bf16.msra.mxu0 0
        %3181 = vmatprep.subr.bf16.mxu0 0
        %3182 = vmatpush1.bf16.msra.mxu0 0
        %3183 = vmatprep.subr.bf16.mxu0 0
        %3184 = vmatpush1.bf16.msra.mxu0 0
        %3185 = vmatprep.subr.bf16.mxu0 0
        %3186 = vmatpush1.bf16.msra.mxu0 0
        %3187 = vmatprep.subr.bf16.mxu0 0
        %3188 = vmatpush1.bf16.msra.mxu0 0
        %3189 = vmatprep.subr.bf16.mxu0 0
        %3190 = vmatpush1.bf16.msra.mxu0 0
        %3191 = vmatprep.subr.bf16.mxu0 0
        %3192 = vmatpush1.bf16.msra.mxu0 0
        %3193 = vmatprep.mubr.bf16.mxu0 0
        %3194 = vmatmul.mubr.bf16.gmra.mrb[0].mxu0 %v2968
        %v3195 = vpop.f32.mrb[0].mxu0
        %v3196 = vadd.f32 0.0, %v3195
        %v3197 = vpop.f32.mrb[0].mxu0
        %v3198 = vadd.f32 0.0, %v3197
        %v3199 = vpop.f32.mrb[0].mxu0
        %v3200 = vpop.f32.mrb[0].mxu0
        %3201 = vdwg.mxu0
        %3202 = vmatprep.subr.bf16.mxu0 %v3100
        %3203 = vmatpush1.bf16.msra.mxu0 %v3099
        %3204 = vmatprep.subr.bf16.mxu0 %v3104
        %3205 = vmatpush1.bf16.msra.mxu0 %v3103
        %3206 = vmatprep.subr.bf16.mxu0 %v3108
        %3207 = vmatpush1.bf16.msra.mxu0 %v3107
        %3208 = vmatprep.subr.bf16.mxu0 %v3112
        %3209 = vmatpush1.bf16.msra.mxu0 %v3111
        %3210 = vmatprep.subr.bf16.mxu0 %v3116
        %3211 = vmatpush1.bf16.msra.mxu0 %v3115
        %3212 = vmatprep.subr.bf16.mxu0 %v3120
        %3213 = vmatpush1.bf16.msra.mxu0 %v3119
        %3214 = vmatprep.subr.bf16.mxu0 %v3124
        %3215 = vmatpush1.bf16.msra.mxu0 %v3123
        %3216 = vmatprep.subr.bf16.mxu0 %v3128
        %3217 = vmatpush1.bf16.msra.mxu0 %v3127
        %3218 = vmatprep.subr.bf16.mxu0 0
        %3219 = vmatpush1.bf16.msra.mxu0 0
        %3220 = vmatprep.subr.bf16.mxu0 0
        %3221 = vmatpush1.bf16.msra.mxu0 0
        %3222 = vmatprep.subr.bf16.mxu0 0
        %3223 = vmatpush1.bf16.msra.mxu0 0
        %3224 = vmatprep.subr.bf16.mxu0 0
        %3225 = vmatpush1.bf16.msra.mxu0 0
        %3226 = vmatprep.subr.bf16.mxu0 0
        %3227 = vmatpush1.bf16.msra.mxu0 0
        %3228 = vmatprep.subr.bf16.mxu0 0
        %3229 = vmatpush1.bf16.msra.mxu0 0
        %3230 = vmatprep.subr.bf16.mxu0 0
        %3231 = vmatpush1.bf16.msra.mxu0 0
        %3232 = vmatprep.subr.bf16.mxu0 0
        %3233 = vmatpush1.bf16.msra.mxu0 0
        %3234 = vmatprep.mubr.bf16.mxu0 0
        %3235 = vmatmul.mubr.bf16.gmra.mrb[0].mxu0 %v2968
        %v3236 = vpop.f32.mrb[0].mxu0
        %v3237 = vadd.f32 0.0, %v3236
        %v3238 = vpop.f32.mrb[0].mxu0
        %v3239 = vadd.f32 0.0, %v3238
        %v3240 = vpop.f32.mrb[0].mxu0
        %v3241 = vpop.f32.mrb[0].mxu0
        %3242 = vdwg.mxu0
        %v3243 = vadd.f32 %v2963, %v3196
        %v3244 = vadd.f32 %v2964, %v3198
        %v3245 = vadd.f32 %v2965, %v3237
        %v3246 = vadd.f32 %v2966, %v3239
        %v3247 = vxor.u32 %v3243, 2147483648
        %v3248 = vmul.f32 %v3247, 1.442695
        %v3249 = vpow.pop %v3248
        %v3250 = vadd.f32 %v3249, 1.0
        %v3251 = vrcp.pop %v3250
        %v3252 = vmul.f32 1.0, %v3251
        %v3253 = vxor.u32 %v3244, 2147483648
        %v3254 = vmul.f32 %v3253, 1.442695
        %v3255 = vpow.pop %v3254
        %v3256 = vadd.f32 %v3255, 1.0
        %v3257 = vrcp.pop %v3256
        %v3258 = vmul.f32 1.0, %v3257
        %v3259 = vtanh.pop %v3245
        %v3260 = vxor.u32 %v3246, 2147483648
        %v3261 = vmul.f32 %v3260, 1.442695
        %v3262 = vpow.pop %v3261
        %v3263 = vadd.f32 %v3262, 1.0
        %v3264 = vrcp.pop %v3263
        %v3265 = vmul.f32 1.0, %v3264
        %v3266 = vld [vmem:[#allocation5] sm:$0xff]
        %v3267 = vmul.f32 %v3258, %v3266
        %v3268 = vmul.f32 %v3252, %v3259
        %v3269 = vadd.f32 %v3267, %v3268
        %v3270 = vtanh.pop %v3269
        %v3271 = vmul.f32 %v3265, %v3270
        %3272 = vst [vmem:[#allocation5] sm:$0xff] %v3269
        %3273 = vst [vmem:[#allocation4] sm:$0xff] %v3271
        %s3274 = scalar_lea.vmem [#allocation2], 40
        %3275 = vst [vmem:[%s3274] sm:$0xff] %v3271
        %s3276 = smul.u32 6, 4
        %s3277 = smul.addr %s3276, 8
        %s3278 = scalar_lea.vmem [#allocation3], %s3277
        %v3279 = vld [vmem:[%s3278] sm:$0xff]
        %v3280 = vld [vmem:[%s3278 + $0x8] sm:$0xff]
        %v3281 = vld [vmem:[%s3278 + $0x10] sm:$0xff]
        %v3282 = vld [vmem:[%s3278 + $0x18] sm:$0xff]
        %v3283 = vld [vmem:[#allocation4] sm:$0xff]
        %v3284 = vpack.c.bf16 %v3283, %v3283
        %v3285 = vld [vmem:[%s453] sm:$0xff]
        %v3286 = vld [vmem:[%s453 + $0x8] sm:$0xff]
        %v3287 = vld [vmem:[%s453 + $0x10] sm:$0xff]
        %v3288 = vld [vmem:[%s453 + $0x18] sm:$0xff]
        %v3289 = vld [vmem:[%s453 + $0x20] sm:$0xff]
        %v3290 = vld [vmem:[%s453 + $0x28] sm:$0xff]
        %v3291 = vld [vmem:[%s453 + $0x30] sm:$0xff]
        %v3292 = vld [vmem:[%s453 + $0x38] sm:$0xff]
        %v3293 = vld [vmem:[%s453 + $0x40] sm:$0xff]
        %v3294 = vld [vmem:[%s453 + $0x48] sm:$0xff]
        %v3295 = vld [vmem:[%s453 + $0x50] sm:$0xff]
        %v3296 = vld [vmem:[%s453 + $0x58] sm:$0xff]
        %v3297 = vld [vmem:[%s453 + $0x60] sm:$0xff]
        %v3298 = vld [vmem:[%s453 + $0x68] sm:$0xff]
        %v3299 = vld [vmem:[%s453 + $0x70] sm:$0xff]
        %v3300 = vld [vmem:[%s453 + $0x78] sm:$0xff]
        %v3301 = vld [vmem:[%s453 + $0x80] sm:$0xff]
        %v3302 = vld [vmem:[%s453 + $0x88] sm:$0xff]
        %v3303 = vld [vmem:[%s453 + $0x90] sm:$0xff]
        %v3304 = vld [vmem:[%s453 + $0x98] sm:$0xff]
        %v3305 = vld [vmem:[%s453 + $0xa0] sm:$0xff]
        %v3306 = vld [vmem:[%s453 + $0xa8] sm:$0xff]
        %v3307 = vld [vmem:[%s453 + $0xb0] sm:$0xff]
        %v3308 = vld [vmem:[%s453 + $0xb8] sm:$0xff]
        %v3309 = vld [vmem:[%s453 + $0xc0] sm:$0xff]
        %v3310 = vld [vmem:[%s453 + $0xc8] sm:$0xff]
        %v3311 = vld [vmem:[%s453 + $0xd0] sm:$0xff]
        %v3312 = vld [vmem:[%s453 + $0xd8] sm:$0xff]
        %v3313 = vld [vmem:[%s453 + $0xe0] sm:$0xff]
        %v3314 = vld [vmem:[%s453 + $0xe8] sm:$0xff]
        %v3315 = vld [vmem:[%s453 + $0xf0] sm:$0xff]
        %v3316 = vld [vmem:[%s453 + $0xf8] sm:$0xff]
        %v3349 = vunpack.c.l.b16 %v3285
        %v3350 = vunpack.c.h.b16 %v3285
        %v3351 = vunpack.c.l.b16 %v3286
        %v3352 = vunpack.c.h.b16 %v3286
        %v3353 = vunpack.c.l.b16 %v3287
        %v3354 = vunpack.c.h.b16 %v3287
        %v3355 = vunpack.c.l.b16 %v3288
        %v3356 = vunpack.c.h.b16 %v3288
        %v3357 = vunpack.c.l.b16 %v3289
        %v3358 = vunpack.c.h.b16 %v3289
        %v3359 = vunpack.c.l.b16 %v3290
        %v3360 = vunpack.c.h.b16 %v3290
        %v3361 = vunpack.c.l.b16 %v3291
        %v3362 = vunpack.c.h.b16 %v3291
        %v3363 = vunpack.c.l.b16 %v3292
        %v3364 = vunpack.c.h.b16 %v3292
        %v3365 = vunpack.c.l.b16 %v3293
        %v3366 = vunpack.c.h.b16 %v3293
        %v3367 = vunpack.c.l.b16 %v3294
        %v3368 = vunpack.c.h.b16 %v3294
        %v3369 = vunpack.c.l.b16 %v3295
        %v3370 = vunpack.c.h.b16 %v3295
        %v3371 = vunpack.c.l.b16 %v3296
        %v3372 = vunpack.c.h.b16 %v3296
        %v3373 = vunpack.c.l.b16 %v3297
        %v3374 = vunpack.c.h.b16 %v3297
        %v3375 = vunpack.c.l.b16 %v3298
        %v3376 = vunpack.c.h.b16 %v3298
        %v3377 = vunpack.c.l.b16 %v3299
        %v3378 = vunpack.c.h.b16 %v3299
        %v3379 = vunpack.c.l.b16 %v3300
        %v3380 = vunpack.c.h.b16 %v3300
        %v3381 = vunpack.c.l.b16 %v3301
        %v3382 = vunpack.c.h.b16 %v3301
        %v3383 = vunpack.c.l.b16 %v3302
        %v3384 = vunpack.c.h.b16 %v3302
        %v3385 = vunpack.c.l.b16 %v3303
        %v3386 = vunpack.c.h.b16 %v3303
        %v3387 = vunpack.c.l.b16 %v3304
        %v3388 = vunpack.c.h.b16 %v3304
        %v3389 = vunpack.c.l.b16 %v3305
        %v3390 = vunpack.c.h.b16 %v3305
        %v3391 = vunpack.c.l.b16 %v3306
        %v3392 = vunpack.c.h.b16 %v3306
        %v3393 = vunpack.c.l.b16 %v3307
        %v3394 = vunpack.c.h.b16 %v3307
        %v3395 = vunpack.c.l.b16 %v3308
        %v3396 = vunpack.c.h.b16 %v3308
        %v3397 = vunpack.c.l.b16 %v3309
        %v3398 = vunpack.c.h.b16 %v3309
        %v3399 = vunpack.c.l.b16 %v3310
        %v3400 = vunpack.c.h.b16 %v3310
        %v3401 = vunpack.c.l.b16 %v3311
        %v3402 = vunpack.c.h.b16 %v3311
        %v3403 = vunpack.c.l.b16 %v3312
        %v3404 = vunpack.c.h.b16 %v3312
        %v3405 = vunpack.c.l.b16 %v3313
        %v3406 = vunpack.c.h.b16 %v3313
        %v3407 = vunpack.c.l.b16 %v3314
        %v3408 = vunpack.c.h.b16 %v3314
        %v3409 = vunpack.c.l.b16 %v3315
        %v3410 = vunpack.c.h.b16 %v3315
        %v3411 = vunpack.c.l.b16 %v3316
        %v3412 = vunpack.c.h.b16 %v3316
        %v3413 = vpack.c.b16 %v3353, %v3349
        %v3414 = vpack.c.b16 %v3354, %v3350
        %v3415 = vpack.c.b16 %v3355, %v3351
        %v3416 = vpack.c.b16 %v3356, %v3352
        %v3417 = vpack.c.b16 %v3361, %v3357
        %v3418 = vpack.c.b16 %v3362, %v3358
        %v3419 = vpack.c.b16 %v3363, %v3359
        %v3420 = vpack.c.b16 %v3364, %v3360
        %v3421 = vpack.c.b16 %v3369, %v3365
        %v3422 = vpack.c.b16 %v3370, %v3366
        %v3423 = vpack.c.b16 %v3371, %v3367
        %v3424 = vpack.c.b16 %v3372, %v3368
        %v3425 = vpack.c.b16 %v3377, %v3373
        %v3426 = vpack.c.b16 %v3378, %v3374
        %v3427 = vpack.c.b16 %v3379, %v3375
        %v3428 = vpack.c.b16 %v3380, %v3376
        %v3429 = vpack.c.b16 %v3385, %v3381
        %v3430 = vpack.c.b16 %v3386, %v3382
        %v3431 = vpack.c.b16 %v3387, %v3383
        %v3432 = vpack.c.b16 %v3388, %v3384
        %v3433 = vpack.c.b16 %v3393, %v3389
        %v3434 = vpack.c.b16 %v3394, %v3390
        %v3435 = vpack.c.b16 %v3395, %v3391
        %v3436 = vpack.c.b16 %v3396, %v3392
        %v3437 = vpack.c.b16 %v3401, %v3397
        %v3438 = vpack.c.b16 %v3402, %v3398
        %v3439 = vpack.c.b16 %v3403, %v3399
        %v3440 = vpack.c.b16 %v3404, %v3400
        %v3441 = vpack.c.b16 %v3409, %v3405
        %v3442 = vpack.c.b16 %v3410, %v3406
        %v3443 = vpack.c.b16 %v3411, %v3407
        %v3444 = vpack.c.b16 %v3412, %v3408
        %3477 = vmatprep.subr.bf16.mxu0 %v3414
        %3478 = vmatpush1.bf16.msra.mxu0 %v3413
        %3479 = vmatprep.subr.bf16.mxu0 %v3418
        %3480 = vmatpush1.bf16.msra.mxu0 %v3417
        %3481 = vmatprep.subr.bf16.mxu0 %v3422
        %3482 = vmatpush1.bf16.msra.mxu0 %v3421
        %3483 = vmatprep.subr.bf16.mxu0 %v3426
        %3484 = vmatpush1.bf16.msra.mxu0 %v3425
        %3485 = vmatprep.subr.bf16.mxu0 %v3430
        %3486 = vmatpush1.bf16.msra.mxu0 %v3429
        %3487 = vmatprep.subr.bf16.mxu0 %v3434
        %3488 = vmatpush1.bf16.msra.mxu0 %v3433
        %3489 = vmatprep.subr.bf16.mxu0 %v3438
        %3490 = vmatpush1.bf16.msra.mxu0 %v3437
        %3491 = vmatprep.subr.bf16.mxu0 %v3442
        %3492 = vmatpush1.bf16.msra.mxu0 %v3441
        %3493 = vmatprep.subr.bf16.mxu0 0
        %3494 = vmatpush1.bf16.msra.mxu0 0
        %3495 = vmatprep.subr.bf16.mxu0 0
        %3496 = vmatpush1.bf16.msra.mxu0 0
        %3497 = vmatprep.subr.bf16.mxu0 0
        %3498 = vmatpush1.bf16.msra.mxu0 0
        %3499 = vmatprep.subr.bf16.mxu0 0
        %3500 = vmatpush1.bf16.msra.mxu0 0
        %3501 = vmatprep.subr.bf16.mxu0 0
        %3502 = vmatpush1.bf16.msra.mxu0 0
        %3503 = vmatprep.subr.bf16.mxu0 0
        %3504 = vmatpush1.bf16.msra.mxu0 0
        %3505 = vmatprep.subr.bf16.mxu0 0
        %3506 = vmatpush1.bf16.msra.mxu0 0
        %3507 = vmatprep.subr.bf16.mxu0 0
        %3508 = vmatpush1.bf16.msra.mxu0 0
        %3509 = vmatprep.mubr.bf16.mxu0 0
        %3510 = vmatmul.mubr.bf16.gmra.mrb[0].mxu0 %v3284
        %v3511 = vpop.f32.mrb[0].mxu0
        %v3512 = vadd.f32 0.0, %v3511
        %v3513 = vpop.f32.mrb[0].mxu0
        %v3514 = vadd.f32 0.0, %v3513
        %v3515 = vpop.f32.mrb[0].mxu0
        %v3516 = vpop.f32.mrb[0].mxu0
        %3517 = vdwg.mxu0
        %3518 = vmatprep.subr.bf16.mxu0 %v3416
        %3519 = vmatpush1.bf16.msra.mxu0 %v3415
        %3520 = vmatprep.subr.bf16.mxu0 %v3420
        %3521 = vmatpush1.bf16.msra.mxu0 %v3419
        %3522 = vmatprep.subr.bf16.mxu0 %v3424
        %3523 = vmatpush1.bf16.msra.mxu0 %v3423
        %3524 = vmatprep.subr.bf16.mxu0 %v3428
        %3525 = vmatpush1.bf16.msra.mxu0 %v3427
        %3526 = vmatprep.subr.bf16.mxu0 %v3432
        %3527 = vmatpush1.bf16.msra.mxu0 %v3431
        %3528 = vmatprep.subr.bf16.mxu0 %v3436
        %3529 = vmatpush1.bf16.msra.mxu0 %v3435
        %3530 = vmatprep.subr.bf16.mxu0 %v3440
        %3531 = vmatpush1.bf16.msra.mxu0 %v3439
        %3532 = vmatprep.subr.bf16.mxu0 %v3444
        %3533 = vmatpush1.bf16.msra.mxu0 %v3443
        %3534 = vmatprep.subr.bf16.mxu0 0
        %3535 = vmatpush1.bf16.msra.mxu0 0
        %3536 = vmatprep.subr.bf16.mxu0 0
        %3537 = vmatpush1.bf16.msra.mxu0 0
        %3538 = vmatprep.subr.bf16.mxu0 0
        %3539 = vmatpush1.bf16.msra.mxu0 0
        %3540 = vmatprep.subr.bf16.mxu0 0
        %3541 = vmatpush1.bf16.msra.mxu0 0
        %3542 = vmatprep.subr.bf16.mxu0 0
        %3543 = vmatpush1.bf16.msra.mxu0 0
        %3544 = vmatprep.subr.bf16.mxu0 0
        %3545 = vmatpush1.bf16.msra.mxu0 0
        %3546 = vmatprep.subr.bf16.mxu0 0
        %3547 = vmatpush1.bf16.msra.mxu0 0
        %3548 = vmatprep.subr.bf16.mxu0 0
        %3549 = vmatpush1.bf16.msra.mxu0 0
        %3550 = vmatprep.mubr.bf16.mxu0 0
        %3551 = vmatmul.mubr.bf16.gmra.mrb[0].mxu0 %v3284
        %v3552 = vpop.f32.mrb[0].mxu0
        %v3553 = vadd.f32 0.0, %v3552
        %v3554 = vpop.f32.mrb[0].mxu0
        %v3555 = vadd.f32 0.0, %v3554
        %v3556 = vpop.f32.mrb[0].mxu0
        %v3557 = vpop.f32.mrb[0].mxu0
        %3558 = vdwg.mxu0
        %v3559 = vadd.f32 %v3279, %v3512
        %v3560 = vadd.f32 %v3280, %v3514
        %v3561 = vadd.f32 %v3281, %v3553
        %v3562 = vadd.f32 %v3282, %v3555
        %v3563 = vxor.u32 %v3559, 2147483648
        %v3564 = vmul.f32 %v3563, 1.442695
        %v3565 = vpow.pop %v3564
        %v3566 = vadd.f32 %v3565, 1.0
        %v3567 = vrcp.pop %v3566
        %v3568 = vmul.f32 1.0, %v3567
        %v3569 = vxor.u32 %v3560, 2147483648
        %v3570 = vmul.f32 %v3569, 1.442695
        %v3571 = vpow.pop %v3570
        %v3572 = vadd.f32 %v3571, 1.0
        %v3573 = vrcp.pop %v3572
        %v3574 = vmul.f32 1.0, %v3573
        %v3575 = vtanh.pop %v3561
        %v3576 = vxor.u32 %v3562, 2147483648
        %v3577 = vmul.f32 %v3576, 1.442695
        %v3578 = vpow.pop %v3577
        %v3579 = vadd.f32 %v3578, 1.0
        %v3580 = vrcp.pop %v3579
        %v3581 = vmul.f32 1.0, %v3580
        %v3582 = vld [vmem:[#allocation5] sm:$0xff]
        %v3583 = vmul.f32 %v3574, %v3582
        %v3584 = vmul.f32 %v3568, %v3575
        %v3585 = vadd.f32 %v3583, %v3584
        %v3586 = vtanh.pop %v3585
        %v3587 = vmul.f32 %v3581, %v3586
        %3588 = vst [vmem:[#allocation5] sm:$0xff] %v3585
        %3589 = vst [vmem:[#allocation4] sm:$0xff] %v3587
        %s3590 = scalar_lea.vmem [#allocation2], 48
        %3591 = vst [vmem:[%s3590] sm:$0xff] %v3587
        %s3592 = smul.u32 7, 4
        %s3593 = smul.addr %s3592, 8
        %s3594 = scalar_lea.vmem [#allocation3], %s3593
        %v3595 = vld [vmem:[%s3594] sm:$0xff]
        %v3596 = vld [vmem:[%s3594 + $0x8] sm:$0xff]
        %v3597 = vld [vmem:[%s3594 + $0x10] sm:$0xff]
        %v3598 = vld [vmem:[%s3594 + $0x18] sm:$0xff]
        %v3599 = vld [vmem:[#allocation4] sm:$0xff]
        %v3600 = vpack.c.bf16 %v3599, %v3599
        %v3601 = vld [vmem:[%s453] sm:$0xff]
        %v3602 = vld [vmem:[%s453 + $0x8] sm:$0xff]
        %v3603 = vld [vmem:[%s453 + $0x10] sm:$0xff]
        %v3604 = vld [vmem:[%s453 + $0x18] sm:$0xff]
        %v3605 = vld [vmem:[%s453 + $0x20] sm:$0xff]
        %v3606 = vld [vmem:[%s453 + $0x28] sm:$0xff]
        %v3607 = vld [vmem:[%s453 + $0x30] sm:$0xff]
        %v3608 = vld [vmem:[%s453 + $0x38] sm:$0xff]
        %v3609 = vld [vmem:[%s453 + $0x40] sm:$0xff]
        %v3610 = vld [vmem:[%s453 + $0x48] sm:$0xff]
        %v3611 = vld [vmem:[%s453 + $0x50] sm:$0xff]
        %v3612 = vld [vmem:[%s453 + $0x58] sm:$0xff]
        %v3613 = vld [vmem:[%s453 + $0x60] sm:$0xff]
        %v3614 = vld [vmem:[%s453 + $0x68] sm:$0xff]
        %v3615 = vld [vmem:[%s453 + $0x70] sm:$0xff]
        %v3616 = vld [vmem:[%s453 + $0x78] sm:$0xff]
        %v3617 = vld [vmem:[%s453 + $0x80] sm:$0xff]
        %v3618 = vld [vmem:[%s453 + $0x88] sm:$0xff]
        %v3619 = vld [vmem:[%s453 + $0x90] sm:$0xff]
        %v3620 = vld [vmem:[%s453 + $0x98] sm:$0xff]
        %v3621 = vld [vmem:[%s453 + $0xa0] sm:$0xff]
        %v3622 = vld [vmem:[%s453 + $0xa8] sm:$0xff]
        %v3623 = vld [vmem:[%s453 + $0xb0] sm:$0xff]
        %v3624 = vld [vmem:[%s453 + $0xb8] sm:$0xff]
        %v3625 = vld [vmem:[%s453 + $0xc0] sm:$0xff]
        %v3626 = vld [vmem:[%s453 + $0xc8] sm:$0xff]
        %v3627 = vld [vmem:[%s453 + $0xd0] sm:$0xff]
        %v3628 = vld [vmem:[%s453 + $0xd8] sm:$0xff]
        %v3629 = vld [vmem:[%s453 + $0xe0] sm:$0xff]
        %v3630 = vld [vmem:[%s453 + $0xe8] sm:$0xff]
        %v3631 = vld [vmem:[%s453 + $0xf0] sm:$0xff]
        %v3632 = vld [vmem:[%s453 + $0xf8] sm:$0xff]
        %v3665 = vunpack.c.l.b16 %v3601
        %v3666 = vunpack.c.h.b16 %v3601
        %v3667 = vunpack.c.l.b16 %v3602
        %v3668 = vunpack.c.h.b16 %v3602
        %v3669 = vunpack.c.l.b16 %v3603
        %v3670 = vunpack.c.h.b16 %v3603
        %v3671 = vunpack.c.l.b16 %v3604
        %v3672 = vunpack.c.h.b16 %v3604
        %v3673 = vunpack.c.l.b16 %v3605
        %v3674 = vunpack.c.h.b16 %v3605
        %v3675 = vunpack.c.l.b16 %v3606
        %v3676 = vunpack.c.h.b16 %v3606
        %v3677 = vunpack.c.l.b16 %v3607
        %v3678 = vunpack.c.h.b16 %v3607
        %v3679 = vunpack.c.l.b16 %v3608
        %v3680 = vunpack.c.h.b16 %v3608
        %v3681 = vunpack.c.l.b16 %v3609
        %v3682 = vunpack.c.h.b16 %v3609
        %v3683 = vunpack.c.l.b16 %v3610
        %v3684 = vunpack.c.h.b16 %v3610
        %v3685 = vunpack.c.l.b16 %v3611
        %v3686 = vunpack.c.h.b16 %v3611
        %v3687 = vunpack.c.l.b16 %v3612
        %v3688 = vunpack.c.h.b16 %v3612
        %v3689 = vunpack.c.l.b16 %v3613
        %v3690 = vunpack.c.h.b16 %v3613
        %v3691 = vunpack.c.l.b16 %v3614
        %v3692 = vunpack.c.h.b16 %v3614
        %v3693 = vunpack.c.l.b16 %v3615
        %v3694 = vunpack.c.h.b16 %v3615
        %v3695 = vunpack.c.l.b16 %v3616
        %v3696 = vunpack.c.h.b16 %v3616
        %v3697 = vunpack.c.l.b16 %v3617
        %v3698 = vunpack.c.h.b16 %v3617
        %v3699 = vunpack.c.l.b16 %v3618
        %v3700 = vunpack.c.h.b16 %v3618
        %v3701 = vunpack.c.l.b16 %v3619
        %v3702 = vunpack.c.h.b16 %v3619
        %v3703 = vunpack.c.l.b16 %v3620
        %v3704 = vunpack.c.h.b16 %v3620
        %v3705 = vunpack.c.l.b16 %v3621
        %v3706 = vunpack.c.h.b16 %v3621
        %v3707 = vunpack.c.l.b16 %v3622
        %v3708 = vunpack.c.h.b16 %v3622
        %v3709 = vunpack.c.l.b16 %v3623
        %v3710 = vunpack.c.h.b16 %v3623
        %v3711 = vunpack.c.l.b16 %v3624
        %v3712 = vunpack.c.h.b16 %v3624
        %v3713 = vunpack.c.l.b16 %v3625
        %v3714 = vunpack.c.h.b16 %v3625
        %v3715 = vunpack.c.l.b16 %v3626
        %v3716 = vunpack.c.h.b16 %v3626
        %v3717 = vunpack.c.l.b16 %v3627
        %v3718 = vunpack.c.h.b16 %v3627
        %v3719 = vunpack.c.l.b16 %v3628
        %v3720 = vunpack.c.h.b16 %v3628
        %v3721 = vunpack.c.l.b16 %v3629
        %v3722 = vunpack.c.h.b16 %v3629
        %v3723 = vunpack.c.l.b16 %v3630
        %v3724 = vunpack.c.h.b16 %v3630
        %v3725 = vunpack.c.l.b16 %v3631
        %v3726 = vunpack.c.h.b16 %v3631
        %v3727 = vunpack.c.l.b16 %v3632
        %v3728 = vunpack.c.h.b16 %v3632
        %v3729 = vpack.c.b16 %v3669, %v3665
        %v3730 = vpack.c.b16 %v3670, %v3666
        %v3731 = vpack.c.b16 %v3671, %v3667
        %v3732 = vpack.c.b16 %v3672, %v3668
        %v3733 = vpack.c.b16 %v3677, %v3673
        %v3734 = vpack.c.b16 %v3678, %v3674
        %v3735 = vpack.c.b16 %v3679, %v3675
        %v3736 = vpack.c.b16 %v3680, %v3676
        %v3737 = vpack.c.b16 %v3685, %v3681
        %v3738 = vpack.c.b16 %v3686, %v3682
        %v3739 = vpack.c.b16 %v3687, %v3683
        %v3740 = vpack.c.b16 %v3688, %v3684
        %v3741 = vpack.c.b16 %v3693, %v3689
        %v3742 = vpack.c.b16 %v3694, %v3690
        %v3743 = vpack.c.b16 %v3695, %v3691
        %v3744 = vpack.c.b16 %v3696, %v3692
        %v3745 = vpack.c.b16 %v3701, %v3697
        %v3746 = vpack.c.b16 %v3702, %v3698
        %v3747 = vpack.c.b16 %v3703, %v3699
        %v3748 = vpack.c.b16 %v3704, %v3700
        %v3749 = vpack.c.b16 %v3709, %v3705
        %v3750 = vpack.c.b16 %v3710, %v3706
        %v3751 = vpack.c.b16 %v3711, %v3707
        %v3752 = vpack.c.b16 %v3712, %v3708
        %v3753 = vpack.c.b16 %v3717, %v3713
        %v3754 = vpack.c.b16 %v3718, %v3714
        %v3755 = vpack.c.b16 %v3719, %v3715
        %v3756 = vpack.c.b16 %v3720, %v3716
        %v3757 = vpack.c.b16 %v3725, %v3721
        %v3758 = vpack.c.b16 %v3726, %v3722
        %v3759 = vpack.c.b16 %v3727, %v3723
        %v3760 = vpack.c.b16 %v3728, %v3724
        %3793 = vmatprep.subr.bf16.mxu0 %v3730
        %3794 = vmatpush1.bf16.msra.mxu0 %v3729
        %3795 = vmatprep.subr.bf16.mxu0 %v3734
        %3796 = vmatpush1.bf16.msra.mxu0 %v3733
        %3797 = vmatprep.subr.bf16.mxu0 %v3738
        %3798 = vmatpush1.bf16.msra.mxu0 %v3737
        %3799 = vmatprep.subr.bf16.mxu0 %v3742
        %3800 = vmatpush1.bf16.msra.mxu0 %v3741
        %3801 = vmatprep.subr.bf16.mxu0 %v3746
        %3802 = vmatpush1.bf16.msra.mxu0 %v3745
        %3803 = vmatprep.subr.bf16.mxu0 %v3750
        %3804 = vmatpush1.bf16.msra.mxu0 %v3749
        %3805 = vmatprep.subr.bf16.mxu0 %v3754
        %3806 = vmatpush1.bf16.msra.mxu0 %v3753
        %3807 = vmatprep.subr.bf16.mxu0 %v3758
        %3808 = vmatpush1.bf16.msra.mxu0 %v3757
        %3809 = vmatprep.subr.bf16.mxu0 0
        %3810 = vmatpush1.bf16.msra.mxu0 0
        %3811 = vmatprep.subr.bf16.mxu0 0
        %3812 = vmatpush1.bf16.msra.mxu0 0
        %3813 = vmatprep.subr.bf16.mxu0 0
        %3814 = vmatpush1.bf16.msra.mxu0 0
        %3815 = vmatprep.subr.bf16.mxu0 0
        %3816 = vmatpush1.bf16.msra.mxu0 0
        %3817 = vmatprep.subr.bf16.mxu0 0
        %3818 = vmatpush1.bf16.msra.mxu0 0
        %3819 = vmatprep.subr.bf16.mxu0 0
        %3820 = vmatpush1.bf16.msra.mxu0 0
        %3821 = vmatprep.subr.bf16.mxu0 0
        %3822 = vmatpush1.bf16.msra.mxu0 0
        %3823 = vmatprep.subr.bf16.mxu0 0
        %3824 = vmatpush1.bf16.msra.mxu0 0
        %3825 = vmatprep.mubr.bf16.mxu0 0
        %3826 = vmatmul.mubr.bf16.gmra.mrb[0].mxu0 %v3600
        %v3827 = vpop.f32.mrb[0].mxu0
        %v3828 = vadd.f32 0.0, %v3827
        %v3829 = vpop.f32.mrb[0].mxu0
        %v3830 = vadd.f32 0.0, %v3829
        %v3831 = vpop.f32.mrb[0].mxu0
        %v3832 = vpop.f32.mrb[0].mxu0
        %3833 = vdwg.mxu0
        %3834 = vmatprep.subr.bf16.mxu0 %v3732
        %3835 = vmatpush1.bf16.msra.mxu0 %v3731
        %3836 = vmatprep.subr.bf16.mxu0 %v3736
        %3837 = vmatpush1.bf16.msra.mxu0 %v3735
        %3838 = vmatprep.subr.bf16.mxu0 %v3740
        %3839 = vmatpush1.bf16.msra.mxu0 %v3739
        %3840 = vmatprep.subr.bf16.mxu0 %v3744
        %3841 = vmatpush1.bf16.msra.mxu0 %v3743
        %3842 = vmatprep.subr.bf16.mxu0 %v3748
        %3843 = vmatpush1.bf16.msra.mxu0 %v3747
        %3844 = vmatprep.subr.bf16.mxu0 %v3752
        %3845 = vmatpush1.bf16.msra.mxu0 %v3751
        %3846 = vmatprep.subr.bf16.mxu0 %v3756
        %3847 = vmatpush1.bf16.msra.mxu0 %v3755
        %3848 = vmatprep.subr.bf16.mxu0 %v3760
        %3849 = vmatpush1.bf16.msra.mxu0 %v3759
        %3850 = vmatprep.subr.bf16.mxu0 0
        %3851 = vmatpush1.bf16.msra.mxu0 0
        %3852 = vmatprep.subr.bf16.mxu0 0
        %3853 = vmatpush1.bf16.msra.mxu0 0
        %3854 = vmatprep.subr.bf16.mxu0 0
        %3855 = vmatpush1.bf16.msra.mxu0 0
        %3856 = vmatprep.subr.bf16.mxu0 0
        %3857 = vmatpush1.bf16.msra.mxu0 0
        %3858 = vmatprep.subr.bf16.mxu0 0
        %3859 = vmatpush1.bf16.msra.mxu0 0
        %3860 = vmatprep.subr.bf16.mxu0 0
        %3861 = vmatpush1.bf16.msra.mxu0 0
        %3862 = vmatprep.subr.bf16.mxu0 0
        %3863 = vmatpush1.bf16.msra.mxu0 0
        %3864 = vmatprep.subr.bf16.mxu0 0
        %3865 = vmatpush1.bf16.msra.mxu0 0
        %3866 = vmatprep.mubr.bf16.mxu0 0
        %3867 = vmatmul.mubr.bf16.gmra.mrb[0].mxu0 %v3600
        %v3868 = vpop.f32.mrb[0].mxu0
        %v3869 = vadd.f32 0.0, %v3868
        %v3870 = vpop.f32.mrb[0].mxu0
        %v3871 = vadd.f32 0.0, %v3870
        %v3872 = vpop.f32.mrb[0].mxu0
        %v3873 = vpop.f32.mrb[0].mxu0
        %3874 = vdwg.mxu0
        %v3875 = vadd.f32 %v3595, %v3828
        %v3876 = vadd.f32 %v3596, %v3830
        %v3877 = vadd.f32 %v3597, %v3869
        %v3878 = vadd.f32 %v3598, %v3871
        %v3879 = vxor.u32 %v3875, 2147483648
        %v3880 = vmul.f32 %v3879, 1.442695
        %v3881 = vpow.pop %v3880
        %v3882 = vadd.f32 %v3881, 1.0
        %v3883 = vrcp.pop %v3882
        %v3884 = vmul.f32 1.0, %v3883
        %v3885 = vxor.u32 %v3876, 2147483648
        %v3886 = vmul.f32 %v3885, 1.442695
        %v3887 = vpow.pop %v3886
        %v3888 = vadd.f32 %v3887, 1.0
        %v3889 = vrcp.pop %v3888
        %v3890 = vmul.f32 1.0, %v3889
        %v3891 = vtanh.pop %v3877
        %v3892 = vxor.u32 %v3878, 2147483648
        %v3893 = vmul.f32 %v3892, 1.442695
        %v3894 = vpow.pop %v3893
        %v3895 = vadd.f32 %v3894, 1.0
        %v3896 = vrcp.pop %v3895
        %v3897 = vmul.f32 1.0, %v3896
        %v3898 = vld [vmem:[#allocation5] sm:$0xff]
        %v3899 = vmul.f32 %v3890, %v3898
        %v3900 = vmul.f32 %v3884, %v3891
        %v3901 = vadd.f32 %v3899, %v3900
        %v3902 = vtanh.pop %v3901
        %v3903 = vmul.f32 %v3897, %v3902
        %3904 = vst [vmem:[#allocation5] sm:$0xff] %v3901
        %3905 = vst [vmem:[#allocation4] sm:$0xff] %v3903
        %s3906 = scalar_lea.vmem [#allocation2], 56
        %3907 = vst [vmem:[%s3906] sm:$0xff] %v3903
        %v3908 = vld [vmem:[#allocation4] sm:$0xff]
        %3909 = vst [vmem:[%s528] sm:$0xff] %v3908
        %v3910 = vld [vmem:[#allocation5] sm:$0xff]
        %3911 = vst [vmem:[%s535] sm:$0xff] %v3910
        %p3912 = scmp.eq.s32.totalorder %s34, 1
        // Predicated region
        $region85: #{tpu_custom_call.1} parent=51 // pred_check
          %p3913 = pneg %p3912
        $region86: #{tpu_custom_call.1} parent=51 // pred_check_branch
          %3915 = sbr.rel (%p3913) target = $region88
        $region87: #{tpu_custom_call.1} parent=51 // pred_region
          %v3916 = vld [vmem:[#allocation2] sm:$0xff]
          %v3917 = vld [vmem:[#allocation2 + $0x8] sm:$0xff]
          %v3918 = vld [vmem:[#allocation2 + $0x10] sm:$0xff]
          %v3919 = vld [vmem:[#allocation2 + $0x18] sm:$0xff]
          %v3920 = vld [vmem:[#allocation2 + $0x20] sm:$0xff]
          %v3921 = vld [vmem:[#allocation2 + $0x28] sm:$0xff]
          %v3922 = vld [vmem:[#allocation2 + $0x30] sm:$0xff]
          %v3923 = vld [vmem:[#allocation2 + $0x38] sm:$0xff]
          %v3924 = vpack.c.bf16 %v3917, %v3916
          %v3925 = vpack.c.bf16 %v3919, %v3918
          %v3926 = vpack.c.bf16 %v3921, %v3920
          %v3927 = vpack.c.bf16 %v3923, %v3922
          %v3928 = vld [vmem:[#allocation15] sm:$0xf]
          %v3929 = vld [vmem:[#allocation15 + $0x4] sm:$0xf]
          %v3930 = vld [vmem:[#allocation15 + $0x8] sm:$0xf]
          %v3931 = vld [vmem:[#allocation15 + $0xc] sm:$0xf]
          %v3932 = vld [vmem:[#allocation15 + $0x10] sm:$0xf]
          %v3933 = vld [vmem:[#allocation15 + $0x14] sm:$0xf]
          %v3934 = vld [vmem:[#allocation15 + $0x18] sm:$0xf]
          %v3935 = vld [vmem:[#allocation15 + $0x1c] sm:$0xf]
          %v3936 = vld [vmem:[#allocation15 + $0x20] sm:$0xf]
          %v3937 = vld [vmem:[#allocation15 + $0x24] sm:$0xf]
          %v3938 = vld [vmem:[#allocation15 + $0x28] sm:$0xf]
          %v3939 = vld [vmem:[#allocation15 + $0x2c] sm:$0xf]
          %v3940 = vld [vmem:[#allocation15 + $0x30] sm:$0xf]
          %v3941 = vld [vmem:[#allocation15 + $0x34] sm:$0xf]
          %v3942 = vld [vmem:[#allocation15 + $0x38] sm:$0xf]
          %v3943 = vld [vmem:[#allocation15 + $0x3c] sm:$0xf]
          %v3944 = vld [vmem:[%s7] sm:$0x1]
          %v3946 = vlaneseq
          %v3947 = vshrl.u32 %v3946, 7
          %v3948 = vsub.s32 0, %v3947
          %v3949 = vrot.slane %v3944, %v3948
          %v3967 = vunpack.c.l.b16 %v3928
          %v3968 = vunpack.c.l.b16 %v3929
          %v3969 = vunpack.c.l.b16 %v3930
          %v3970 = vunpack.c.l.b16 %v3931
          %v3971 = vunpack.c.l.b16 %v3932
          %v3972 = vunpack.c.l.b16 %v3933
          %v3973 = vunpack.c.l.b16 %v3934
          %v3974 = vunpack.c.l.b16 %v3935
          %v3975 = vunpack.c.l.b16 %v3936
          %v3976 = vunpack.c.l.b16 %v3937
          %v3977 = vunpack.c.l.b16 %v3938
          %v3978 = vunpack.c.l.b16 %v3939
          %v3979 = vunpack.c.l.b16 %v3940
          %v3980 = vunpack.c.l.b16 %v3941
          %v3981 = vunpack.c.l.b16 %v3942
          %v3982 = vunpack.c.l.b16 %v3943
          %v3983 = vpack.c.b16 %v3968, %v3967
          %v3984 = vpack.c.b16 %v3970, %v3969
          %v3985 = vpack.c.b16 %v3972, %v3971
          %v3986 = vpack.c.b16 %v3974, %v3973
          %v3987 = vpack.c.b16 %v3976, %v3975
          %v3988 = vpack.c.b16 %v3978, %v3977
          %v3989 = vpack.c.b16 %v3980, %v3979
          %v3990 = vpack.c.b16 %v3982, %v3981
          %3999 = vmatprep.subr.bf16.mxu0 0
          %4000 = vmatpush1.bf16.msra.mxu0 %v3983
          %4001 = vmatprep.subr.bf16.mxu0 0
          %4002 = vmatpush1.bf16.msra.mxu0 %v3984
          %4003 = vmatprep.subr.bf16.mxu0 0
          %4004 = vmatpush1.bf16.msra.mxu0 %v3985
          %4005 = vmatprep.subr.bf16.mxu0 0
          %4006 = vmatpush1.bf16.msra.mxu0 %v3986
          %4007 = vmatprep.subr.bf16.mxu0 0
          %4008 = vmatpush1.bf16.msra.mxu0 %v3987
          %4009 = vmatprep.subr.bf16.mxu0 0
          %4010 = vmatpush1.bf16.msra.mxu0 %v3988
          %4011 = vmatprep.subr.bf16.mxu0 0
          %4012 = vmatpush1.bf16.msra.mxu0 %v3989
          %4013 = vmatprep.subr.bf16.mxu0 0
          %4014 = vmatpush1.bf16.msra.mxu0 %v3990
          %4015 = vmatprep.subr.bf16.mxu0 0
          %4016 = vmatpush1.bf16.msra.mxu0 0
          %4017 = vmatprep.subr.bf16.mxu0 0
          %4018 = vmatpush1.bf16.msra.mxu0 0
          %4019 = vmatprep.subr.bf16.mxu0 0
          %4020 = vmatpush1.bf16.msra.mxu0 0
          %4021 = vmatprep.subr.bf16.mxu0 0
          %4022 = vmatpush1.bf16.msra.mxu0 0
          %4023 = vmatprep.subr.bf16.mxu0 0
          %4024 = vmatpush1.bf16.msra.mxu0 0
          %4025 = vmatprep.subr.bf16.mxu0 0
          %4026 = vmatpush1.bf16.msra.mxu0 0
          %4027 = vmatprep.subr.bf16.mxu0 0
          %4028 = vmatpush1.bf16.msra.mxu0 0
          %4029 = vmatprep.subr.bf16.mxu0 0
          %4030 = vmatpush1.bf16.msra.mxu0 0
          %4031 = vmatprep.mubr.bf16.mxu0 0
          %4032 = vmatmul.mubr.bf16.gmra.mrb[0].mxu0 %v3924
          %v4033 = vpop.f32.mrb[0].mxu0
          %v4034 = vadd.f32 %v3949, %v4033
          %v4035 = vpop.f32.mrb[0].mxu0
          %v4036 = vpop.f32.mrb[0].mxu0
          %v4037 = vadd.f32 %v3949, %v4036
          %v4038 = vpop.f32.mrb[0].mxu0
          %4039 = vmatprep.mubr.bf16.mxu0 0
          %4040 = vmatmul.mubr.bf16.gmra.mrb[0].mxu0 %v3925
          %v4041 = vpop.f32.mrb[0].mxu0
          %v4042 = vadd.f32 %v3949, %v4041
          %v4043 = vpop.f32.mrb[0].mxu0
          %v4044 = vpop.f32.mrb[0].mxu0
          %v4045 = vadd.f32 %v3949, %v4044
          %v4046 = vpop.f32.mrb[0].mxu0
          %4047 = vmatprep.mubr.bf16.mxu0 0
          %4048 = vmatmul.mubr.bf16.gmra.mrb[0].mxu0 %v3926
          %v4049 = vpop.f32.mrb[0].mxu0
          %v4050 = vadd.f32 %v3949, %v4049
          %v4051 = vpop.f32.mrb[0].mxu0
          %v4052 = vpop.f32.mrb[0].mxu0
          %v4053 = vadd.f32 %v3949, %v4052
          %v4054 = vpop.f32.mrb[0].mxu0
          %4055 = vmatprep.mubr.bf16.mxu0 0
          %4056 = vmatmul.mubr.bf16.gmra.mrb[0].mxu0 %v3927
          %v4057 = vpop.f32.mrb[0].mxu0
          %v4058 = vadd.f32 %v3949, %v4057
          %v4059 = vpop.f32.mrb[0].mxu0
          %v4060 = vpop.f32.mrb[0].mxu0
          %v4061 = vadd.f32 %v3949, %v4060
          %v4062 = vpop.f32.mrb[0].mxu0
          %4063 = vdwg.mxu0
          %4064 = vst [vmem:[#allocation17] sm:$0xff] %v4034
          %4065 = vst [vmem:[#allocation17 + $0x8] sm:$0xff] %v4037
          %4066 = vst [vmem:[#allocation17 + $0x10] sm:$0xff] %v4042
          %4067 = vst [vmem:[#allocation17 + $0x18] sm:$0xff] %v4045
          %4068 = vst [vmem:[#allocation17 + $0x20] sm:$0xff] %v4050
          %4069 = vst [vmem:[#allocation17 + $0x28] sm:$0xff] %v4053
          %4070 = vst [vmem:[#allocation17 + $0x30] sm:$0xff] %v4058
          %4071 = vst [vmem:[#allocation17 + $0x38] sm:$0xff] %v4061
        $region88: #{tpu_custom_call.1} parent=51 // pred_fallthru
          _
        %s4072 = sand.u32 %s34, 1
        %s4073 = scalar_lea.sflag [#allocation19], %s4072
        %s4074 = sand.u32 %s256, 1
        %s4075 = smul.addr %s4074, 8
        %s4076 = scalar_lea.vmem [#allocation18], %s4075
        %s4077 = sand.u32 %s34, 1
        %s4078 = scalar_lea.sflag [#allocation19], %s4077
        %s4079 = sand.u32 %s282, 1
        %s4080 = smul.addr %s4079, 8
        %s4081 = scalar_lea.vmem [#allocation20], %s4080
        // Predicated region
        $region89: #{tpu_custom_call.1} parent=51 // pred_check
          %p4082 = pneg %p240
        $region90: #{tpu_custom_call.1} parent=51 // pred_check_branch
          %4084 = sbr.rel (%p4082) target = $region92
        $region91: #{tpu_custom_call.1} parent=51 // pred_region
          %s4086 = ssub.s32 1024, 1024
          %4087 = vsyncadd [#allocation8], %s4086
          %s4088 = sshll.u32 [#allocation17], 4
          %s4089 = int_to_ptr.vmem [resolvable:$true] %s4088
          %4094 = dma.vmem_to_hbm [thread:$0]  %s4089, 1024, %s8, [#allocation8], 128, 128, 8
        $region92: #{tpu_custom_call.1} parent=51 // pred_fallthru
          _
        // Predicated region
        $region93: #{tpu_custom_call.1} parent=51 // pred_check
          %p4095 = pneg %p266
        $region94: #{tpu_custom_call.1} parent=51 // pred_check_branch
          %4097 = sbr.rel (%p4095) target = $region96
        $region95: #{tpu_custom_call.1} parent=51 // pred_region
          %s4099 = ssub.s32 128, 128
          %4100 = vsyncadd %s4073, %s4099
          %s4101 = smul.addr %s34, 128
          %s4102 = scalar_lea.hbm %s9, %s4101
          %s4104 = sshll.u32 %s4076, 4
          %s4105 = int_to_ptr.vmem [resolvable:$true] %s4104
          %4107 = dma.vmem_to_hbm [thread:$0]  %s4105, 128, %s4102, %s4073
        $region96: #{tpu_custom_call.1} parent=51 // pred_fallthru
          _
        // Predicated region
        $region97: #{tpu_custom_call.1} parent=51 // pred_check
          %p4108 = pneg %p292
        $region98: #{tpu_custom_call.1} parent=51 // pred_check_branch
          %4110 = sbr.rel (%p4108) target = $region100
        $region99: #{tpu_custom_call.1} parent=51 // pred_region
          %s4112 = ssub.s32 128, 128
          %4113 = vsyncadd %s4078, %s4112
          %s4114 = smul.addr %s34, 128
          %s4115 = scalar_lea.hbm %s10, %s4114
          %s4117 = sshll.u32 %s4081, 4
          %s4118 = int_to_ptr.vmem [resolvable:$true] %s4117
          %4120 = dma.vmem_to_hbm [thread:$0]  %s4118, 128, %s4115, %s4078
        $region100: #{tpu_custom_call.1} parent=51 // pred_fallthru
          _
        // Predicated region
        $region101: #{tpu_custom_call.1} parent=51 // pred_check
          %p4121 = pneg %p240
        $region102: #{tpu_custom_call.1} parent=51 // pred_check_branch
          %4123 = sbr.rel (%p4121) target = $region104
        $region103: #{tpu_custom_call.1} parent=51 // pred_region
          %4124 = dma.done [#allocation8], 1024
        $region104: #{tpu_custom_call.1} parent=51 // pred_fallthru
          _
      $region52: #{tpu_custom_call.1} parent=5 // pred_fallthru
        _
      %p4125 = scmp.le.s32.totalorder 2, %s29
      // Predicated region
      $region105: #{tpu_custom_call.1} parent=5 // pred_check
        %p4126 = pneg %p4125
      $region106: #{tpu_custom_call.1} parent=5 // pred_check_branch
        %4128 = sbr.rel (%p4126) target = $region108
      $region107: #{tpu_custom_call.1} parent=5 // pred_region
        %s4129 = ssub.s32 %s29, 2
        // Predicated region
        $region109: #{tpu_custom_call.1} parent=107 // pred_check
          %p4130 = pneg %p272
        $region110: #{tpu_custom_call.1} parent=107 // pred_check_branch
          %4132 = sbr.rel (%p4130) target = $region112
        $region111: #{tpu_custom_call.1} parent=107 // pred_region
          %s4133 = sand.u32 %s35, 1
          %s4134 = scalar_lea.sflag [#allocation19], %s4133
          %s4135 = sand.u32 %s257, 1
          %s4136 = smul.addr %s4135, 8
          %s4137 = scalar_lea.vmem [#allocation18], %s4136
          %4138 = dma.done %s4134, 128
        $region112: #{tpu_custom_call.1} parent=107 // pred_fallthru
          _
        // Predicated region
        $region113: #{tpu_custom_call.1} parent=107 // pred_check
          %p4139 = pneg %p298
        $region114: #{tpu_custom_call.1} parent=107 // pred_check_branch
          %4141 = sbr.rel (%p4139) target = $region116
        $region115: #{tpu_custom_call.1} parent=107 // pred_region
          %s4142 = sand.u32 %s35, 1
          %s4143 = scalar_lea.sflag [#allocation19], %s4142
          %s4144 = sand.u32 %s283, 1
          %s4145 = smul.addr %s4144, 8
          %s4146 = scalar_lea.vmem [#allocation20], %s4145
          %4147 = dma.done %s4143, 128
        $region116: #{tpu_custom_call.1} parent=107 // pred_fallthru
          _
      $region108: #{tpu_custom_call.1} parent=5 // pred_fallthru
        _
    $region6: #{tpu_custom_call.1} parent=1 // loop_footer
      %s33 = sadd.s32 1, %s29
    $region7: #{tpu_custom_call.1} parent=1 // loop_footer_branch
      %28 = sbr.rel target = $region3
    $region8: #{tpu_custom_call.1} parent=1 // loop_exit
      _
    %4148 = vsyncpa [#allocation7], 1
    %s4149 = scalar_lea.sflag [#allocation7], 1
    %4150 = vsyncpa %s4149, 1
    %4151 = vsyncpa [#allocation10], 1
    %s4152 = scalar_lea.sflag [#allocation10], 1
    %4153 = vsyncpa %s4152, 1
    %4154 = vsyncpa [#allocation13], 1
    %s4155 = scalar_lea.sflag [#allocation13], 1
    %4156 = vsyncpa %s4155, 1
    %4157 = vsyncpa [#allocation16], 1
    %4158 = vsyncpa [#allocation8], 1
    %s4159 = scalar_lea.sflag [#allocation8], 1
    %4160 = vsyncpa %s4159, 1
    %4161 = vsyncpa [#allocation19], 1
    %s4162 = scalar_lea.sflag [#allocation19], 1
    %4163 = vsyncpa %s4162, 1

</llo_original>
